<compile_context>
chip_gen: v7x
topology: tpu7x:2x2x1
jax: 0.10.0
libtpu: 0.0.40
codegen_flags: <defaults>
</compile_context>

<pallas_src>
import math

import jax
import jax.numpy as jnp
import numpy as np
from jax.experimental import pallas as pl
from jax.experimental.pallas import tpu as pltpu

INV_SQRT2 = 1.0 / math.sqrt(2.0)


# ----------------------------------------------------------------------------
# Fused Pallas kernel
# ----------------------------------------------------------------------------

def _fused_forward_kernel(
        x_in_ref, cond_ref, emb_ref,
        w_in_ref, b_in_ref,
        w_p1_ref, b_p1_ref, w_p2_ref, b_p2_ref,
        w_dp_ref, b_dp_ref,
        w_mid_ref, w_cond_ref, b_z_ref,
        w_out_ref, b_out_ref,
        w_o1_ref, b_o1_ref, w_o2_ref, b_o2_ref,
        out_ref, x_out_ref, skip_out_ref,
        x_sc, skip_sc, demb_sc):
    l = pl.program_id(0)
    n_layers = pl.num_programs(0)

    @pl.when(l == 0)
    def _init():
        # input_projection (1x1 conv) + ReLU  (runs once)
        x0 = jnp.dot(x_in_ref[...], w_in_ref[...],
                     preferred_element_type=jnp.float32) + b_in_ref[...]
        x_sc[...] = jnp.maximum(x0, 0.0)
        skip_sc[...] = jnp.zeros_like(skip_sc)
        # DiffusionEmbedding MLP: Linear -> SiLU -> Linear -> SiLU (runs once)
        h = jnp.dot(emb_ref[...], w_p1_ref[...],
                    preferred_element_type=jnp.float32) + b_p1_ref[...]
        h = h * jax.nn.sigmoid(h)
        h = jnp.dot(h.astype(w_p2_ref.dtype), w_p2_ref[...],
                    preferred_element_type=jnp.float32) + b_p2_ref[...]
        demb_sc[...] = (h * jax.nn.sigmoid(h)).astype(demb_sc.dtype)

    x = x_sc[...]                                        # (BT, C) f32
    demb = demb_sc[...]                                  # (BT, E) bf16

    # diffusion_projection (batch already folded into rows -> plain matmul)
    dproj = jnp.dot(demb, w_dp_ref[...],
                    preferred_element_type=jnp.float32) + b_dp_ref[...]
    y = (x + dproj).astype(w_mid_ref.dtype)              # bf16 for the MXU
    cond = cond_ref[...]                                 # (BT, S) bf16

    # ckconv time/feature branches: identity at K*L < 100 (see header note).

    # mid_projection + cond_projection; gate/filter halves as separate matmuls
    gate = (jnp.dot(y, w_mid_ref[0], preferred_element_type=jnp.float32)
            + jnp.dot(cond, w_cond_ref[0], preferred_element_type=jnp.float32)
            + b_z_ref[0])
    filt = (jnp.dot(y, w_mid_ref[1], preferred_element_type=jnp.float32)
            + jnp.dot(cond, w_cond_ref[1], preferred_element_type=jnp.float32)
            + b_z_ref[1])
    g = (jax.nn.sigmoid(gate) * jnp.tanh(filt)).astype(w_out_ref.dtype)

    # output_projection; residual/skip halves as separate matmuls
    residual = jnp.dot(g, w_out_ref[0],
                       preferred_element_type=jnp.float32) + b_out_ref[0]
    skip = jnp.dot(g, w_out_ref[1],
                   preferred_element_type=jnp.float32) + b_out_ref[1]

    x_sc[...] = (x + residual) * INV_SQRT2
    skip_sc[...] = skip_sc[...] + skip

    @pl.when(l == n_layers - 1)
    def _finalize():
        s = skip_sc[...]
        # output_projection1 + ReLU (w_o1 is pre-scaled by 1/sqrt(n_layers))
        h1 = jnp.dot(s.astype(w_o1_ref.dtype), w_o1_ref[...],
                     preferred_element_type=jnp.float32) + b_o1_ref[...]
        h1 = jnp.maximum(h1, 0.0)
        # output_projection2 (C -> 1) as a VPU multiply + lane reduction
        yo = jnp.sum(h1 * w_o2_ref[...], axis=-1, keepdims=True) + b_o2_ref[...]
        out_ref[...] = yo.astype(out_ref.dtype)
        x_out_ref[...] = x_sc[...].astype(x_out_ref.dtype)
        skip_out_ref[...] = s.astype(skip_out_ref.dtype)


# ----------------------------------------------------------------------------
# Weight packing (reference layout -> fused-kernel layout)
# ----------------------------------------------------------------------------

def _pack_params(params):
    f32, bf16 = jnp.float32, jnp.bfloat16
    C = params['channels']
    n_layers = len(params['layers'])
    scale = 1.0 / math.sqrt(n_layers)

    def split2(w):  # (..., 2C) -> (2, ..., C)   [gate|filt] or [residual|skip]
        return jnp.stack([w[..., :C], w[..., C:]], axis=0)

    layers = params['layers']
    packed = {
        'w_in': params['w_in'].astype(f32),           # used once; keep f32
        'b_in': params['b_in'].astype(f32),
        'w_p1': params['w_p1'].astype(bf16),
        'b_p1': params['b_p1'].astype(f32),
        'w_p2': params['w_p2'].astype(bf16),
        'b_p2': params['b_p2'].astype(f32),
        'w_o1': (params['w_o1'] * scale).astype(bf16),   # fold 1/sqrt(nL)
        'b_o1': params['b_o1'].astype(f32),
        'w_o2': params['w_o2'].T.astype(f32),            # (1, C) row
        'b_o2': params['b_o2'].astype(f32),              # (1, 1)
        'w_dp': jnp.stack([lp['w_dp'] for lp in layers]).astype(bf16),
        'b_dp': jnp.stack([lp['b_dp'] for lp in layers]).astype(f32),
        'w_mid': jnp.stack([split2(lp['w_mid']) for lp in layers]).astype(bf16),
        'w_cond': jnp.stack([split2(lp['w_cond']) for lp in layers]).astype(bf16),
        'b_z': jnp.stack([split2(lp['b_mid'] + lp['b_cond'])
                          for lp in layers]).astype(f32),
        'w_out': jnp.stack([split2(lp['w_out']) for lp in layers]).astype(bf16),
        'b_out': jnp.stack([split2(lp['b_out']) for lp in layers]).astype(f32),
    }
    return packed


# ----------------------------------------------------------------------------
# Forward wrapper
# ----------------------------------------------------------------------------

def diff_csdi_forward(params, x_nchw, cond_nchw, diffusion_step):
    """Pallas-backed diff_CSDI.forward. Inputs follow torch NCHW convention."""
    B, inputdim, K, L = x_nchw.shape
    T = K * L
    BT = B * T
    C = params['channels']
    E = params['w_p1'].shape[0]
    S = cond_nchw.shape[1]
    n_layers = len(params['layers'])
    assert K * L < 100  # ckconv branches are identity in this regime (header)

    p = _pack_params(params)

    # NCHW -> channels-last, batch folded into the row dimension.
    x_bt = jnp.transpose(x_nchw, (0, 2, 3, 1)).reshape(BT, inputdim)
    cond_bt = jnp.transpose(cond_nchw, (0, 2, 3, 1)).reshape(BT, S)
    cond_bt = cond_bt.astype(jnp.bfloat16)
    emb_rows = jnp.take(params['emb_table'], diffusion_step, axis=0)   # (B, E)
    emb_bt = jnp.repeat(emb_rows, T, axis=0).astype(jnp.bfloat16)      # (BT, E)

    # Advisory cost estimate for the XLA scheduler.
    flops = int(2 * BT * inputdim * C + 2 * 2 * BT * E * E
                + n_layers * (2 * BT * E * C + 4 * BT * C * C
                              + 4 * BT * S * C + 4 * BT * C * C)
                + 2 * BT * C * C + 2 * BT * C)
    transcend = int(2 * BT * E + n_layers * 2 * BT * C)
    inputs_list = [x_bt, cond_bt, emb_bt] + [p[k] for k in (
        'w_in', 'b_in', 'w_p1', 'b_p1', 'w_p2', 'b_p2', 'w_dp', 'b_dp',
        'w_mid', 'w_cond', 'b_z', 'w_out', 'b_out', 'w_o1', 'b_o1',
        'w_o2', 'b_o2')]
    bytes_accessed = int(sum(a.size * a.dtype.itemsize for a in inputs_list)
                         + BT * 4 + 2 * BT * C * 4)

    grid_spec = pltpu.PrefetchScalarGridSpec(
        num_scalar_prefetch=0,
        grid=(n_layers,),
        in_specs=[
            pl.BlockSpec((BT, inputdim), lambda l: (0, 0)),        # x_in
            pl.BlockSpec((BT, S), lambda l: (0, 0)),               # cond
            pl.BlockSpec((BT, E), lambda l: (0, 0)),               # emb rows
            pl.BlockSpec((inputdim, C), lambda l: (0, 0)),         # w_in
            pl.BlockSpec((1, C), lambda l: (0, 0)),                # b_in
            pl.BlockSpec((E, E), lambda l: (0, 0)),                # w_p1
            pl.BlockSpec((1, E), lambda l: (0, 0)),                # b_p1
            pl.BlockSpec((E, E), lambda l: (0, 0)),                # w_p2
            pl.BlockSpec((1, E), lambda l: (0, 0)),                # b_p2
            pl.BlockSpec((None, E, C), lambda l: (l, 0, 0)),       # w_dp
            pl.BlockSpec((None, 1, C), lambda l: (l, 0, 0)),       # b_dp
            pl.BlockSpec((None, 2, C, C), lambda l: (l, 0, 0, 0)),  # w_mid
            pl.BlockSpec((None, 2, S, C), lambda l: (l, 0, 0, 0)),  # w_cond
            pl.BlockSpec((None, 2, 1, C), lambda l: (l, 0, 0, 0)),  # b_z
            pl.BlockSpec((None, 2, C, C), lambda l: (l, 0, 0, 0)),  # w_out
            pl.BlockSpec((None, 2, 1, C), lambda l: (l, 0, 0, 0)),  # b_out
            pl.BlockSpec((C, C), lambda l: (0, 0)),                # w_o1
            pl.BlockSpec((1, C), lambda l: (0, 0)),                # b_o1
            pl.BlockSpec((1, C), lambda l: (0, 0)),                # w_o2 row
            pl.BlockSpec((1, 1), lambda l: (0, 0)),                # b_o2
        ],
        out_specs=(
            pl.BlockSpec((BT, 1), lambda l: (0, 0)),               # head out
            pl.BlockSpec((BT, C), lambda l: (0, 0)),               # final x
            pl.BlockSpec((BT, C), lambda l: (0, 0)),               # skip sum
        ),
        scratch_shapes=[
            pltpu.VMEM((BT, C), jnp.float32),      # residual stream x
            pltpu.VMEM((BT, C), jnp.float32),      # skip accumulator
            pltpu.VMEM((BT, E), jnp.bfloat16),     # diffusion embedding
        ],
    )

    out, x_last, skip_sum = pl.pallas_call(
        _fused_forward_kernel,
        out_shape=(jax.ShapeDtypeStruct((BT, 1), jnp.float32),
                   jax.ShapeDtypeStruct((BT, C), jnp.float32),
                   jax.ShapeDtypeStruct((BT, C), jnp.float32)),
        grid_spec=grid_spec,
        compiler_params=pltpu.CompilerParams(
            dimension_semantics=("arbitrary",)),
        cost_estimate=pl.CostEstimate(flops=flops,
                                      transcendentals=transcend,
                                      bytes_accessed=bytes_accessed),
    )(x_bt, cond_bt, emb_bt,
      p['w_in'], p['b_in'], p['w_p1'], p['b_p1'], p['w_p2'], p['b_p2'],
      p['w_dp'], p['b_dp'], p['w_mid'], p['w_cond'], p['b_z'],
      p['w_out'], p['b_out'], p['w_o1'], p['b_o1'], p['w_o2'], p['b_o2'])

    return (out.reshape(B, K, L),
            x_last.reshape(B, T, C),
            skip_sum.reshape(B, T, C))


# ----------------------------------------------------------------------------
# Deterministic parameter init (shapes per diff_CSDI.__init__)
# ----------------------------------------------------------------------------

def init_params(key, *, channels, side_dim, inputdim, emb_dim, num_steps,
                n_layers):
    keys = jax.random.split(key, 64)
    kit = iter(keys)

    def w(shape, fan_in):
        return jax.random.normal(next(kit), shape, jnp.float32) / math.sqrt(fan_in)

    params = {'channels': channels}

    # DiffusionEmbedding table (matches _build_embedding).
    half = emb_dim // 2
    steps = jnp.arange(num_steps, dtype=jnp.float32)[:, None]
    freqs = (10.0 ** (jnp.arange(half, dtype=jnp.float32) / (half - 1) * 4.0))[None, :]
    table = steps * freqs
    params['emb_table'] = jnp.concatenate([jnp.sin(table), jnp.cos(table)], axis=1)

    params['w_p1'] = w((emb_dim, emb_dim), emb_dim)
    params['b_p1'] = w((1, emb_dim), emb_dim)
    params['w_p2'] = w((emb_dim, emb_dim), emb_dim)
    params['b_p2'] = w((1, emb_dim), emb_dim)

    params['w_in'] = w((inputdim, channels), inputdim)
    params['b_in'] = w((1, channels), channels)
    params['w_o1'] = w((channels, channels), channels)
    params['b_o1'] = w((1, channels), channels)
    params['w_o2'] = jnp.zeros((channels, 1), jnp.float32)   # zero-init per module
    params['b_o2'] = w((1, 1), channels)

    layers = []
    for _ in range(n_layers):
        layers.append({
            'w_dp': w((emb_dim, channels), emb_dim),
            'b_dp': w((1, channels), emb_dim),
            'w_cond': w((side_dim, 2 * channels), side_dim),
            'b_cond': w((1, 2 * channels), side_dim),
            'w_mid': w((channels, 2 * channels), channels),
            'b_mid': w((1, 2 * channels), channels),
            'w_out': w((channels, 2 * channels), channels),
            'b_out': w((1, 2 * channels), channels),
        })
    params['layers'] = layers
    return params


# ----------------------------------------------------------------------------
# Plain-JAX f32 reference (same math, channels-last) for correctness check
# ----------------------------------------------------------------------------

def _mm(a, b):
    return jnp.matmul(a, b, precision=jax.lax.Precision.HIGHEST)


def ref_forward(params, x_nchw, cond_nchw, diffusion_step):
    B, inputdim, K, L = x_nchw.shape
    T = K * L
    C = params['channels']
    x = jnp.transpose(x_nchw, (0, 2, 3, 1)).reshape(B, T, inputdim)
    cond = jnp.transpose(cond_nchw, (0, 2, 3, 1)).reshape(B, T, -1)

    x = jnp.maximum(_mm(x, params['w_in']) + params['b_in'], 0.0)

    e = jnp.take(params['emb_table'], diffusion_step, axis=0)
    h = _mm(e, params['w_p1']) + params['b_p1']
    h = h * jax.nn.sigmoid(h)
    h = _mm(h, params['w_p2']) + params['b_p2']
    demb = h * jax.nn.sigmoid(h)

    skip_sum = jnp.zeros((B, T, C), jnp.float32)
    for lp in params['layers']:
        dproj = _mm(demb, lp['w_dp']) + lp['b_dp']              # (B, C)
        y = x + dproj[:, None, :]
        z = _mm(y, lp['w_mid']) + lp['b_mid']
        z = z + _mm(cond, lp['w_cond']) + lp['b_cond']
        gate, filt = z[..., :C], z[..., C:]
        g = jax.nn.sigmoid(gate) * jnp.tanh(filt)
        o = _mm(g, lp['w_out']) + lp['b_out']
        residual, skip = o[..., :C], o[..., C:]
        x = (x + residual) / math.sqrt(2.0)
        skip_sum = skip_sum + skip

    s = skip_sum / math.sqrt(len(params['layers']))
    h1 = jnp.maximum(_mm(s, params['w_o1']) + params['b_o1'], 0.0)
    out = _mm(h1, params['w_o2']) + params['b_o2']
    return out.reshape(B, K, L), x, skip_sum


# ----------------------------------------------------------------------------

if __name__ == "__main__":
    B, inputdim, K, L = 2, 2, 8, 8
    channels, side_dim, emb_dim = 64, 16, 128
    num_steps, n_layers = 50, 2

    key = jax.random.PRNGKey(0)
    kp, kx, kc, ks = jax.random.split(key, 4)

    params = init_params(kp, channels=channels, side_dim=side_dim,
                         inputdim=inputdim, emb_dim=emb_dim,
                         num_steps=num_steps, n_layers=n_layers)

    x = jax.random.normal(kx, (B, inputdim, K, L), jnp.float32)
    cond_info = jax.random.normal(kc, (B, side_dim, K, L), jnp.float32)
    diffusion_step = jax.random.randint(ks, (B,), 0, num_steps)

    out, x_last, skip_sum = diff_csdi_forward(params, x, cond_info,
                                              diffusion_step)
    jax.block_until_ready((out, x_last, skip_sum))

    ro, rx, rs = ref_forward(params, x, cond_info, diffusion_step)
    assert out.shape == (B, K, L)
    # bf16 matmul operands (f32 accumulation) -> compare against the f32
    # reference with a correspondingly looser tolerance.
    np.testing.assert_allclose(np.asarray(out), np.asarray(ro),
                               rtol=2e-2, atol=2e-2)
    np.testing.assert_allclose(np.asarray(x_last), np.asarray(rx),
                               rtol=2e-2, atol=2e-2)
    np.testing.assert_allclose(np.asarray(skip_sum), np.asarray(rs),
                               rtol=2e-2, atol=2e-2)

    print("KERNEL_OK")
</pallas_src>

<mosaic_0001>
module attributes {stable_mosaic.version = 11 : i64} {
  func.func @_fused_forward_kernel(%arg0: i32, %arg1: memref<128x2xf32, #tpu.memory_space<vmem>>, %arg2: memref<128x16xbf16, #tpu.memory_space<vmem>>, %arg3: memref<128x128xbf16, #tpu.memory_space<vmem>>, %arg4: memref<2x64xf32, #tpu.memory_space<vmem>>, %arg5: memref<1x64xf32, #tpu.memory_space<vmem>>, %arg6: memref<128x128xbf16, #tpu.memory_space<vmem>>, %arg7: memref<1x128xf32, #tpu.memory_space<vmem>>, %arg8: memref<128x128xbf16, #tpu.memory_space<vmem>>, %arg9: memref<1x128xf32, #tpu.memory_space<vmem>>, %arg10: memref<1x128x64xbf16, #tpu.memory_space<vmem>>, %arg11: memref<1x1x64xf32, #tpu.memory_space<vmem>>, %arg12: memref<1x2x64x64xbf16, #tpu.memory_space<vmem>>, %arg13: memref<1x2x16x64xbf16, #tpu.memory_space<vmem>>, %arg14: memref<1x2x1x64xf32, #tpu.memory_space<vmem>>, %arg15: memref<1x2x64x64xbf16, #tpu.memory_space<vmem>>, %arg16: memref<1x2x1x64xf32, #tpu.memory_space<vmem>>, %arg17: memref<64x64xbf16, #tpu.memory_space<vmem>>, %arg18: memref<1x64xf32, #tpu.memory_space<vmem>>, %arg19: memref<1x64xf32, #tpu.memory_space<vmem>>, %arg20: memref<1x1xf32, #tpu.memory_space<vmem>>, %arg21: memref<128x1xf32, #tpu.memory_space<vmem>>, %arg22: memref<128x64xf32, #tpu.memory_space<vmem>>, %arg23: memref<128x64xf32, #tpu.memory_space<vmem>>, %arg24: memref<128x64xf32, #tpu.memory_space<vmem>>, %arg25: memref<128x64xf32, #tpu.memory_space<vmem>>, %arg26: memref<128x128xbf16, #tpu.memory_space<vmem>>) attributes {dimension_semantics = [#tpu.dimension_semantics<arbitrary>], iteration_bounds = array<i64: 2>, scalar_prefetch = 0 : i64, scratch_operands = 3 : i64, tpu.core_type = #tpu.core_type<tc>, window_params = [{pipeline_mode = #tpu.pipeline_mode<synchronous>, transform_indices = @transform_0, window_bounds = array<i64: 128, 2>}, {pipeline_mode = #tpu.pipeline_mode<synchronous>, transform_indices = @transform_1, window_bounds = array<i64: 128, 16>}, {pipeline_mode = #tpu.pipeline_mode<synchronous>, transform_indices = @transform_2, window_bounds = array<i64: 128, 128>}, {pipeline_mode = #tpu.pipeline_mode<synchronous>, transform_indices = @transform_3, window_bounds = array<i64: 2, 64>}, {pipeline_mode = #tpu.pipeline_mode<synchronous>, transform_indices = @transform_4, window_bounds = array<i64: 1, 64>}, {pipeline_mode = #tpu.pipeline_mode<synchronous>, transform_indices = @transform_5, window_bounds = array<i64: 128, 128>}, {pipeline_mode = #tpu.pipeline_mode<synchronous>, transform_indices = @transform_6, window_bounds = array<i64: 1, 128>}, {pipeline_mode = #tpu.pipeline_mode<synchronous>, transform_indices = @transform_7, window_bounds = array<i64: 128, 128>}, {pipeline_mode = #tpu.pipeline_mode<synchronous>, transform_indices = @transform_8, window_bounds = array<i64: 1, 128>}, {transform_indices = @transform_9, window_bounds = array<i64: 1, 128, 64>}, {transform_indices = @transform_10, window_bounds = array<i64: 1, 1, 64>}, {transform_indices = @transform_11, window_bounds = array<i64: 1, 2, 64, 64>}, {transform_indices = @transform_12, window_bounds = array<i64: 1, 2, 16, 64>}, {transform_indices = @transform_13, window_bounds = array<i64: 1, 2, 1, 64>}, {transform_indices = @transform_14, window_bounds = array<i64: 1, 2, 64, 64>}, {transform_indices = @transform_15, window_bounds = array<i64: 1, 2, 1, 64>}, {pipeline_mode = #tpu.pipeline_mode<synchronous>, transform_indices = @transform_16, window_bounds = array<i64: 64, 64>}, {pipeline_mode = #tpu.pipeline_mode<synchronous>, transform_indices = @transform_17, window_bounds = array<i64: 1, 64>}, {pipeline_mode = #tpu.pipeline_mode<synchronous>, transform_indices = @transform_18, window_bounds = array<i64: 1, 64>}, {pipeline_mode = #tpu.pipeline_mode<synchronous>, transform_indices = @transform_19, window_bounds = array<i64: 1, 1>}, {pipeline_mode = #tpu.pipeline_mode<synchronous>, transform_indices = @transform_20, window_bounds = array<i64: 128, 1>}, {pipeline_mode = #tpu.pipeline_mode<synchronous>, transform_indices = @transform_21, window_bounds = array<i64: 128, 64>}, {pipeline_mode = #tpu.pipeline_mode<synchronous>, transform_indices = @transform_22, window_bounds = array<i64: 128, 64>}]} {
    %c0_i32 = arith.constant 0 : i32
    %0 = arith.cmpi eq, %arg0, %c0_i32 : i32
    %1 = arith.extui %0 : i1 to i32
    %c0_i32_0 = arith.constant 0 : i32
    %2 = arith.cmpi ne, %1, %c0_i32_0 : i32
    scf.if %2 {
      %c0_66 = arith.constant 0 : index
      %c0_67 = arith.constant 0 : index
      %69 = vector.load %arg1[%c0_66, %c0_67] : memref<128x2xf32, #tpu.memory_space<vmem>>, vector<128x2xf32>
      %c0_68 = arith.constant 0 : index
      %c0_69 = arith.constant 0 : index
      %70 = vector.load %arg4[%c0_68, %c0_69] : memref<2x64xf32, #tpu.memory_space<vmem>>, vector<2x64xf32>
      %cst_70 = arith.constant dense<0.000000e+00> : vector<128x64xf32>
      %71 = tpu.matmul %69, %70, %cst_70 {dimension_numbers = #tpu.dot_dimension_numbers<[1], [0], [0], [1], [0, 0, 1, 1], [], []>} : vector<128x2xf32>, vector<2x64xf32>, vector<128x64xf32> -> vector<128x64xf32>
      %c0_71 = arith.constant 0 : index
      %c0_72 = arith.constant 0 : index
      %72 = vector.load %arg5[%c0_71, %c0_72] : memref<1x64xf32, #tpu.memory_space<vmem>>, vector<1x64xf32>
      %73 = vector.broadcast %72 : vector<1x64xf32> to vector<128x64xf32>
      %74 = arith.addf %71, %73 : vector<128x64xf32>
      %cst_73 = arith.constant 0.000000e+00 : f32
      %75 = vector.broadcast %cst_73 : f32 to vector<128x64xf32>
      %76 = arith.maximumf %74, %75 : vector<128x64xf32>
      %c0_74 = arith.constant 0 : index
      %c0_75 = arith.constant 0 : index
      %77 = vector.load %arg24[%c0_74, %c0_75] : memref<128x64xf32, #tpu.memory_space<vmem>>, vector<128x64xf32>
      tpu.vector_store %arg24[%c0_74, %c0_75], %76 {strides = array<i32>} : memref<128x64xf32, #tpu.memory_space<vmem>>, vector<128x64xf32>,
      %cst_76 = arith.constant 0.000000e+00 : f32
      %78 = vector.broadcast %cst_76 : f32 to vector<128x64xf32>
      %c0_77 = arith.constant 0 : index
      %c0_78 = arith.constant 0 : index
      %79 = vector.load %arg25[%c0_77, %c0_78] : memref<128x64xf32, #tpu.memory_space<vmem>>, vector<128x64xf32>
      tpu.vector_store %arg25[%c0_77, %c0_78], %78 {strides = array<i32>} : memref<128x64xf32, #tpu.memory_space<vmem>>, vector<128x64xf32>,
      %c0_79 = arith.constant 0 : index
      %c0_80 = arith.constant 0 : index
      %80 = vector.load %arg3[%c0_79, %c0_80] : memref<128x128xbf16, #tpu.memory_space<vmem>>, vector<128x128xbf16>
      %c0_81 = arith.constant 0 : index
      %c0_82 = arith.constant 0 : index
      %81 = vector.load %arg6[%c0_81, %c0_82] : memref<128x128xbf16, #tpu.memory_space<vmem>>, vector<128x128xbf16>
      %cst_83 = arith.constant dense<0.000000e+00> : vector<128x128xf32>
      %82 = tpu.matmul %80, %81, %cst_83 {dimension_numbers = #tpu.dot_dimension_numbers<[1], [0], [0], [1], [0, 0, 1, 1], [], []>} : vector<128x128xbf16>, vector<128x128xbf16>, vector<128x128xf32> -> vector<128x128xf32>
      %c0_84 = arith.constant 0 : index
      %c0_85 = arith.constant 0 : index
      %83 = vector.load %arg7[%c0_84, %c0_85] : memref<1x128xf32, #tpu.memory_space<vmem>>, vector<1x128xf32>
      %84 = vector.broadcast %83 : vector<1x128xf32> to vector<128x128xf32>
      %85 = arith.addf %82, %84 : vector<128x128xf32>
      %86 = arith.negf %85 : vector<128x128xf32>
      %87 = math.exp %86 : vector<128x128xf32>
      %cst_86 = arith.constant 1.000000e+00 : f32
      %88 = vector.broadcast %cst_86 : f32 to vector<128x128xf32>
      %89 = arith.addf %88, %87 : vector<128x128xf32>
      %90 = arith.divf %88, %89 : vector<128x128xf32>
      %91 = arith.mulf %85, %90 : vector<128x128xf32>
      %92 = arith.truncf %91 : vector<128x128xf32> to vector<128x128xbf16>
      %c0_87 = arith.constant 0 : index
      %c0_88 = arith.constant 0 : index
      %93 = vector.load %arg8[%c0_87, %c0_88] : memref<128x128xbf16, #tpu.memory_space<vmem>>, vector<128x128xbf16>
      %cst_89 = arith.constant dense<0.000000e+00> : vector<128x128xf32>
      %94 = tpu.matmul %92, %93, %cst_89 {dimension_numbers = #tpu.dot_dimension_numbers<[1], [0], [0], [1], [0, 0, 1, 1], [], []>} : vector<128x128xbf16>, vector<128x128xbf16>, vector<128x128xf32> -> vector<128x128xf32>
      %c0_90 = arith.constant 0 : index
      %c0_91 = arith.constant 0 : index
      %95 = vector.load %arg9[%c0_90, %c0_91] : memref<1x128xf32, #tpu.memory_space<vmem>>, vector<1x128xf32>
      %96 = vector.broadcast %95 : vector<1x128xf32> to vector<128x128xf32>
      %97 = arith.addf %94, %96 : vector<128x128xf32>
      %98 = arith.negf %97 : vector<128x128xf32>
      %99 = math.exp %98 : vector<128x128xf32>
      %cst_92 = arith.constant 1.000000e+00 : f32
      %100 = vector.broadcast %cst_92 : f32 to vector<128x128xf32>
      %101 = arith.addf %100, %99 : vector<128x128xf32>
      %102 = arith.divf %100, %101 : vector<128x128xf32>
      %103 = arith.mulf %97, %102 : vector<128x128xf32>
      %104 = arith.truncf %103 : vector<128x128xf32> to vector<128x128xbf16>
      %c0_93 = arith.constant 0 : index
      %c0_94 = arith.constant 0 : index
      %105 = vector.load %arg26[%c0_93, %c0_94] : memref<128x128xbf16, #tpu.memory_space<vmem>>, vector<128x128xbf16>
      tpu.vector_store %arg26[%c0_93, %c0_94], %104 {strides = array<i32>} : memref<128x128xbf16, #tpu.memory_space<vmem>>, vector<128x128xbf16>,
    } else {
    }
    %c0 = arith.constant 0 : index
    %c0_1 = arith.constant 0 : index
    %3 = vector.load %arg24[%c0, %c0_1] : memref<128x64xf32, #tpu.memory_space<vmem>>, vector<128x64xf32>
    %c0_2 = arith.constant 0 : index
    %c0_3 = arith.constant 0 : index
    %4 = vector.load %arg26[%c0_2, %c0_3] : memref<128x128xbf16, #tpu.memory_space<vmem>>, vector<128x128xbf16>
    %c0_4 = arith.constant 0 : index
    %c0_5 = arith.constant 0 : index
    %c0_6 = arith.constant 0 : index
    %5 = vector.load %arg10[%c0_4, %c0_5, %c0_6] : memref<1x128x64xbf16, #tpu.memory_space<vmem>>, vector<1x128x64xbf16>
    %6 = vector.shape_cast %5 : vector<1x128x64xbf16> to vector<128x64xbf16>
    %cst = arith.constant dense<0.000000e+00> : vector<128x64xf32>
    %7 = tpu.matmul %4, %6, %cst {dimension_numbers = #tpu.dot_dimension_numbers<[1], [0], [0], [1], [0, 0, 1, 1], [], []>} : vector<128x128xbf16>, vector<128x64xbf16>, vector<128x64xf32> -> vector<128x64xf32>
    %c0_7 = arith.constant 0 : index
    %c0_8 = arith.constant 0 : index
    %c0_9 = arith.constant 0 : index
    %8 = vector.load %arg11[%c0_7, %c0_8, %c0_9] : memref<1x1x64xf32, #tpu.memory_space<vmem>>, vector<1x1x64xf32>
    %9 = vector.shape_cast %8 : vector<1x1x64xf32> to vector<1x64xf32>
    %10 = vector.broadcast %9 : vector<1x64xf32> to vector<128x64xf32>
    %11 = arith.addf %7, %10 : vector<128x64xf32>
    %12 = arith.addf %3, %11 : vector<128x64xf32>
    %13 = arith.truncf %12 : vector<128x64xf32> to vector<128x64xbf16>
    %c0_10 = arith.constant 0 : index
    %c0_11 = arith.constant 0 : index
    %14 = vector.load %arg2[%c0_10, %c0_11] : memref<128x16xbf16, #tpu.memory_space<vmem>>, vector<128x16xbf16>
    %c0_12 = arith.constant 0 : index
    %c0_13 = arith.constant 0 : index
    %c0_14 = arith.constant 0 : index
    %c0_15 = arith.constant 0 : index
    %15 = vector.load %arg12[%c0_12, %c0_13, %c0_14, %c0_15] : memref<1x2x64x64xbf16, #tpu.memory_space<vmem>>, vector<1x1x64x64xbf16>
    %16 = vector.shape_cast %15 : vector<1x1x64x64xbf16> to vector<64x64xbf16>
    %cst_16 = arith.constant dense<0.000000e+00> : vector<128x64xf32>
    %17 = tpu.matmul %13, %16, %cst_16 {dimension_numbers = #tpu.dot_dimension_numbers<[1], [0], [0], [1], [0, 0, 1, 1], [], []>} : vector<128x64xbf16>, vector<64x64xbf16>, vector<128x64xf32> -> vector<128x64xf32>
    %c0_17 = arith.constant 0 : index
    %c0_18 = arith.constant 0 : index
    %c0_19 = arith.constant 0 : index
    %c0_20 = arith.constant 0 : index
    %18 = vector.load %arg13[%c0_17, %c0_18, %c0_19, %c0_20] : memref<1x2x16x64xbf16, #tpu.memory_space<vmem>>, vector<1x1x16x64xbf16>
    %19 = vector.shape_cast %18 : vector<1x1x16x64xbf16> to vector<16x64xbf16>
    %cst_21 = arith.constant dense<0.000000e+00> : vector<128x64xf32>
    %20 = tpu.matmul %14, %19, %cst_21 {dimension_numbers = #tpu.dot_dimension_numbers<[1], [0], [0], [1], [0, 0, 1, 1], [], []>} : vector<128x16xbf16>, vector<16x64xbf16>, vector<128x64xf32> -> vector<128x64xf32>
    %21 = arith.addf %17, %20 : vector<128x64xf32>
    %c0_22 = arith.constant 0 : index
    %c0_23 = arith.constant 0 : index
    %c0_24 = arith.constant 0 : index
    %c0_25 = arith.constant 0 : index
    %22 = vector.load %arg14[%c0_22, %c0_23, %c0_24, %c0_25] : memref<1x2x1x64xf32, #tpu.memory_space<vmem>>, vector<1x1x1x64xf32>
    %23 = vector.shape_cast %22 : vector<1x1x1x64xf32> to vector<1x64xf32>
    %24 = vector.broadcast %23 : vector<1x64xf32> to vector<128x64xf32>
    %25 = arith.addf %21, %24 : vector<128x64xf32>
    %c0_26 = arith.constant 0 : index
    %c1 = arith.constant 1 : index
    %c0_27 = arith.constant 0 : index
    %c0_28 = arith.constant 0 : index
    %26 = vector.load %arg12[%c0_26, %c1, %c0_27, %c0_28] : memref<1x2x64x64xbf16, #tpu.memory_space<vmem>>, vector<1x1x64x64xbf16>
    %27 = vector.shape_cast %26 : vector<1x1x64x64xbf16> to vector<64x64xbf16>
    %cst_29 = arith.constant dense<0.000000e+00> : vector<128x64xf32>
    %28 = tpu.matmul %13, %27, %cst_29 {dimension_numbers = #tpu.dot_dimension_numbers<[1], [0], [0], [1], [0, 0, 1, 1], [], []>} : vector<128x64xbf16>, vector<64x64xbf16>, vector<128x64xf32> -> vector<128x64xf32>
    %c0_30 = arith.constant 0 : index
    %c1_31 = arith.constant 1 : index
    %c0_32 = arith.constant 0 : index
    %c0_33 = arith.constant 0 : index
    %29 = vector.load %arg13[%c0_30, %c1_31, %c0_32, %c0_33] : memref<1x2x16x64xbf16, #tpu.memory_space<vmem>>, vector<1x1x16x64xbf16>
    %30 = vector.shape_cast %29 : vector<1x1x16x64xbf16> to vector<16x64xbf16>
    %cst_34 = arith.constant dense<0.000000e+00> : vector<128x64xf32>
    %31 = tpu.matmul %14, %30, %cst_34 {dimension_numbers = #tpu.dot_dimension_numbers<[1], [0], [0], [1], [0, 0, 1, 1], [], []>} : vector<128x16xbf16>, vector<16x64xbf16>, vector<128x64xf32> -> vector<128x64xf32>
    %32 = arith.addf %28, %31 : vector<128x64xf32>
    %c0_35 = arith.constant 0 : index
    %c1_36 = arith.constant 1 : index
    %c0_37 = arith.constant 0 : index
    %c0_38 = arith.constant 0 : index
    %33 = vector.load %arg14[%c0_35, %c1_36, %c0_37, %c0_38] : memref<1x2x1x64xf32, #tpu.memory_space<vmem>>, vector<1x1x1x64xf32>
    %34 = vector.shape_cast %33 : vector<1x1x1x64xf32> to vector<1x64xf32>
    %35 = vector.broadcast %34 : vector<1x64xf32> to vector<128x64xf32>
    %36 = arith.addf %32, %35 : vector<128x64xf32>
    %37 = arith.negf %25 : vector<128x64xf32>
    %38 = math.exp %37 : vector<128x64xf32>
    %cst_39 = arith.constant 1.000000e+00 : f32
    %39 = vector.broadcast %cst_39 : f32 to vector<128x64xf32>
    %40 = arith.addf %39, %38 : vector<128x64xf32>
    %41 = arith.divf %39, %40 : vector<128x64xf32>
    %42 = math.tanh %36 : vector<128x64xf32>
    %43 = arith.mulf %41, %42 : vector<128x64xf32>
    %44 = arith.truncf %43 : vector<128x64xf32> to vector<128x64xbf16>
    %c0_40 = arith.constant 0 : index
    %c0_41 = arith.constant 0 : index
    %c0_42 = arith.constant 0 : index
    %c0_43 = arith.constant 0 : index
    %45 = vector.load %arg15[%c0_40, %c0_41, %c0_42, %c0_43] : memref<1x2x64x64xbf16, #tpu.memory_space<vmem>>, vector<1x1x64x64xbf16>
    %46 = vector.shape_cast %45 : vector<1x1x64x64xbf16> to vector<64x64xbf16>
    %cst_44 = arith.constant dense<0.000000e+00> : vector<128x64xf32>
    %47 = tpu.matmul %44, %46, %cst_44 {dimension_numbers = #tpu.dot_dimension_numbers<[1], [0], [0], [1], [0, 0, 1, 1], [], []>} : vector<128x64xbf16>, vector<64x64xbf16>, vector<128x64xf32> -> vector<128x64xf32>
    %c0_45 = arith.constant 0 : index
    %c0_46 = arith.constant 0 : index
    %c0_47 = arith.constant 0 : index
    %c0_48 = arith.constant 0 : index
    %48 = vector.load %arg16[%c0_45, %c0_46, %c0_47, %c0_48] : memref<1x2x1x64xf32, #tpu.memory_space<vmem>>, vector<1x1x1x64xf32>
    %49 = vector.shape_cast %48 : vector<1x1x1x64xf32> to vector<1x64xf32>
    %50 = vector.broadcast %49 : vector<1x64xf32> to vector<128x64xf32>
    %51 = arith.addf %47, %50 : vector<128x64xf32>
    %c0_49 = arith.constant 0 : index
    %c1_50 = arith.constant 1 : index
    %c0_51 = arith.constant 0 : index
    %c0_52 = arith.constant 0 : index
    %52 = vector.load %arg15[%c0_49, %c1_50, %c0_51, %c0_52] : memref<1x2x64x64xbf16, #tpu.memory_space<vmem>>, vector<1x1x64x64xbf16>
    %53 = vector.shape_cast %52 : vector<1x1x64x64xbf16> to vector<64x64xbf16>
    %cst_53 = arith.constant dense<0.000000e+00> : vector<128x64xf32>
    %54 = tpu.matmul %44, %53, %cst_53 {dimension_numbers = #tpu.dot_dimension_numbers<[1], [0], [0], [1], [0, 0, 1, 1], [], []>} : vector<128x64xbf16>, vector<64x64xbf16>, vector<128x64xf32> -> vector<128x64xf32>
    %c0_54 = arith.constant 0 : index
    %c1_55 = arith.constant 1 : index
    %c0_56 = arith.constant 0 : index
    %c0_57 = arith.constant 0 : index
    %55 = vector.load %arg16[%c0_54, %c1_55, %c0_56, %c0_57] : memref<1x2x1x64xf32, #tpu.memory_space<vmem>>, vector<1x1x1x64xf32>
    %56 = vector.shape_cast %55 : vector<1x1x1x64xf32> to vector<1x64xf32>
    %57 = vector.broadcast %56 : vector<1x64xf32> to vector<128x64xf32>
    %58 = arith.addf %54, %57 : vector<128x64xf32>
    %59 = arith.addf %3, %51 : vector<128x64xf32>
    %cst_58 = arith.constant 0.707106769 : f32
    %60 = vector.broadcast %cst_58 : f32 to vector<128x64xf32>
    %61 = arith.mulf %59, %60 : vector<128x64xf32>
    %c0_59 = arith.constant 0 : index
    %c0_60 = arith.constant 0 : index
    %62 = vector.load %arg24[%c0_59, %c0_60] : memref<128x64xf32, #tpu.memory_space<vmem>>, vector<128x64xf32>
    tpu.vector_store %arg24[%c0_59, %c0_60], %61 {strides = array<i32>} : memref<128x64xf32, #tpu.memory_space<vmem>>, vector<128x64xf32>,
    %c0_61 = arith.constant 0 : index
    %c0_62 = arith.constant 0 : index
    %63 = vector.load %arg25[%c0_61, %c0_62] : memref<128x64xf32, #tpu.memory_space<vmem>>, vector<128x64xf32>
    %64 = arith.addf %63, %58 : vector<128x64xf32>
    %c0_63 = arith.constant 0 : index
    %c0_64 = arith.constant 0 : index
    %65 = vector.load %arg25[%c0_63, %c0_64] : memref<128x64xf32, #tpu.memory_space<vmem>>, vector<128x64xf32>
    tpu.vector_store %arg25[%c0_63, %c0_64], %64 {strides = array<i32>} : memref<128x64xf32, #tpu.memory_space<vmem>>, vector<128x64xf32>,
    %c1_i32 = arith.constant 1 : i32
    %66 = arith.cmpi eq, %arg0, %c1_i32 : i32
    %67 = arith.extui %66 : i1 to i32
    %c0_i32_65 = arith.constant 0 : i32
    %68 = arith.cmpi ne, %67, %c0_i32_65 : i32
    scf.if %68 {
      %c0_66 = arith.constant 0 : index
      %c0_67 = arith.constant 0 : index
      %69 = vector.load %arg25[%c0_66, %c0_67] : memref<128x64xf32, #tpu.memory_space<vmem>>, vector<128x64xf32>
      %70 = arith.truncf %69 : vector<128x64xf32> to vector<128x64xbf16>
      %c0_68 = arith.constant 0 : index
      %c0_69 = arith.constant 0 : index
      %71 = vector.load %arg17[%c0_68, %c0_69] : memref<64x64xbf16, #tpu.memory_space<vmem>>, vector<64x64xbf16>
      %cst_70 = arith.constant dense<0.000000e+00> : vector<128x64xf32>
      %72 = tpu.matmul %70, %71, %cst_70 {dimension_numbers = #tpu.dot_dimension_numbers<[1], [0], [0], [1], [0, 0, 1, 1], [], []>} : vector<128x64xbf16>, vector<64x64xbf16>, vector<128x64xf32> -> vector<128x64xf32>
      %c0_71 = arith.constant 0 : index
      %c0_72 = arith.constant 0 : index
      %73 = vector.load %arg18[%c0_71, %c0_72] : memref<1x64xf32, #tpu.memory_space<vmem>>, vector<1x64xf32>
      %74 = vector.broadcast %73 : vector<1x64xf32> to vector<128x64xf32>
      %75 = arith.addf %72, %74 : vector<128x64xf32>
      %cst_73 = arith.constant 0.000000e+00 : f32
      %76 = vector.broadcast %cst_73 : f32 to vector<128x64xf32>
      %77 = arith.maximumf %75, %76 : vector<128x64xf32>
      %c0_74 = arith.constant 0 : index
      %c0_75 = arith.constant 0 : index
      %78 = vector.load %arg19[%c0_74, %c0_75] : memref<1x64xf32, #tpu.memory_space<vmem>>, vector<1x64xf32>
      %79 = vector.broadcast %78 : vector<1x64xf32> to vector<128x64xf32>
      %80 = arith.mulf %77, %79 : vector<128x64xf32>
      %cst_76 = arith.constant dense<0.000000e+00> : vector<128xf32>
      %81 = vector.multi_reduction <add>, %80, %cst_76 [1] : vector<128x64xf32> to vector<128xf32>
      %82 = vector.shape_cast %81 : vector<128xf32> to vector<128x1xf32>
      %c0_77 = arith.constant 0 : index
      %c0_78 = arith.constant 0 : index
      %83 = vector.load %arg20[%c0_77, %c0_78] : memref<1x1xf32, #tpu.memory_space<vmem>>, vector<1x1xf32>
      %84 = vector.broadcast %83 : vector<1x1xf32> to vector<128x1xf32>
      %85 = arith.addf %82, %84 : vector<128x1xf32>
      %c0_79 = arith.constant 0 : index
      %c0_80 = arith.constant 0 : index
      %86 = vector.load %arg21[%c0_79, %c0_80] : memref<128x1xf32, #tpu.memory_space<vmem>>, vector<128x1xf32>
      tpu.vector_store %arg21[%c0_79, %c0_80], %85 {strides = array<i32>} : memref<128x1xf32, #tpu.memory_space<vmem>>, vector<128x1xf32>,
      %c0_81 = arith.constant 0 : index
      %c0_82 = arith.constant 0 : index
      %87 = vector.load %arg24[%c0_81, %c0_82] : memref<128x64xf32, #tpu.memory_space<vmem>>, vector<128x64xf32>
      %c0_83 = arith.constant 0 : index
      %c0_84 = arith.constant 0 : index
      %88 = vector.load %arg22[%c0_83, %c0_84] : memref<128x64xf32, #tpu.memory_space<vmem>>, vector<128x64xf32>
      tpu.vector_store %arg22[%c0_83, %c0_84], %87 {strides = array<i32>} : memref<128x64xf32, #tpu.memory_space<vmem>>, vector<128x64xf32>,
      %c0_85 = arith.constant 0 : index
      %c0_86 = arith.constant 0 : index
      %89 = vector.load %arg23[%c0_85, %c0_86] : memref<128x64xf32, #tpu.memory_space<vmem>>, vector<128x64xf32>
      tpu.vector_store %arg23[%c0_85, %c0_86], %69 {strides = array<i32>} : memref<128x64xf32, #tpu.memory_space<vmem>>, vector<128x64xf32>,
    } else {
    }
    return
  }
  func.func @transform_0(%arg0: i32) -> (i32, i32) {
    %c0_i32 = arith.constant 0 : i32
    %c0_i32_0 = arith.constant 0 : i32
    %c0_i32_1 = arith.constant 0 : i32
    return %c0_i32, %c0_i32_0 : i32, i32
  }
  func.func @transform_1(%arg0: i32) -> (i32, i32) {
    %c0_i32 = arith.constant 0 : i32
    %c0_i32_0 = arith.constant 0 : i32
    %c0_i32_1 = arith.constant 0 : i32
    return %c0_i32, %c0_i32_0 : i32, i32
  }
  func.func @transform_2(%arg0: i32) -> (i32, i32) {
    %c0_i32 = arith.constant 0 : i32
    %c0_i32_0 = arith.constant 0 : i32
    %c0_i32_1 = arith.constant 0 : i32
    return %c0_i32, %c0_i32_0 : i32, i32
  }
  func.func @transform_3(%arg0: i32) -> (i32, i32) {
    %c0_i32 = arith.constant 0 : i32
    %c0_i32_0 = arith.constant 0 : i32
    %c0_i32_1 = arith.constant 0 : i32
    return %c0_i32, %c0_i32_0 : i32, i32
  }
  func.func @transform_4(%arg0: i32) -> (i32, i32) {
    %c0_i32 = arith.constant 0 : i32
    %c0_i32_0 = arith.constant 0 : i32
    %c0_i32_1 = arith.constant 0 : i32
    return %c0_i32, %c0_i32_0 : i32, i32
  }
  func.func @transform_5(%arg0: i32) -> (i32, i32) {
    %c0_i32 = arith.constant 0 : i32
    %c0_i32_0 = arith.constant 0 : i32
    %c0_i32_1 = arith.constant 0 : i32
    return %c0_i32, %c0_i32_0 : i32, i32
  }
  func.func @transform_6(%arg0: i32) -> (i32, i32) {
    %c0_i32 = arith.constant 0 : i32
    %c0_i32_0 = arith.constant 0 : i32
    %c0_i32_1 = arith.constant 0 : i32
    return %c0_i32, %c0_i32_0 : i32, i32
  }
  func.func @transform_7(%arg0: i32) -> (i32, i32) {
    %c0_i32 = arith.constant 0 : i32
    %c0_i32_0 = arith.constant 0 : i32
    %c0_i32_1 = arith.constant 0 : i32
    return %c0_i32, %c0_i32_0 : i32, i32
  }
  func.func @transform_8(%arg0: i32) -> (i32, i32) {
    %c0_i32 = arith.constant 0 : i32
    %c0_i32_0 = arith.constant 0 : i32
    %c0_i32_1 = arith.constant 0 : i32
    return %c0_i32, %c0_i32_0 : i32, i32
  }
  func.func @transform_9(%arg0: i32) -> (i32, i32, i32) {
    %c0_i32 = arith.constant 0 : i32
    %c0_i32_0 = arith.constant 0 : i32
    %c0_i32_1 = arith.constant 0 : i32
    return %arg0, %c0_i32, %c0_i32_0 : i32, i32, i32
  }
  func.func @transform_10(%arg0: i32) -> (i32, i32, i32) {
    %c0_i32 = arith.constant 0 : i32
    %c0_i32_0 = arith.constant 0 : i32
    %c0_i32_1 = arith.constant 0 : i32
    return %arg0, %c0_i32, %c0_i32_0 : i32, i32, i32
  }
  func.func @transform_11(%arg0: i32) -> (i32, i32, i32, i32) {
    %c0_i32 = arith.constant 0 : i32
    %c0_i32_0 = arith.constant 0 : i32
    %c0_i32_1 = arith.constant 0 : i32
    %c0_i32_2 = arith.constant 0 : i32
    return %arg0, %c0_i32, %c0_i32_0, %c0_i32_1 : i32, i32, i32, i32
  }
  func.func @transform_12(%arg0: i32) -> (i32, i32, i32, i32) {
    %c0_i32 = arith.constant 0 : i32
    %c0_i32_0 = arith.constant 0 : i32
    %c0_i32_1 = arith.constant 0 : i32
    %c0_i32_2 = arith.constant 0 : i32
    return %arg0, %c0_i32, %c0_i32_0, %c0_i32_1 : i32, i32, i32, i32
  }
  func.func @transform_13(%arg0: i32) -> (i32, i32, i32, i32) {
    %c0_i32 = arith.constant 0 : i32
    %c0_i32_0 = arith.constant 0 : i32
    %c0_i32_1 = arith.constant 0 : i32
    %c0_i32_2 = arith.constant 0 : i32
    return %arg0, %c0_i32, %c0_i32_0, %c0_i32_1 : i32, i32, i32, i32
  }
  func.func @transform_14(%arg0: i32) -> (i32, i32, i32, i32) {
    %c0_i32 = arith.constant 0 : i32
    %c0_i32_0 = arith.constant 0 : i32
    %c0_i32_1 = arith.constant 0 : i32
    %c0_i32_2 = arith.constant 0 : i32
    return %arg0, %c0_i32, %c0_i32_0, %c0_i32_1 : i32, i32, i32, i32
  }
  func.func @transform_15(%arg0: i32) -> (i32, i32, i32, i32) {
    %c0_i32 = arith.constant 0 : i32
    %c0_i32_0 = arith.constant 0 : i32
    %c0_i32_1 = arith.constant 0 : i32
    %c0_i32_2 = arith.constant 0 : i32
    return %arg0, %c0_i32, %c0_i32_0, %c0_i32_1 : i32, i32, i32, i32
  }
  func.func @transform_16(%arg0: i32) -> (i32, i32) {
    %c0_i32 = arith.constant 0 : i32
    %c0_i32_0 = arith.constant 0 : i32
    %c0_i32_1 = arith.constant 0 : i32
    return %c0_i32, %c0_i32_0 : i32, i32
  }
  func.func @transform_17(%arg0: i32) -> (i32, i32) {
    %c0_i32 = arith.constant 0 : i32
    %c0_i32_0 = arith.constant 0 : i32
    %c0_i32_1 = arith.constant 0 : i32
    return %c0_i32, %c0_i32_0 : i32, i32
  }
  func.func @transform_18(%arg0: i32) -> (i32, i32) {
    %c0_i32 = arith.constant 0 : i32
    %c0_i32_0 = arith.constant 0 : i32
    %c0_i32_1 = arith.constant 0 : i32
    return %c0_i32, %c0_i32_0 : i32, i32
  }
  func.func @transform_19(%arg0: i32) -> (i32, i32) {
    %c0_i32 = arith.constant 0 : i32
    %c0_i32_0 = arith.constant 0 : i32
    %c0_i32_1 = arith.constant 0 : i32
    return %c0_i32, %c0_i32_0 : i32, i32
  }
  func.func @transform_20(%arg0: i32) -> (i32, i32) {
    %c0_i32 = arith.constant 0 : i32
    %c0_i32_0 = arith.constant 0 : i32
    %c0_i32_1 = arith.constant 0 : i32
    return %c0_i32, %c0_i32_0 : i32, i32
  }
  func.func @transform_21(%arg0: i32) -> (i32, i32) {
    %c0_i32 = arith.constant 0 : i32
    %c0_i32_0 = arith.constant 0 : i32
    %c0_i32_1 = arith.constant 0 : i32
    return %c0_i32, %c0_i32_0 : i32, i32
  }
  func.func @transform_22(%arg0: i32) -> (i32, i32) {
    %c0_i32 = arith.constant 0 : i32
    %c0_i32_0 = arith.constant 0 : i32
    %c0_i32_1 = arith.constant 0 : i32
    return %c0_i32, %c0_i32_0 : i32, i32
  }
}

</mosaic_0001>

<llo_original>
// kernel: tpu_custom_call.1
$region0: #{tpu_custom_call.1}
  #allocation0 [shape = 'u32[]', space=smem, size = 0x4, offset = 0x4, fixed_abs, tag = 'smem constant byte address 0x4 - core index']
  #allocation1 [shape = 'u32[144,128]{1,0:T(1,128)}', space=vmem, size = 0x12000, scoped, tag = 'internal scratch']
  #allocation2 [shape = 'f32[128,64]{1,0:T(8,128)}', space=vmem, size = 0x10000, scoped, tag = 'scratch operand']
  #allocation3 [shape = 'f32[128,64]{1,0:T(8,128)}', space=vmem, size = 0x10000, scoped, tag = 'scratch operand']
  #allocation4 [shape = 'bf16[128,128]{1,0:T(16,128)(2,1)}', space=vmem, size = 0x8000, scoped, tag = 'scratch operand']
  #allocation5 [shape = 'f32[1,1]{1,0:T(1,128)S(1)}', space=vmem, size = 0x200, scoped, tag = 'scoped memory for tpu_custom_call.1']
  %s0 = inlined_call_operand.vmem [shape: f32[128,2], index: 0, kind: input, shape index: {}]
  %s1 = inlined_call_operand.vmem [shape: bf16[128,16], index: 1, kind: input, shape index: {}]
  %s2 = inlined_call_operand.vmem [shape: bf16[128,128], index: 2, kind: input, shape index: {}]
  %s3 = inlined_call_operand.hbm [shape: f32[2,64], index: 3, kind: input, shape index: {}]
  %s4 = inlined_call_operand.hbm [shape: f32[1,64], index: 4, kind: input, shape index: {}]
  %s5 = inlined_call_operand.hbm [shape: bf16[128,128], index: 5, kind: input, shape index: {}]
  %s6 = inlined_call_operand.hbm [shape: f32[1,128], index: 6, kind: input, shape index: {}]
  %s7 = inlined_call_operand.hbm [shape: bf16[128,128], index: 7, kind: input, shape index: {}]
  %s8 = inlined_call_operand.hbm [shape: f32[1,128], index: 8, kind: input, shape index: {}]
  %s9 = inlined_call_operand.vmem [shape: bf16[2,128,64], index: 9, kind: input, shape index: {}]
  %s10 = inlined_call_operand.vmem [shape: f32[2,1,64], index: 10, kind: input, shape index: {}]
  %s11 = inlined_call_operand.vmem [shape: bf16[2,2,64,64], index: 11, kind: input, shape index: {}]
  %s12 = inlined_call_operand.vmem [shape: bf16[2,2,16,64], index: 12, kind: input, shape index: {}]
  %s13 = inlined_call_operand.vmem [shape: f32[2,2,1,64], index: 13, kind: input, shape index: {}]
  %s14 = inlined_call_operand.vmem [shape: bf16[2,2,64,64], index: 14, kind: input, shape index: {}]
  %s15 = inlined_call_operand.hbm [shape: f32[2,2,1,64], index: 15, kind: input, shape index: {}]
  %s16 = inlined_call_operand.vmem [shape: bf16[64,64], index: 16, kind: input, shape index: {}]
  %s17 = inlined_call_operand.vmem [shape: f32[1,64], index: 17, kind: input, shape index: {}]
  %s18 = inlined_call_operand.vmem [shape: f32[1,64], index: 18, kind: input, shape index: {}]
  %s19 = inlined_call_operand.<no memory space> [shape: f32[1,1], index: 19, kind: input, shape index: {}]
  %s20 = inlined_call_operand.vmem [shape: f32[128,1], index: 20, kind: output, shape index: {0}]
  %s21 = inlined_call_operand.vmem [shape: f32[128,64], index: 21, kind: output, shape index: {1}]
  %s22 = inlined_call_operand.vmem [shape: f32[128,64], index: 22, kind: output, shape index: {2}]
  %23 = xla_tuple %s20, %s21, %s22
  %s24 = sld [smem:[#allocation0]]
  $region165: #{tpu_custom_call.1} parent=0
    _
  %s26 = ssub.s32 1, %s24
  %s27 = scalar_select 0, %s26, %s24
  %v28 = vstv %s19
  %29 = vst [vmem:[#allocation5] sm:$0x1] %v28
  $region1: #{tpu_custom_call.1} parent=0
    #allocation6 [shape = 'u8[1024]{0}', space=vmem, size = 0x400, scoped, tag = 'input window, operand 3, single buffered']
    #allocation7 [shape = 's32[2]{0}', space=sflag, size = 0x8, scoped, tag = 'scoped memory for tpu_custom_call.1']
    #allocation8 [shape = 'u8[512]{0}', space=vmem, size = 0x400, scoped, tag = 'input window, operand 4, single buffered']
    #allocation9 [shape = 's32[1]{0}', space=sflag, size = 0x4, scoped, tag = 'scoped memory for tpu_custom_call.1']
    #allocation10 [shape = 'u8[32768]{0}', space=vmem, size = 0x8000, scoped, tag = 'input window, operand 5, single buffered']
    #allocation11 [shape = 'u8[512]{0}', space=vmem, size = 0x400, scoped, tag = 'input window, operand 6, single buffered']
    #allocation12 [shape = 's32[1]{0}', space=sflag, size = 0x4, scoped, tag = 'scoped memory for tpu_custom_call.1']
    #allocation13 [shape = 'u8[32768]{0}', space=vmem, size = 0x8000, scoped, tag = 'input window, operand 7, single buffered']
    #allocation14 [shape = 'u8[512]{0}', space=vmem, size = 0x400, scoped, tag = 'input window, operand 8, single buffered']
    #allocation15 [shape = 's32[1]{0}', space=sflag, size = 0x4, scoped, tag = 'scoped memory for tpu_custom_call.1']
    #allocation16 [shape = 'u8[2048]{0}', space=vmem, size = 0x800, scoped, tag = 'input window, operand 15']
    %30 = vsyncpa [#allocation7], 0
    %31 = vsyncpa [#allocation9], 0
    %32 = vsyncpa [#allocation12], 0
    %33 = vsyncpa [#allocation15], 0
    loop: start=0, step=1, limit=4
    $region2: #{tpu_custom_call.1} parent=1 // loop_pre_header
      _
    $region3: #{tpu_custom_call.1} parent=1 // loop_header
      %s35 = sphi 0, %s39
      %p36 = scmp.ge.s32.totalorder %s35, 4
      %s43 = sphi 0, %s43
      %s45 = sphi 0, %s43
      %s46 = sphi 0, %s45
      %s60 = sphi 0, %s46
      %s64 = sphi 0, %s64
      %s66 = sphi 0, %s64
      %s67 = sphi 0, %s66
      %s81 = sphi 0, %s67
      %s85 = sphi 0, %s85
      %s87 = sphi 0, %s85
      %s88 = sphi 0, %s87
      %s102 = sphi 0, %s88
      %s106 = sphi 0, %s106
      %s108 = sphi 0, %s106
      %s109 = sphi 0, %s108
      %s123 = sphi 0, %s109
      %s127 = sphi 0, %s127
      %s129 = sphi 0, %s127
      %s130 = sphi 0, %s129
      %s144 = sphi 0, %s130
      %s148 = sphi 0, %s148
      %s150 = sphi 0, %s148
      %s151 = sphi 0, %s150
      %s165 = sphi 0, %s151
      %s169 = sphi 0, %s169
      %s171 = sphi 0, %s169
      %s172 = sphi 0, %s171
      %s186 = sphi 0, %s172
      %s190 = sphi 0, %s190
      %s192 = sphi 0, %s190
      %s193 = sphi 0, %s192
      %s207 = sphi 0, %s193
      %s211 = sphi 0, %s211
      %s213 = sphi 0, %s211
      %s214 = sphi 0, %s213
      %s228 = sphi 0, %s214
      %s234 = sphi 0, %s236
      %s237 = sphi 0, %s234
      %s238 = sphi 0, %s237
      %s254 = sphi 0, %s238
      %s260 = sphi 0, %s262
      %s263 = sphi 0, %s260
      %s264 = sphi 0, %s263
      %s280 = sphi 0, %s264
      %s286 = sphi 0, %s288
      %s289 = sphi 0, %s286
      %s290 = sphi 0, %s289
      %s306 = sphi 0, %s290
      %s312 = sphi 0, %s314
      %s315 = sphi 0, %s312
      %s316 = sphi 0, %s315
      %s332 = sphi 0, %s316
      %s338 = sphi 0, %s340
      %s341 = sphi 0, %s338
      %s342 = sphi 0, %s341
      %s358 = sphi 0, %s342
      %s364 = sphi 0, %s366
      %s367 = sphi 0, %s364
      %s368 = sphi 0, %s367
      %s384 = sphi 0, %s368
      %s390 = sphi 0, %s392
      %s393 = sphi 0, %s390
      %s394 = sphi 0, %s393
      %s410 = sphi 0, %s394
      %s414 = sphi 0, %s414
      %s416 = sphi 0, %s414
      %s417 = sphi 0, %s416
      %s431 = sphi 0, %s417
      %s435 = sphi 0, %s435
      %s437 = sphi 0, %s435
      %s438 = sphi 0, %s437
      %s452 = sphi 0, %s438
      %s456 = sphi 0, %s456
      %s458 = sphi 0, %s456
      %s459 = sphi 0, %s458
      %s473 = sphi 0, %s459
      %s477 = sphi 0, %s477
      %s479 = sphi 0, %s477
      %s480 = sphi 0, %s479
      %s494 = sphi 0, %s480
      %s498 = sphi 0, %s498
      %s500 = sphi 0, %s498
      %s501 = sphi 0, %s500
      %s515 = sphi 0, %s501
      %s519 = sphi 0, %s519
      %s521 = sphi 0, %s519
      %s522 = sphi 0, %s521
      %s536 = sphi 0, %s522
      %s540 = sphi 0, %s540
      %s542 = sphi 0, %s540
      %s543 = sphi 0, %s542
      %s557 = sphi 0, %s543
    $region4: #{tpu_custom_call.1} parent=1 // loop_header_branch
      %38 = sbr.rel (%p36) target = $region8
    $region5: #{tpu_custom_call.1} parent=1 // loop_body
      %s40 = ssub.s32 %s35, 1
      %s41 = ssub.s32 %s35, 2
      %s42 = sadd.s32 %s35, 1
      %s44 = sadd.s32 %s43, 1
      %p47 = scmp.eq.s32.totalorder %s35, 1
      %p48 = scmp.ne.s32.totalorder %s43, %s45
      %p49 = scmp.eq.s32.totalorder %s35, 0
      %p50 = por %p48, %p49
      %p51 = scmp.ne.s32.totalorder %s43, %s45
      %p52 = scmp.eq.s32.totalorder %s40, 1
      %p53 = por %p51, %p52
      %p54 = scmp.ne.s32.totalorder %s45, %s46
      %p55 = scmp.eq.s32.totalorder %s40, 0
      %p56 = por %p54, %p55
      %p57 = scmp.ne.s32.totalorder %s45, %s46
      %p58 = scmp.eq.s32.totalorder %s41, 1
      %p59 = por %p57, %p58
      %p61 = scmp.ne.s32.totalorder %s46, %s60
      %p62 = scmp.eq.s32.totalorder %s41, 0
      %p63 = por %p61, %p62
      %s65 = sadd.s32 %s64, 1
      %p68 = scmp.eq.s32.totalorder %s35, 1
      %p69 = scmp.ne.s32.totalorder %s64, %s66
      %p70 = scmp.eq.s32.totalorder %s35, 0
      %p71 = por %p69, %p70
      %p72 = scmp.ne.s32.totalorder %s64, %s66
      %p73 = scmp.eq.s32.totalorder %s40, 1
      %p74 = por %p72, %p73
      %p75 = scmp.ne.s32.totalorder %s66, %s67
      %p76 = scmp.eq.s32.totalorder %s40, 0
      %p77 = por %p75, %p76
      %p78 = scmp.ne.s32.totalorder %s66, %s67
      %p79 = scmp.eq.s32.totalorder %s41, 1
      %p80 = por %p78, %p79
      %p82 = scmp.ne.s32.totalorder %s67, %s81
      %p83 = scmp.eq.s32.totalorder %s41, 0
      %p84 = por %p82, %p83
      %s86 = sadd.s32 %s85, 1
      %p89 = scmp.eq.s32.totalorder %s35, 1
      %p90 = scmp.ne.s32.totalorder %s85, %s87
      %p91 = scmp.eq.s32.totalorder %s35, 0
      %p92 = por %p90, %p91
      %p93 = scmp.ne.s32.totalorder %s85, %s87
      %p94 = scmp.eq.s32.totalorder %s40, 1
      %p95 = por %p93, %p94
      %p96 = scmp.ne.s32.totalorder %s87, %s88
      %p97 = scmp.eq.s32.totalorder %s40, 0
      %p98 = por %p96, %p97
      %p99 = scmp.ne.s32.totalorder %s87, %s88
      %p100 = scmp.eq.s32.totalorder %s41, 1
      %p101 = por %p99, %p100
      %p103 = scmp.ne.s32.totalorder %s88, %s102
      %p104 = scmp.eq.s32.totalorder %s41, 0
      %p105 = por %p103, %p104
      %s107 = sadd.s32 %s106, 1
      %p110 = scmp.eq.s32.totalorder %s35, 1
      %p111 = scmp.ne.s32.totalorder %s106, %s108
      %p112 = scmp.eq.s32.totalorder %s35, 0
      %p113 = por %p111, %p112
      %p114 = scmp.ne.s32.totalorder %s106, %s108
      %p115 = scmp.eq.s32.totalorder %s40, 1
      %p116 = por %p114, %p115
      %p117 = scmp.ne.s32.totalorder %s108, %s109
      %p118 = scmp.eq.s32.totalorder %s40, 0
      %p119 = por %p117, %p118
      %p120 = scmp.ne.s32.totalorder %s108, %s109
      %p121 = scmp.eq.s32.totalorder %s41, 1
      %p122 = por %p120, %p121
      %p124 = scmp.ne.s32.totalorder %s109, %s123
      %p125 = scmp.eq.s32.totalorder %s41, 0
      %p126 = por %p124, %p125
      %s128 = sadd.s32 %s127, 1
      %p131 = scmp.eq.s32.totalorder %s35, 1
      %p132 = scmp.ne.s32.totalorder %s127, %s129
      %p133 = scmp.eq.s32.totalorder %s35, 0
      %p134 = por %p132, %p133
      %p135 = scmp.ne.s32.totalorder %s127, %s129
      %p136 = scmp.eq.s32.totalorder %s40, 1
      %p137 = por %p135, %p136
      %p138 = scmp.ne.s32.totalorder %s129, %s130
      %p139 = scmp.eq.s32.totalorder %s40, 0
      %p140 = por %p138, %p139
      %p141 = scmp.ne.s32.totalorder %s129, %s130
      %p142 = scmp.eq.s32.totalorder %s41, 1
      %p143 = por %p141, %p142
      %p145 = scmp.ne.s32.totalorder %s130, %s144
      %p146 = scmp.eq.s32.totalorder %s41, 0
      %p147 = por %p145, %p146
      %s149 = sadd.s32 %s148, 1
      %p152 = scmp.eq.s32.totalorder %s35, 1
      %p153 = scmp.ne.s32.totalorder %s148, %s150
      %p154 = scmp.eq.s32.totalorder %s35, 0
      %p155 = por %p153, %p154
      %p156 = scmp.ne.s32.totalorder %s148, %s150
      %p157 = scmp.eq.s32.totalorder %s40, 1
      %p158 = por %p156, %p157
      %p159 = scmp.ne.s32.totalorder %s150, %s151
      %p160 = scmp.eq.s32.totalorder %s40, 0
      %p161 = por %p159, %p160
      %p162 = scmp.ne.s32.totalorder %s150, %s151
      %p163 = scmp.eq.s32.totalorder %s41, 1
      %p164 = por %p162, %p163
      %p166 = scmp.ne.s32.totalorder %s151, %s165
      %p167 = scmp.eq.s32.totalorder %s41, 0
      %p168 = por %p166, %p167
      %s170 = sadd.s32 %s169, 1
      %p173 = scmp.eq.s32.totalorder %s35, 1
      %p174 = scmp.ne.s32.totalorder %s169, %s171
      %p175 = scmp.eq.s32.totalorder %s35, 0
      %p176 = por %p174, %p175
      %p177 = scmp.ne.s32.totalorder %s169, %s171
      %p178 = scmp.eq.s32.totalorder %s40, 1
      %p179 = por %p177, %p178
      %p180 = scmp.ne.s32.totalorder %s171, %s172
      %p181 = scmp.eq.s32.totalorder %s40, 0
      %p182 = por %p180, %p181
      %p183 = scmp.ne.s32.totalorder %s171, %s172
      %p184 = scmp.eq.s32.totalorder %s41, 1
      %p185 = por %p183, %p184
      %p187 = scmp.ne.s32.totalorder %s172, %s186
      %p188 = scmp.eq.s32.totalorder %s41, 0
      %p189 = por %p187, %p188
      %s191 = sadd.s32 %s190, 1
      %p194 = scmp.eq.s32.totalorder %s35, 1
      %p195 = scmp.ne.s32.totalorder %s190, %s192
      %p196 = scmp.eq.s32.totalorder %s35, 0
      %p197 = por %p195, %p196
      %p198 = scmp.ne.s32.totalorder %s190, %s192
      %p199 = scmp.eq.s32.totalorder %s40, 1
      %p200 = por %p198, %p199
      %p201 = scmp.ne.s32.totalorder %s192, %s193
      %p202 = scmp.eq.s32.totalorder %s40, 0
      %p203 = por %p201, %p202
      %p204 = scmp.ne.s32.totalorder %s192, %s193
      %p205 = scmp.eq.s32.totalorder %s41, 1
      %p206 = por %p204, %p205
      %p208 = scmp.ne.s32.totalorder %s193, %s207
      %p209 = scmp.eq.s32.totalorder %s41, 0
      %p210 = por %p208, %p209
      %s212 = sadd.s32 %s211, 1
      %p215 = scmp.eq.s32.totalorder %s35, 1
      %p216 = scmp.ne.s32.totalorder %s211, %s213
      %p217 = scmp.eq.s32.totalorder %s35, 0
      %p218 = por %p216, %p217
      %p219 = scmp.ne.s32.totalorder %s211, %s213
      %p220 = scmp.eq.s32.totalorder %s40, 1
      %p221 = por %p219, %p220
      %p222 = scmp.ne.s32.totalorder %s213, %s214
      %p223 = scmp.eq.s32.totalorder %s40, 0
      %p224 = por %p222, %p223
      %p225 = scmp.ne.s32.totalorder %s213, %s214
      %p226 = scmp.eq.s32.totalorder %s41, 1
      %p227 = por %p225, %p226
      %p229 = scmp.ne.s32.totalorder %s214, %s228
      %p230 = scmp.eq.s32.totalorder %s41, 0
      %p231 = por %p229, %p230
      %s232 = ssub.s32 %s35, %s42
      %p233 = scmp.eq.s32.totalorder %s232, 0
      %s235 = sadd.s32 %s234, 1
      %s236 = scalar_select %p233, %s234, %s235
      %p239 = pneg %p233
      %p240 = scmp.eq.s32.totalorder %s35, 1
      %p241 = por %p239, %p240
      %p242 = scmp.ne.s32.totalorder %s234, %s237
      %p243 = scmp.eq.s32.totalorder %s35, 0
      %p244 = por %p242, %p243
      %p245 = scmp.ne.s32.totalorder %s234, %s237
      %p246 = scmp.eq.s32.totalorder %s40, 1
      %p247 = por %p245, %p246
      %p248 = scmp.ne.s32.totalorder %s237, %s238
      %p249 = scmp.eq.s32.totalorder %s40, 0
      %p250 = por %p248, %p249
      %p251 = scmp.ne.s32.totalorder %s237, %s238
      %p252 = scmp.eq.s32.totalorder %s41, 1
      %p253 = por %p251, %p252
      %p255 = scmp.ne.s32.totalorder %s238, %s254
      %p256 = scmp.eq.s32.totalorder %s41, 0
      %p257 = por %p255, %p256
      %s258 = ssub.s32 %s35, %s42
      %p259 = scmp.eq.s32.totalorder %s258, 0
      %s261 = sadd.s32 %s260, 1
      %s262 = scalar_select %p259, %s260, %s261
      %p265 = pneg %p259
      %p266 = scmp.eq.s32.totalorder %s35, 1
      %p267 = por %p265, %p266
      %p268 = scmp.ne.s32.totalorder %s260, %s263
      %p269 = scmp.eq.s32.totalorder %s35, 0
      %p270 = por %p268, %p269
      %p271 = scmp.ne.s32.totalorder %s260, %s263
      %p272 = scmp.eq.s32.totalorder %s40, 1
      %p273 = por %p271, %p272
      %p274 = scmp.ne.s32.totalorder %s263, %s264
      %p275 = scmp.eq.s32.totalorder %s40, 0
      %p276 = por %p274, %p275
      %p277 = scmp.ne.s32.totalorder %s263, %s264
      %p278 = scmp.eq.s32.totalorder %s41, 1
      %p279 = por %p277, %p278
      %p281 = scmp.ne.s32.totalorder %s264, %s280
      %p282 = scmp.eq.s32.totalorder %s41, 0
      %p283 = por %p281, %p282
      %s284 = ssub.s32 %s35, %s42
      %p285 = scmp.eq.s32.totalorder %s284, 0
      %s287 = sadd.s32 %s286, 1
      %s288 = scalar_select %p285, %s286, %s287
      %p291 = pneg %p285
      %p292 = scmp.eq.s32.totalorder %s35, 1
      %p293 = por %p291, %p292
      %p294 = scmp.ne.s32.totalorder %s286, %s289
      %p295 = scmp.eq.s32.totalorder %s35, 0
      %p296 = por %p294, %p295
      %p297 = scmp.ne.s32.totalorder %s286, %s289
      %p298 = scmp.eq.s32.totalorder %s40, 1
      %p299 = por %p297, %p298
      %p300 = scmp.ne.s32.totalorder %s289, %s290
      %p301 = scmp.eq.s32.totalorder %s40, 0
      %p302 = por %p300, %p301
      %p303 = scmp.ne.s32.totalorder %s289, %s290
      %p304 = scmp.eq.s32.totalorder %s41, 1
      %p305 = por %p303, %p304
      %p307 = scmp.ne.s32.totalorder %s290, %s306
      %p308 = scmp.eq.s32.totalorder %s41, 0
      %p309 = por %p307, %p308
      %s310 = ssub.s32 %s35, %s42
      %p311 = scmp.eq.s32.totalorder %s310, 0
      %s313 = sadd.s32 %s312, 1
      %s314 = scalar_select %p311, %s312, %s313
      %p317 = pneg %p311
      %p318 = scmp.eq.s32.totalorder %s35, 1
      %p319 = por %p317, %p318
      %p320 = scmp.ne.s32.totalorder %s312, %s315
      %p321 = scmp.eq.s32.totalorder %s35, 0
      %p322 = por %p320, %p321
      %p323 = scmp.ne.s32.totalorder %s312, %s315
      %p324 = scmp.eq.s32.totalorder %s40, 1
      %p325 = por %p323, %p324
      %p326 = scmp.ne.s32.totalorder %s315, %s316
      %p327 = scmp.eq.s32.totalorder %s40, 0
      %p328 = por %p326, %p327
      %p329 = scmp.ne.s32.totalorder %s315, %s316
      %p330 = scmp.eq.s32.totalorder %s41, 1
      %p331 = por %p329, %p330
      %p333 = scmp.ne.s32.totalorder %s316, %s332
      %p334 = scmp.eq.s32.totalorder %s41, 0
      %p335 = por %p333, %p334
      %s336 = ssub.s32 %s35, %s42
      %p337 = scmp.eq.s32.totalorder %s336, 0
      %s339 = sadd.s32 %s338, 1
      %s340 = scalar_select %p337, %s338, %s339
      %p343 = pneg %p337
      %p344 = scmp.eq.s32.totalorder %s35, 1
      %p345 = por %p343, %p344
      %p346 = scmp.ne.s32.totalorder %s338, %s341
      %p347 = scmp.eq.s32.totalorder %s35, 0
      %p348 = por %p346, %p347
      %p349 = scmp.ne.s32.totalorder %s338, %s341
      %p350 = scmp.eq.s32.totalorder %s40, 1
      %p351 = por %p349, %p350
      %p352 = scmp.ne.s32.totalorder %s341, %s342
      %p353 = scmp.eq.s32.totalorder %s40, 0
      %p354 = por %p352, %p353
      %p355 = scmp.ne.s32.totalorder %s341, %s342
      %p356 = scmp.eq.s32.totalorder %s41, 1
      %p357 = por %p355, %p356
      %p359 = scmp.ne.s32.totalorder %s342, %s358
      %p360 = scmp.eq.s32.totalorder %s41, 0
      %p361 = por %p359, %p360
      %s362 = ssub.s32 %s35, %s42
      %p363 = scmp.eq.s32.totalorder %s362, 0
      %s365 = sadd.s32 %s364, 1
      %s366 = scalar_select %p363, %s364, %s365
      %p369 = pneg %p363
      %p370 = scmp.eq.s32.totalorder %s35, 1
      %p371 = por %p369, %p370
      %p372 = scmp.ne.s32.totalorder %s364, %s367
      %p373 = scmp.eq.s32.totalorder %s35, 0
      %p374 = por %p372, %p373
      %p375 = scmp.ne.s32.totalorder %s364, %s367
      %p376 = scmp.eq.s32.totalorder %s40, 1
      %p377 = por %p375, %p376
      %p378 = scmp.ne.s32.totalorder %s367, %s368
      %p379 = scmp.eq.s32.totalorder %s40, 0
      %p380 = por %p378, %p379
      %p381 = scmp.ne.s32.totalorder %s367, %s368
      %p382 = scmp.eq.s32.totalorder %s41, 1
      %p383 = por %p381, %p382
      %p385 = scmp.ne.s32.totalorder %s368, %s384
      %p386 = scmp.eq.s32.totalorder %s41, 0
      %p387 = por %p385, %p386
      %s388 = ssub.s32 %s35, %s42
      %p389 = scmp.eq.s32.totalorder %s388, 0
      %s391 = sadd.s32 %s390, 1
      %s392 = scalar_select %p389, %s390, %s391
      %p395 = pneg %p389
      %p396 = scmp.eq.s32.totalorder %s35, 1
      %p397 = por %p395, %p396
      %p398 = scmp.ne.s32.totalorder %s390, %s393
      %p399 = scmp.eq.s32.totalorder %s35, 0
      %p400 = por %p398, %p399
      %p401 = scmp.ne.s32.totalorder %s390, %s393
      %p402 = scmp.eq.s32.totalorder %s40, 1
      %p403 = por %p401, %p402
      %p404 = scmp.ne.s32.totalorder %s393, %s394
      %p405 = scmp.eq.s32.totalorder %s40, 0
      %p406 = por %p404, %p405
      %p407 = scmp.ne.s32.totalorder %s393, %s394
      %p408 = scmp.eq.s32.totalorder %s41, 1
      %p409 = por %p407, %p408
      %p411 = scmp.ne.s32.totalorder %s394, %s410
      %p412 = scmp.eq.s32.totalorder %s41, 0
      %p413 = por %p411, %p412
      %s415 = sadd.s32 %s414, 1
      %p418 = scmp.eq.s32.totalorder %s35, 1
      %p419 = scmp.ne.s32.totalorder %s414, %s416
      %p420 = scmp.eq.s32.totalorder %s35, 0
      %p421 = por %p419, %p420
      %p422 = scmp.ne.s32.totalorder %s414, %s416
      %p423 = scmp.eq.s32.totalorder %s40, 1
      %p424 = por %p422, %p423
      %p425 = scmp.ne.s32.totalorder %s416, %s417
      %p426 = scmp.eq.s32.totalorder %s40, 0
      %p427 = por %p425, %p426
      %p428 = scmp.ne.s32.totalorder %s416, %s417
      %p429 = scmp.eq.s32.totalorder %s41, 1
      %p430 = por %p428, %p429
      %p432 = scmp.ne.s32.totalorder %s417, %s431
      %p433 = scmp.eq.s32.totalorder %s41, 0
      %p434 = por %p432, %p433
      %s436 = sadd.s32 %s435, 1
      %p439 = scmp.eq.s32.totalorder %s35, 1
      %p440 = scmp.ne.s32.totalorder %s435, %s437
      %p441 = scmp.eq.s32.totalorder %s35, 0
      %p442 = por %p440, %p441
      %p443 = scmp.ne.s32.totalorder %s435, %s437
      %p444 = scmp.eq.s32.totalorder %s40, 1
      %p445 = por %p443, %p444
      %p446 = scmp.ne.s32.totalorder %s437, %s438
      %p447 = scmp.eq.s32.totalorder %s40, 0
      %p448 = por %p446, %p447
      %p449 = scmp.ne.s32.totalorder %s437, %s438
      %p450 = scmp.eq.s32.totalorder %s41, 1
      %p451 = por %p449, %p450
      %p453 = scmp.ne.s32.totalorder %s438, %s452
      %p454 = scmp.eq.s32.totalorder %s41, 0
      %p455 = por %p453, %p454
      %s457 = sadd.s32 %s456, 1
      %p460 = scmp.eq.s32.totalorder %s35, 1
      %p461 = scmp.ne.s32.totalorder %s456, %s458
      %p462 = scmp.eq.s32.totalorder %s35, 0
      %p463 = por %p461, %p462
      %p464 = scmp.ne.s32.totalorder %s456, %s458
      %p465 = scmp.eq.s32.totalorder %s40, 1
      %p466 = por %p464, %p465
      %p467 = scmp.ne.s32.totalorder %s458, %s459
      %p468 = scmp.eq.s32.totalorder %s40, 0
      %p469 = por %p467, %p468
      %p470 = scmp.ne.s32.totalorder %s458, %s459
      %p471 = scmp.eq.s32.totalorder %s41, 1
      %p472 = por %p470, %p471
      %p474 = scmp.ne.s32.totalorder %s459, %s473
      %p475 = scmp.eq.s32.totalorder %s41, 0
      %p476 = por %p474, %p475
      %s478 = sadd.s32 %s477, 1
      %p481 = scmp.eq.s32.totalorder %s35, 1
      %p482 = scmp.ne.s32.totalorder %s477, %s479
      %p483 = scmp.eq.s32.totalorder %s35, 0
      %p484 = por %p482, %p483
      %p485 = scmp.ne.s32.totalorder %s477, %s479
      %p486 = scmp.eq.s32.totalorder %s40, 1
      %p487 = por %p485, %p486
      %p488 = scmp.ne.s32.totalorder %s479, %s480
      %p489 = scmp.eq.s32.totalorder %s40, 0
      %p490 = por %p488, %p489
      %p491 = scmp.ne.s32.totalorder %s479, %s480
      %p492 = scmp.eq.s32.totalorder %s41, 1
      %p493 = por %p491, %p492
      %p495 = scmp.ne.s32.totalorder %s480, %s494
      %p496 = scmp.eq.s32.totalorder %s41, 0
      %p497 = por %p495, %p496
      %s499 = sadd.s32 %s498, 1
      %p502 = scmp.eq.s32.totalorder %s35, 1
      %p503 = scmp.ne.s32.totalorder %s498, %s500
      %p504 = scmp.eq.s32.totalorder %s35, 0
      %p505 = por %p503, %p504
      %p506 = scmp.ne.s32.totalorder %s498, %s500
      %p507 = scmp.eq.s32.totalorder %s40, 1
      %p508 = por %p506, %p507
      %p509 = scmp.ne.s32.totalorder %s500, %s501
      %p510 = scmp.eq.s32.totalorder %s40, 0
      %p511 = por %p509, %p510
      %p512 = scmp.ne.s32.totalorder %s500, %s501
      %p513 = scmp.eq.s32.totalorder %s41, 1
      %p514 = por %p512, %p513
      %p516 = scmp.ne.s32.totalorder %s501, %s515
      %p517 = scmp.eq.s32.totalorder %s41, 0
      %p518 = por %p516, %p517
      %s520 = sadd.s32 %s519, 1
      %p523 = scmp.eq.s32.totalorder %s35, 1
      %p524 = scmp.ne.s32.totalorder %s519, %s521
      %p525 = scmp.eq.s32.totalorder %s35, 0
      %p526 = por %p524, %p525
      %p527 = scmp.ne.s32.totalorder %s519, %s521
      %p528 = scmp.eq.s32.totalorder %s40, 1
      %p529 = por %p527, %p528
      %p530 = scmp.ne.s32.totalorder %s521, %s522
      %p531 = scmp.eq.s32.totalorder %s40, 0
      %p532 = por %p530, %p531
      %p533 = scmp.ne.s32.totalorder %s521, %s522
      %p534 = scmp.eq.s32.totalorder %s41, 1
      %p535 = por %p533, %p534
      %p537 = scmp.ne.s32.totalorder %s522, %s536
      %p538 = scmp.eq.s32.totalorder %s41, 0
      %p539 = por %p537, %p538
      %s541 = sadd.s32 %s540, 1
      %p544 = scmp.eq.s32.totalorder %s35, 1
      %p545 = scmp.ne.s32.totalorder %s540, %s542
      %p546 = scmp.eq.s32.totalorder %s35, 0
      %p547 = por %p545, %p546
      %p548 = scmp.ne.s32.totalorder %s540, %s542
      %p549 = scmp.eq.s32.totalorder %s40, 1
      %p550 = por %p548, %p549
      %p551 = scmp.ne.s32.totalorder %s542, %s543
      %p552 = scmp.eq.s32.totalorder %s40, 0
      %p553 = por %p551, %p552
      %p554 = scmp.ne.s32.totalorder %s542, %s543
      %p555 = scmp.eq.s32.totalorder %s41, 1
      %p556 = por %p554, %p555
      %p558 = scmp.ne.s32.totalorder %s543, %s557
      %p559 = scmp.eq.s32.totalorder %s41, 0
      %p560 = por %p558, %p559
      %p561 = scmp.le.s32.totalorder 1, %s35
      %p562 = scmp.lt.s32.totalorder %s35, 3
      %p563 = pnand %p561, %p562
      %p564 = pneg %p563
      // Predicated region
      $region9: #{tpu_custom_call.1} parent=5 // pred_check
        _
      $region10: #{tpu_custom_call.1} parent=5 // pred_check_branch
        %566 = sbr.rel (%p563) target = $region12
      $region11: #{tpu_custom_call.1} parent=5 // pred_region
        %s567 = ssub.s32 %s35, 1
        // Predicated region
        $region13: #{tpu_custom_call.1} parent=11 // pred_check
          %p568 = pneg %p56
        $region14: #{tpu_custom_call.1} parent=11 // pred_check_branch
          %570 = sbr.rel (%p568) target = $region16
        $region15: #{tpu_custom_call.1} parent=11 // pred_region
          _
        $region16: #{tpu_custom_call.1} parent=11 // pred_fallthru
          _
        // Predicated region
        $region17: #{tpu_custom_call.1} parent=11 // pred_check
          %p571 = pneg %p77
        $region18: #{tpu_custom_call.1} parent=11 // pred_check_branch
          %573 = sbr.rel (%p571) target = $region20
        $region19: #{tpu_custom_call.1} parent=11 // pred_region
          _
        $region20: #{tpu_custom_call.1} parent=11 // pred_fallthru
          _
        // Predicated region
        $region21: #{tpu_custom_call.1} parent=11 // pred_check
          %p574 = pneg %p98
        $region22: #{tpu_custom_call.1} parent=11 // pred_check_branch
          %576 = sbr.rel (%p574) target = $region24
        $region23: #{tpu_custom_call.1} parent=11 // pred_region
          _
        $region24: #{tpu_custom_call.1} parent=11 // pred_fallthru
          _
        // Predicated region
        $region25: #{tpu_custom_call.1} parent=11 // pred_check
          %p577 = pneg %p119
        $region26: #{tpu_custom_call.1} parent=11 // pred_check_branch
          %579 = sbr.rel (%p577) target = $region28
        $region27: #{tpu_custom_call.1} parent=11 // pred_region
          %s581 = ssub.s32 32, 32
          %582 = vsyncadd [#allocation7], %s581
          %s584 = sshll.u32 [#allocation6], 4
          %s585 = int_to_ptr.vmem [resolvable:$true] %s584
          %587 = dma.hbm_to_vmem [thread:$0]  %s3, 32, %s585, [#allocation7]
        $region28: #{tpu_custom_call.1} parent=11 // pred_fallthru
          _
        // Predicated region
        $region29: #{tpu_custom_call.1} parent=11 // pred_check
          %p588 = pneg %p140
        $region30: #{tpu_custom_call.1} parent=11 // pred_check_branch
          %590 = sbr.rel (%p588) target = $region32
        $region31: #{tpu_custom_call.1} parent=11 // pred_region
          %s592 = ssub.s32 16, 16
          %593 = vsyncadd [#allocation9], %s592
          %s595 = sshll.u32 [#allocation8], 4
          %s596 = int_to_ptr.vmem [resolvable:$true] %s595
          %598 = dma.hbm_to_vmem [thread:$0]  %s4, 16, %s596, [#allocation9]
        $region32: #{tpu_custom_call.1} parent=11 // pred_fallthru
          _
        // Predicated region
        $region33: #{tpu_custom_call.1} parent=11 // pred_check
          %p599 = pneg %p161
        $region34: #{tpu_custom_call.1} parent=11 // pred_check_branch
          %601 = sbr.rel (%p599) target = $region36
        $region35: #{tpu_custom_call.1} parent=11 // pred_region
          %s603 = ssub.s32 1024, 1024
          %604 = vsyncadd [#allocation9], %s603
          %s605 = sshll.u32 [#allocation10], 4
          %s606 = int_to_ptr.vmem [resolvable:$true] %s605
          %611 = dma.hbm_to_vmem [thread:$0]  %s5, 1024, %s606, [#allocation9], 64, 64, 4
        $region36: #{tpu_custom_call.1} parent=11 // pred_fallthru
          _
        // Predicated region
        $region37: #{tpu_custom_call.1} parent=11 // pred_check
          %p612 = pneg %p182
        $region38: #{tpu_custom_call.1} parent=11 // pred_check_branch
          %614 = sbr.rel (%p612) target = $region40
        $region39: #{tpu_custom_call.1} parent=11 // pred_region
          %s616 = ssub.s32 16, 16
          %617 = vsyncadd [#allocation12], %s616
          %s619 = sshll.u32 [#allocation11], 4
          %s620 = int_to_ptr.vmem [resolvable:$true] %s619
          %622 = dma.hbm_to_vmem [thread:$0]  %s6, 16, %s620, [#allocation12]
        $region40: #{tpu_custom_call.1} parent=11 // pred_fallthru
          _
        // Predicated region
        $region41: #{tpu_custom_call.1} parent=11 // pred_check
          %p623 = pneg %p203
        $region42: #{tpu_custom_call.1} parent=11 // pred_check_branch
          %625 = sbr.rel (%p623) target = $region44
        $region43: #{tpu_custom_call.1} parent=11 // pred_region
          %s627 = ssub.s32 1024, 1024
          %628 = vsyncadd [#allocation12], %s627
          %s629 = sshll.u32 [#allocation13], 4
          %s630 = int_to_ptr.vmem [resolvable:$true] %s629
          %635 = dma.hbm_to_vmem [thread:$0]  %s7, 1024, %s630, [#allocation12], 64, 64, 4
        $region44: #{tpu_custom_call.1} parent=11 // pred_fallthru
          _
        // Predicated region
        $region45: #{tpu_custom_call.1} parent=11 // pred_check
          %p636 = pneg %p224
        $region46: #{tpu_custom_call.1} parent=11 // pred_check_branch
          %638 = sbr.rel (%p636) target = $region48
        $region47: #{tpu_custom_call.1} parent=11 // pred_region
          %s640 = ssub.s32 16, 16
          %641 = vsyncadd [#allocation15], %s640
          %s643 = sshll.u32 [#allocation14], 4
          %s644 = int_to_ptr.vmem [resolvable:$true] %s643
          %646 = dma.hbm_to_vmem [thread:$0]  %s8, 16, %s644, [#allocation15]
        $region48: #{tpu_custom_call.1} parent=11 // pred_fallthru
          _
        // Predicated region
        $region49: #{tpu_custom_call.1} parent=11 // pred_check
          %p647 = pneg %p427
        $region50: #{tpu_custom_call.1} parent=11 // pred_check_branch
          %649 = sbr.rel (%p647) target = $region52
        $region51: #{tpu_custom_call.1} parent=11 // pred_region
          _
        $region52: #{tpu_custom_call.1} parent=11 // pred_fallthru
          _
        // Predicated region
        $region53: #{tpu_custom_call.1} parent=11 // pred_check
          %p650 = pneg %p448
        $region54: #{tpu_custom_call.1} parent=11 // pred_check_branch
          %652 = sbr.rel (%p650) target = $region56
        $region55: #{tpu_custom_call.1} parent=11 // pred_region
          _
        $region56: #{tpu_custom_call.1} parent=11 // pred_fallthru
          _
        // Predicated region
        $region57: #{tpu_custom_call.1} parent=11 // pred_check
          %p653 = pneg %p469
        $region58: #{tpu_custom_call.1} parent=11 // pred_check_branch
          %655 = sbr.rel (%p653) target = $region60
        $region59: #{tpu_custom_call.1} parent=11 // pred_region
          _
        $region60: #{tpu_custom_call.1} parent=11 // pred_fallthru
          _
        // Predicated region
        $region61: #{tpu_custom_call.1} parent=11 // pred_check
          %p656 = pneg %p490
        $region62: #{tpu_custom_call.1} parent=11 // pred_check_branch
          %658 = sbr.rel (%p656) target = $region64
        $region63: #{tpu_custom_call.1} parent=11 // pred_region
          _
        $region64: #{tpu_custom_call.1} parent=11 // pred_fallthru
          _
      $region12: #{tpu_custom_call.1} parent=5 // pred_fallthru
        _
      %p659 = scmp.lt.s32.totalorder %s35, 2
      // Predicated region
      $region65: #{tpu_custom_call.1} parent=5 // pred_check
        %p660 = pneg %p659
      $region66: #{tpu_custom_call.1} parent=5 // pred_check_branch
        %662 = sbr.rel (%p660) target = $region68
      $region67: #{tpu_custom_call.1} parent=5 // pred_region
        // Predicated region
        $region69: #{tpu_custom_call.1} parent=67 // pred_check
          %p663 = pneg %p244
        $region70: #{tpu_custom_call.1} parent=67 // pred_check_branch
          %665 = sbr.rel (%p663) target = $region72
        $region71: #{tpu_custom_call.1} parent=67 // pred_region
          %p666 = scmp.lt.s32.totalorder %s35, 1
          %s667 = scalar_select %p666, %s35, 1
          %s668 = smul.addr %s667, 16
          %s669 = smul.addr %s668, 4
          %s670 = scalar_lea.vmem %s9, %s669
        $region72: #{tpu_custom_call.1} parent=67 // pred_fallthru
          _
        // Predicated region
        $region73: #{tpu_custom_call.1} parent=67 // pred_check
          %p671 = pneg %p270
        $region74: #{tpu_custom_call.1} parent=67 // pred_check_branch
          %673 = sbr.rel (%p671) target = $region76
        $region75: #{tpu_custom_call.1} parent=67 // pred_region
          %p674 = scmp.lt.s32.totalorder %s35, 1
          %s675 = scalar_select %p674, %s35, 1
          %s676 = scalar_lea.vmem %s10, %s675
        $region76: #{tpu_custom_call.1} parent=67 // pred_fallthru
          _
        // Predicated region
        $region77: #{tpu_custom_call.1} parent=67 // pred_check
          %p677 = pneg %p296
        $region78: #{tpu_custom_call.1} parent=67 // pred_check_branch
          %679 = sbr.rel (%p677) target = $region80
        $region79: #{tpu_custom_call.1} parent=67 // pred_region
          %p680 = scmp.lt.s32.totalorder %s35, 1
          %s681 = scalar_select %p680, %s35, 1
          %s682 = smul.addr %s681, 16
          %s683 = smul.addr %s682, 4
          %s684 = scalar_lea.vmem %s11, %s683
        $region80: #{tpu_custom_call.1} parent=67 // pred_fallthru
          _
        // Predicated region
        $region81: #{tpu_custom_call.1} parent=67 // pred_check
          %p685 = pneg %p322
        $region82: #{tpu_custom_call.1} parent=67 // pred_check_branch
          %687 = sbr.rel (%p685) target = $region84
        $region83: #{tpu_custom_call.1} parent=67 // pred_region
          %p688 = scmp.lt.s32.totalorder %s35, 1
          %s689 = scalar_select %p688, %s35, 1
          %s690 = smul.addr %s689, 4
          %s691 = smul.addr %s690, 4
          %s692 = scalar_lea.vmem %s12, %s691
        $region84: #{tpu_custom_call.1} parent=67 // pred_fallthru
          _
        // Predicated region
        $region85: #{tpu_custom_call.1} parent=67 // pred_check
          %p693 = pneg %p348
        $region86: #{tpu_custom_call.1} parent=67 // pred_check_branch
          %695 = sbr.rel (%p693) target = $region88
        $region87: #{tpu_custom_call.1} parent=67 // pred_region
          %p696 = scmp.lt.s32.totalorder %s35, 1
          %s697 = scalar_select %p696, %s35, 1
          %s698 = smul.addr %s697, 2
          %s699 = scalar_lea.vmem %s13, %s698
        $region88: #{tpu_custom_call.1} parent=67 // pred_fallthru
          _
        // Predicated region
        $region89: #{tpu_custom_call.1} parent=67 // pred_check
          %p700 = pneg %p374
        $region90: #{tpu_custom_call.1} parent=67 // pred_check_branch
          %702 = sbr.rel (%p700) target = $region92
        $region91: #{tpu_custom_call.1} parent=67 // pred_region
          %p703 = scmp.lt.s32.totalorder %s35, 1
          %s704 = scalar_select %p703, %s35, 1
          %s705 = smul.addr %s704, 16
          %s706 = smul.addr %s705, 4
          %s707 = scalar_lea.vmem %s14, %s706
        $region92: #{tpu_custom_call.1} parent=67 // pred_fallthru
          _
        // Predicated region
        $region93: #{tpu_custom_call.1} parent=67 // pred_check
          %p708 = pneg %p400
        $region94: #{tpu_custom_call.1} parent=67 // pred_check_branch
          %710 = sbr.rel (%p708) target = $region96
        $region95: #{tpu_custom_call.1} parent=67 // pred_region
          %s711 = sand.u32 %s35, 1
          %s712 = scalar_lea.sflag [#allocation7], %s711
          %s713 = sand.u32 %s390, 1
          %s714 = smul.addr %s713, 2
          %s715 = scalar_lea.vmem [#allocation16], %s714
          %s717 = ssub.s32 32, 32
          %718 = vsyncadd %s712, %s717
          %s719 = smul.addr %s35, 2
          %s720 = smul.addr %s719, 16
          %s721 = scalar_lea.hbm %s15, %s720
          %s722 = sshll.u32 %s715, 4
          %s723 = int_to_ptr.vmem [resolvable:$true] %s722
          %728 = dma.hbm_to_vmem [thread:$0]  %s721, 32, %s723, %s712, 16, 16, 1
        $region96: #{tpu_custom_call.1} parent=67 // pred_fallthru
          _
      $region68: #{tpu_custom_call.1} parent=5 // pred_fallthru
        _
      %p729 = scmp.le.s32.totalorder 1, %s35
      %p730 = scmp.lt.s32.totalorder %s35, 3
      %p731 = pnand %p729, %p730
      %p732 = pneg %p731
      // Predicated region
      $region97: #{tpu_custom_call.1} parent=5 // pred_check
        _
      $region98: #{tpu_custom_call.1} parent=5 // pred_check_branch
        %734 = sbr.rel (%p731) target = $region100
      $region99: #{tpu_custom_call.1} parent=5 // pred_region
        %s735 = ssub.s32 %s35, 1
        // Predicated region
        $region101: #{tpu_custom_call.1} parent=99 // pred_check
          %p736 = pneg %p119
        $region102: #{tpu_custom_call.1} parent=99 // pred_check_branch
          %738 = sbr.rel (%p736) target = $region104
        $region103: #{tpu_custom_call.1} parent=99 // pred_region
          %739 = dma.done [#allocation7], 32
        $region104: #{tpu_custom_call.1} parent=99 // pred_fallthru
          _
        // Predicated region
        $region105: #{tpu_custom_call.1} parent=99 // pred_check
          %p740 = pneg %p140
        $region106: #{tpu_custom_call.1} parent=99 // pred_check_branch
          %742 = sbr.rel (%p740) target = $region108
        $region107: #{tpu_custom_call.1} parent=99 // pred_region
          %743 = dma.done [#allocation9], 16
        $region108: #{tpu_custom_call.1} parent=99 // pred_fallthru
          _
        // Predicated region
        $region109: #{tpu_custom_call.1} parent=99 // pred_check
          %p744 = pneg %p161
        $region110: #{tpu_custom_call.1} parent=99 // pred_check_branch
          %746 = sbr.rel (%p744) target = $region112
        $region111: #{tpu_custom_call.1} parent=99 // pred_region
          %747 = dma.done [#allocation9], 1024
        $region112: #{tpu_custom_call.1} parent=99 // pred_fallthru
          _
        // Predicated region
        $region113: #{tpu_custom_call.1} parent=99 // pred_check
          %p748 = pneg %p182
        $region114: #{tpu_custom_call.1} parent=99 // pred_check_branch
          %750 = sbr.rel (%p748) target = $region116
        $region115: #{tpu_custom_call.1} parent=99 // pred_region
          %751 = dma.done [#allocation12], 16
        $region116: #{tpu_custom_call.1} parent=99 // pred_fallthru
          _
        // Predicated region
        $region117: #{tpu_custom_call.1} parent=99 // pred_check
          %p752 = pneg %p203
        $region118: #{tpu_custom_call.1} parent=99 // pred_check_branch
          %754 = sbr.rel (%p752) target = $region120
        $region119: #{tpu_custom_call.1} parent=99 // pred_region
          %755 = dma.done [#allocation12], 1024
        $region120: #{tpu_custom_call.1} parent=99 // pred_fallthru
          _
        // Predicated region
        $region121: #{tpu_custom_call.1} parent=99 // pred_check
          %p756 = pneg %p224
        $region122: #{tpu_custom_call.1} parent=99 // pred_check_branch
          %758 = sbr.rel (%p756) target = $region124
        $region123: #{tpu_custom_call.1} parent=99 // pred_region
          %759 = dma.done [#allocation15], 16
        $region124: #{tpu_custom_call.1} parent=99 // pred_fallthru
          _
        %s760 = sand.u32 %s40, 1
        %s761 = scalar_lea.sflag [#allocation7], %s760
        %s762 = sand.u32 %s393, 1
        %s763 = smul.addr %s762, 2
        %s764 = scalar_lea.vmem [#allocation16], %s763
        // Predicated region
        $region125: #{tpu_custom_call.1} parent=99 // pred_check
          %p765 = pneg %p406
        $region126: #{tpu_custom_call.1} parent=99 // pred_check_branch
          %767 = sbr.rel (%p765) target = $region128
        $region127: #{tpu_custom_call.1} parent=99 // pred_region
          %768 = dma.done %s761, 32
        $region128: #{tpu_custom_call.1} parent=99 // pred_fallthru
          _
        %p769 = pneg %p56
        %p770 = pneg %p53
        %p771 = pneg %p77
        %p772 = pneg %p74
        %p773 = pneg %p98
        %p774 = pneg %p95
        %p775 = pneg %p119
        %p776 = pneg %p116
        %p777 = pneg %p140
        %p778 = pneg %p137
        %p779 = pneg %p161
        %p780 = pneg %p158
        %p781 = pneg %p182
        %p782 = pneg %p179
        %p783 = pneg %p203
        %p784 = pneg %p200
        %p785 = pneg %p224
        %p786 = pneg %p221
        %p787 = scmp.lt.s32.totalorder %s40, 1
        %s788 = scalar_select %p787, %s40, 1
        %s789 = smul.addr %s788, 16
        %s790 = smul.addr %s789, 4
        %s791 = scalar_lea.vmem %s9, %s790
        %p792 = pneg %p250
        %p793 = pneg %p247
        %p794 = scmp.lt.s32.totalorder %s40, 1
        %s795 = scalar_select %p794, %s40, 1
        %s796 = scalar_lea.vmem %s10, %s795
        %p797 = pneg %p276
        %p798 = pneg %p273
        %p799 = scmp.lt.s32.totalorder %s40, 1
        %s800 = scalar_select %p799, %s40, 1
        %s801 = smul.addr %s800, 16
        %s802 = smul.addr %s801, 4
        %s803 = scalar_lea.vmem %s11, %s802
        %p804 = pneg %p302
        %p805 = pneg %p299
        %p806 = scmp.lt.s32.totalorder %s40, 1
        %s807 = scalar_select %p806, %s40, 1
        %s808 = smul.addr %s807, 4
        %s809 = smul.addr %s808, 4
        %s810 = scalar_lea.vmem %s12, %s809
        %p811 = pneg %p328
        %p812 = pneg %p325
        %p813 = scmp.lt.s32.totalorder %s40, 1
        %s814 = scalar_select %p813, %s40, 1
        %s815 = smul.addr %s814, 2
        %s816 = scalar_lea.vmem %s13, %s815
        %p817 = pneg %p354
        %p818 = pneg %p351
        %p819 = scmp.lt.s32.totalorder %s40, 1
        %s820 = scalar_select %p819, %s40, 1
        %s821 = smul.addr %s820, 16
        %s822 = smul.addr %s821, 4
        %s823 = scalar_lea.vmem %s14, %s822
        %p824 = pneg %p380
        %p825 = pneg %p377
        %s826 = sand.u32 %s40, 1
        %s827 = scalar_lea.sflag [#allocation7], %s826
        %s828 = sand.u32 %s393, 1
        %s829 = smul.addr %s828, 2
        %s830 = scalar_lea.vmem [#allocation16], %s829
        %p831 = pneg %p406
        %p832 = pneg %p403
        %p833 = pneg %p427
        %p834 = pneg %p424
        %p835 = pneg %p448
        %p836 = pneg %p445
        %p837 = pneg %p469
        %p838 = pneg %p466
        %p839 = pneg %p490
        %p840 = pneg %p487
        %p841 = pneg %p511
        %p842 = pneg %p508
        %p843 = pneg %p532
        %p844 = pneg %p529
        %p845 = pneg %p553
        %p846 = pneg %p550
        %p847 = scmp.lt.s32.totalorder %s40, 1
        %s848 = scalar_select %p847, %s40, 1
        %s849 = smul.addr %s848, 16
        %s850 = smul.addr %s849, 4
        %s851 = scalar_lea.vmem %s9, %s850
        %p852 = scmp.lt.s32.totalorder %s40, 1
        %s853 = scalar_select %p852, %s40, 1
        %s854 = scalar_lea.vmem %s10, %s853
        %p855 = scmp.lt.s32.totalorder %s40, 1
        %s856 = scalar_select %p855, %s40, 1
        %s857 = smul.addr %s856, 16
        %s858 = smul.addr %s857, 4
        %s859 = scalar_lea.vmem %s11, %s858
        %p860 = scmp.lt.s32.totalorder %s40, 1
        %s861 = scalar_select %p860, %s40, 1
        %s862 = smul.addr %s861, 4
        %s863 = smul.addr %s862, 4
        %s864 = scalar_lea.vmem %s12, %s863
        %p865 = scmp.lt.s32.totalorder %s40, 1
        %s866 = scalar_select %p865, %s40, 1
        %s867 = smul.addr %s866, 2
        %s868 = scalar_lea.vmem %s13, %s867
        %p869 = scmp.lt.s32.totalorder %s40, 1
        %s870 = scalar_select %p869, %s40, 1
        %s871 = smul.addr %s870, 16
        %s872 = smul.addr %s871, 4
        %s873 = scalar_lea.vmem %s14, %s872
        %p875 = scmp.eq.s32.totalorder %s40, 0
        // Predicated region
        $region129: #{tpu_custom_call.1} parent=99 // pred_check
          %p876 = pneg %p875
        $region130: #{tpu_custom_call.1} parent=99 // pred_check_branch
          %878 = sbr.rel (%p876) target = $region132
        $region131: #{tpu_custom_call.1} parent=99 // pred_region
          %v879 = vld [vmem:[%s0] sm:$0xff]
          %v880 = vld [vmem:[%s0 + $0x8] sm:$0xff]
          %v881 = vld [vmem:[%s0 + $0x10] sm:$0xff]
          %v882 = vld [vmem:[%s0 + $0x18] sm:$0xff]
          %v883 = vld [vmem:[%s0 + $0x20] sm:$0xff]
          %v884 = vld [vmem:[%s0 + $0x28] sm:$0xff]
          %v885 = vld [vmem:[%s0 + $0x30] sm:$0xff]
          %v886 = vld [vmem:[%s0 + $0x38] sm:$0xff]
          %v887 = vld [vmem:[%s0 + $0x40] sm:$0xff]
          %v888 = vld [vmem:[%s0 + $0x48] sm:$0xff]
          %v889 = vld [vmem:[%s0 + $0x50] sm:$0xff]
          %v890 = vld [vmem:[%s0 + $0x58] sm:$0xff]
          %v891 = vld [vmem:[%s0 + $0x60] sm:$0xff]
          %v892 = vld [vmem:[%s0 + $0x68] sm:$0xff]
          %v893 = vld [vmem:[%s0 + $0x70] sm:$0xff]
          %v894 = vld [vmem:[%s0 + $0x78] sm:$0xff]
          %v895 = vld [vmem:[#allocation6] sm:$0x3]
          %v896 = vld [vmem:[#allocation8] sm:$0x1]
          %v898 = vlaneseq
          %v899 = vshrl.u32 %v898, 7
          %v900 = vsub.s32 0, %v899
          %v901 = vrot.slane %v896, %v900
          %vm903 = vcmask 15360
          %v905 = vsel %vm903, %v879, 0
          %v908 = vsel %vm903, %v880, 0
          %v911 = vsel %vm903, %v881, 0
          %v914 = vsel %vm903, %v882, 0
          %v917 = vsel %vm903, %v883, 0
          %v920 = vsel %vm903, %v884, 0
          %v923 = vsel %vm903, %v885, 0
          %v926 = vsel %vm903, %v886, 0
          %v929 = vsel %vm903, %v887, 0
          %v932 = vsel %vm903, %v888, 0
          %v935 = vsel %vm903, %v889, 0
          %v938 = vsel %vm903, %v890, 0
          %v941 = vsel %vm903, %v891, 0
          %v944 = vsel %vm903, %v892, 0
          %v947 = vsel %vm903, %v893, 0
          %v950 = vsel %vm903, %v894, 0
          %vm952 = vcmask 1041408
          %v954 = vsel %vm952, %v895, 0
          %956 = vmatprep.subr.mxu0 0.0
          %957 = vmatpush1.msra.mxu0 %v954
          %958 = vmatprep.subr.mxu0 0.0
          %959 = vmatpush1.msra.mxu0 0.0
          %960 = vmatprep.subr.mxu0 0.0
          %961 = vmatpush1.msra.mxu0 0.0
          %962 = vmatprep.subr.mxu0 0.0
          %963 = vmatpush1.msra.mxu0 0.0
          %964 = vmatprep.subr.mxu0 0.0
          %965 = vmatpush1.msra.mxu0 0.0
          %966 = vmatprep.subr.mxu0 0.0
          %967 = vmatpush1.msra.mxu0 0.0
          %968 = vmatprep.subr.mxu0 0.0
          %969 = vmatpush1.msra.mxu0 0.0
          %970 = vmatprep.subr.mxu0 0.0
          %971 = vmatpush1.msra.mxu0 0.0
          %972 = vmatprep.subr.mxu0 0.0
          %973 = vmatpush1.msra.mxu0 0.0
          %974 = vmatprep.subr.mxu0 0.0
          %975 = vmatpush1.msra.mxu0 0.0
          %976 = vmatprep.subr.mxu0 0.0
          %977 = vmatpush1.msra.mxu0 0.0
          %978 = vmatprep.subr.mxu0 0.0
          %979 = vmatpush1.msra.mxu0 0.0
          %980 = vmatprep.subr.mxu0 0.0
          %981 = vmatpush1.msra.mxu0 0.0
          %982 = vmatprep.subr.mxu0 0.0
          %983 = vmatpush1.msra.mxu0 0.0
          %984 = vmatprep.subr.mxu0 0.0
          %985 = vmatpush1.msra.mxu0 0.0
          %986 = vmatprep.subr.mxu0 0.0
          %987 = vmatpush1.msra.mxu0 0.0
          %988 = vmatprep.subr.mxu0 0.0
          %989 = vmatpush1.msra.mxu0 0.0
          %990 = vmatprep.subr.mxu0 0.0
          %991 = vmatpush1.msra.mxu0 0.0
          %992 = vmatprep.subr.mxu0 0.0
          %993 = vmatpush1.msra.mxu0 0.0
          %994 = vmatprep.subr.mxu0 0.0
          %995 = vmatpush1.msra.mxu0 0.0
          %996 = vmatprep.subr.mxu0 0.0
          %997 = vmatpush1.msra.mxu0 0.0
          %998 = vmatprep.subr.mxu0 0.0
          %999 = vmatpush1.msra.mxu0 0.0
          %1000 = vmatprep.subr.mxu0 0.0
          %1001 = vmatpush1.msra.mxu0 0.0
          %1002 = vmatprep.subr.mxu0 0.0
          %1003 = vmatpush1.msra.mxu0 0.0
          %1004 = vmatprep.subr.mxu0 0.0
          %1005 = vmatpush1.msra.mxu0 0.0
          %1006 = vmatprep.subr.mxu0 0.0
          %1007 = vmatpush1.msra.mxu0 0.0
          %1008 = vmatprep.subr.mxu0 0.0
          %1009 = vmatpush1.msra.mxu0 0.0
          %1010 = vmatprep.subr.mxu0 0.0
          %1011 = vmatpush1.msra.mxu0 0.0
          %1012 = vmatprep.subr.mxu0 0.0
          %1013 = vmatpush1.msra.mxu0 0.0
          %1014 = vmatprep.subr.mxu0 0.0
          %1015 = vmatpush1.msra.mxu0 0.0
          %1016 = vmatprep.subr.mxu0 0.0
          %1017 = vmatpush1.msra.mxu0 0.0
          %1018 = vmatprep.subr.mxu0 0.0
          %1019 = vmatpush1.msra.mxu0 0.0
          %1020 = vmatprep.mubr.f32.mxu0 0.0
          %1021 = vmatmul.mubr.f32.gmra.mrb[0].mxu0 %v905
          %v1022 = vpop.f32.mrb[0].mxu0
          %v1023 = vadd.f32 %v901, %v1022
          %v1024 = vpop.f32.mrb[0].mxu0
          %1025 = vmatprep.mubr.f32.mxu0 0.0
          %1026 = vmatmul.mubr.f32.gmra.mrb[0].mxu0 %v908
          %v1027 = vpop.f32.mrb[0].mxu0
          %v1028 = vadd.f32 %v901, %v1027
          %v1029 = vpop.f32.mrb[0].mxu0
          %1030 = vmatprep.mubr.f32.mxu0 0.0
          %1031 = vmatmul.mubr.f32.gmra.mrb[0].mxu0 %v911
          %v1032 = vpop.f32.mrb[0].mxu0
          %v1033 = vadd.f32 %v901, %v1032
          %v1034 = vpop.f32.mrb[0].mxu0
          %1035 = vmatprep.mubr.f32.mxu0 0.0
          %1036 = vmatmul.mubr.f32.gmra.mrb[0].mxu0 %v914
          %v1037 = vpop.f32.mrb[0].mxu0
          %v1038 = vadd.f32 %v901, %v1037
          %v1039 = vpop.f32.mrb[0].mxu0
          %1040 = vmatprep.mubr.f32.mxu0 0.0
          %1041 = vmatmul.mubr.f32.gmra.mrb[0].mxu0 %v917
          %v1042 = vpop.f32.mrb[0].mxu0
          %v1043 = vadd.f32 %v901, %v1042
          %v1044 = vpop.f32.mrb[0].mxu0
          %1045 = vmatprep.mubr.f32.mxu0 0.0
          %1046 = vmatmul.mubr.f32.gmra.mrb[0].mxu0 %v920
          %v1047 = vpop.f32.mrb[0].mxu0
          %v1048 = vadd.f32 %v901, %v1047
          %v1049 = vpop.f32.mrb[0].mxu0
          %1050 = vmatprep.mubr.f32.mxu0 0.0
          %1051 = vmatmul.mubr.f32.gmra.mrb[0].mxu0 %v923
          %v1052 = vpop.f32.mrb[0].mxu0
          %v1053 = vadd.f32 %v901, %v1052
          %v1054 = vpop.f32.mrb[0].mxu0
          %1055 = vmatprep.mubr.f32.mxu0 0.0
          %1056 = vmatmul.mubr.f32.gmra.mrb[0].mxu0 %v926
          %v1057 = vpop.f32.mrb[0].mxu0
          %v1058 = vadd.f32 %v901, %v1057
          %v1059 = vpop.f32.mrb[0].mxu0
          %1060 = vmatprep.mubr.f32.mxu0 0.0
          %1061 = vmatmul.mubr.f32.gmra.mrb[0].mxu0 %v929
          %v1062 = vpop.f32.mrb[0].mxu0
          %v1063 = vadd.f32 %v901, %v1062
          %v1064 = vpop.f32.mrb[0].mxu0
          %1065 = vmatprep.mubr.f32.mxu0 0.0
          %1066 = vmatmul.mubr.f32.gmra.mrb[0].mxu0 %v932
          %v1067 = vpop.f32.mrb[0].mxu0
          %v1068 = vadd.f32 %v901, %v1067
          %v1069 = vpop.f32.mrb[0].mxu0
          %1070 = vmatprep.mubr.f32.mxu0 0.0
          %1071 = vmatmul.mubr.f32.gmra.mrb[0].mxu0 %v935
          %v1072 = vpop.f32.mrb[0].mxu0
          %v1073 = vadd.f32 %v901, %v1072
          %v1074 = vpop.f32.mrb[0].mxu0
          %1075 = vmatprep.mubr.f32.mxu0 0.0
          %1076 = vmatmul.mubr.f32.gmra.mrb[0].mxu0 %v938
          %v1077 = vpop.f32.mrb[0].mxu0
          %v1078 = vadd.f32 %v901, %v1077
          %v1079 = vpop.f32.mrb[0].mxu0
          %1080 = vmatprep.mubr.f32.mxu0 0.0
          %1081 = vmatmul.mubr.f32.gmra.mrb[0].mxu0 %v941
          %v1082 = vpop.f32.mrb[0].mxu0
          %v1083 = vadd.f32 %v901, %v1082
          %v1084 = vpop.f32.mrb[0].mxu0
          %1085 = vmatprep.mubr.f32.mxu0 0.0
          %1086 = vmatmul.mubr.f32.gmra.mrb[0].mxu0 %v944
          %v1087 = vpop.f32.mrb[0].mxu0
          %v1088 = vadd.f32 %v901, %v1087
          %v1089 = vpop.f32.mrb[0].mxu0
          %1090 = vmatprep.mubr.f32.mxu0 0.0
          %1091 = vmatmul.mubr.f32.gmra.mrb[0].mxu0 %v947
          %v1092 = vpop.f32.mrb[0].mxu0
          %v1093 = vadd.f32 %v901, %v1092
          %v1094 = vpop.f32.mrb[0].mxu0
          %1095 = vmatprep.mubr.f32.mxu0 0.0
          %1096 = vmatmul.mubr.f32.gmra.mrb[0].mxu0 %v950
          %v1097 = vpop.f32.mrb[0].mxu0
          %v1098 = vadd.f32 %v901, %v1097
          %v1099 = vpop.f32.mrb[0].mxu0
          %1100 = vdwg.mxu0
          %v1101 = vmax.f32 %v1023, 0.0
          %v1102 = vmax.f32 %v1028, 0.0
          %v1103 = vmax.f32 %v1033, 0.0
          %v1104 = vmax.f32 %v1038, 0.0
          %v1105 = vmax.f32 %v1043, 0.0
          %v1106 = vmax.f32 %v1048, 0.0
          %v1107 = vmax.f32 %v1053, 0.0
          %v1108 = vmax.f32 %v1058, 0.0
          %v1109 = vmax.f32 %v1063, 0.0
          %v1110 = vmax.f32 %v1068, 0.0
          %v1111 = vmax.f32 %v1073, 0.0
          %v1112 = vmax.f32 %v1078, 0.0
          %v1113 = vmax.f32 %v1083, 0.0
          %v1114 = vmax.f32 %v1088, 0.0
          %v1115 = vmax.f32 %v1093, 0.0
          %v1116 = vmax.f32 %v1098, 0.0
          %vm1117 = vcmask 523264
          %1118 = vst.msk [vmem:[#allocation2] sm:$0xff] %vm1117, %v1101
          %1119 = vst.msk [vmem:[#allocation2 + $0x8] sm:$0xff] %vm1117, %v1102
          %1120 = vst.msk [vmem:[#allocation2 + $0x10] sm:$0xff] %vm1117, %v1103
          %1121 = vst.msk [vmem:[#allocation2 + $0x18] sm:$0xff] %vm1117, %v1104
          %1122 = vst.msk [vmem:[#allocation2 + $0x20] sm:$0xff] %vm1117, %v1105
          %1123 = vst.msk [vmem:[#allocation2 + $0x28] sm:$0xff] %vm1117, %v1106
          %1124 = vst.msk [vmem:[#allocation2 + $0x30] sm:$0xff] %vm1117, %v1107
          %1125 = vst.msk [vmem:[#allocation2 + $0x38] sm:$0xff] %vm1117, %v1108
          %1126 = vst.msk [vmem:[#allocation2 + $0x40] sm:$0xff] %vm1117, %v1109
          %1127 = vst.msk [vmem:[#allocation2 + $0x48] sm:$0xff] %vm1117, %v1110
          %1128 = vst.msk [vmem:[#allocation2 + $0x50] sm:$0xff] %vm1117, %v1111
          %1129 = vst.msk [vmem:[#allocation2 + $0x58] sm:$0xff] %vm1117, %v1112
          %1130 = vst.msk [vmem:[#allocation2 + $0x60] sm:$0xff] %vm1117, %v1113
          %1131 = vst.msk [vmem:[#allocation2 + $0x68] sm:$0xff] %vm1117, %v1114
          %1132 = vst.msk [vmem:[#allocation2 + $0x70] sm:$0xff] %vm1117, %v1115
          %1133 = vst.msk [vmem:[#allocation2 + $0x78] sm:$0xff] %vm1117, %v1116
          %1134 = vst.msk [vmem:[#allocation3] sm:$0xff] %vm1117, 0.0
          %1135 = vst.msk [vmem:[#allocation3 + $0x8] sm:$0xff] %vm1117, 0.0
          %1136 = vst.msk [vmem:[#allocation3 + $0x10] sm:$0xff] %vm1117, 0.0
          %1137 = vst.msk [vmem:[#allocation3 + $0x18] sm:$0xff] %vm1117, 0.0
          %1138 = vst.msk [vmem:[#allocation3 + $0x20] sm:$0xff] %vm1117, 0.0
          %1139 = vst.msk [vmem:[#allocation3 + $0x28] sm:$0xff] %vm1117, 0.0
          %1140 = vst.msk [vmem:[#allocation3 + $0x30] sm:$0xff] %vm1117, 0.0
          %1141 = vst.msk [vmem:[#allocation3 + $0x38] sm:$0xff] %vm1117, 0.0
          %1142 = vst.msk [vmem:[#allocation3 + $0x40] sm:$0xff] %vm1117, 0.0
          %1143 = vst.msk [vmem:[#allocation3 + $0x48] sm:$0xff] %vm1117, 0.0
          %1144 = vst.msk [vmem:[#allocation3 + $0x50] sm:$0xff] %vm1117, 0.0
          %1145 = vst.msk [vmem:[#allocation3 + $0x58] sm:$0xff] %vm1117, 0.0
          %1146 = vst.msk [vmem:[#allocation3 + $0x60] sm:$0xff] %vm1117, 0.0
          %1147 = vst.msk [vmem:[#allocation3 + $0x68] sm:$0xff] %vm1117, 0.0
          %1148 = vst.msk [vmem:[#allocation3 + $0x70] sm:$0xff] %vm1117, 0.0
          %1149 = vst.msk [vmem:[#allocation3 + $0x78] sm:$0xff] %vm1117, 0.0
          %v1150 = vld [vmem:[%s2] sm:$0xf]
          %v1151 = vld [vmem:[%s2 + $0x4] sm:$0xf]
          %v1152 = vld [vmem:[%s2 + $0x8] sm:$0xf]
          %v1153 = vld [vmem:[%s2 + $0xc] sm:$0xf]
          %v1154 = vld [vmem:[%s2 + $0x10] sm:$0xf]
          %v1155 = vld [vmem:[%s2 + $0x14] sm:$0xf]
          %v1156 = vld [vmem:[%s2 + $0x18] sm:$0xf]
          %v1157 = vld [vmem:[%s2 + $0x1c] sm:$0xf]
          %v1158 = vld [vmem:[%s2 + $0x20] sm:$0xf]
          %v1159 = vld [vmem:[%s2 + $0x24] sm:$0xf]
          %v1160 = vld [vmem:[%s2 + $0x28] sm:$0xf]
          %v1161 = vld [vmem:[%s2 + $0x2c] sm:$0xf]
          %v1162 = vld [vmem:[%s2 + $0x30] sm:$0xf]
          %v1163 = vld [vmem:[%s2 + $0x34] sm:$0xf]
          %v1164 = vld [vmem:[%s2 + $0x38] sm:$0xf]
          %v1165 = vld [vmem:[%s2 + $0x3c] sm:$0xf]
          %v1166 = vld [vmem:[#allocation10] sm:$0xf]
          %v1167 = vld [vmem:[#allocation10 + $0x4] sm:$0xf]
          %v1168 = vld [vmem:[#allocation10 + $0x8] sm:$0xf]
          %v1169 = vld [vmem:[#allocation10 + $0xc] sm:$0xf]
          %v1170 = vld [vmem:[#allocation10 + $0x10] sm:$0xf]
          %v1171 = vld [vmem:[#allocation10 + $0x14] sm:$0xf]
          %v1172 = vld [vmem:[#allocation10 + $0x18] sm:$0xf]
          %v1173 = vld [vmem:[#allocation10 + $0x1c] sm:$0xf]
          %v1174 = vld [vmem:[#allocation10 + $0x20] sm:$0xf]
          %v1175 = vld [vmem:[#allocation10 + $0x24] sm:$0xf]
          %v1176 = vld [vmem:[#allocation10 + $0x28] sm:$0xf]
          %v1177 = vld [vmem:[#allocation10 + $0x2c] sm:$0xf]
          %v1178 = vld [vmem:[#allocation10 + $0x30] sm:$0xf]
          %v1179 = vld [vmem:[#allocation10 + $0x34] sm:$0xf]
          %v1180 = vld [vmem:[#allocation10 + $0x38] sm:$0xf]
          %v1181 = vld [vmem:[#allocation10 + $0x3c] sm:$0xf]
          %v1182 = vld [vmem:[#allocation11] sm:$0x1]
          %v1184 = vlaneseq
          %v1185 = vshrl.u32 %v1184, 7
          %v1186 = vsub.s32 0, %v1185
          %v1187 = vrot.slane %v1182, %v1186
          %v1205 = vunpack.c.l.b16 %v1150
          %v1206 = vunpack.c.l.b16 %v1151
          %v1207 = vunpack.c.l.b16 %v1152
          %v1208 = vunpack.c.l.b16 %v1153
          %v1209 = vunpack.c.l.b16 %v1154
          %v1210 = vunpack.c.l.b16 %v1155
          %v1211 = vunpack.c.l.b16 %v1156
          %v1212 = vunpack.c.l.b16 %v1157
          %v1213 = vunpack.c.l.b16 %v1158
          %v1214 = vunpack.c.l.b16 %v1159
          %v1215 = vunpack.c.l.b16 %v1160
          %v1216 = vunpack.c.l.b16 %v1161
          %v1217 = vunpack.c.l.b16 %v1162
          %v1218 = vunpack.c.l.b16 %v1163
          %v1219 = vunpack.c.l.b16 %v1164
          %v1220 = vunpack.c.l.b16 %v1165
          %v1221 = vpack.c.b16 %v1206, %v1205
          %v1222 = vpack.c.b16 %v1208, %v1207
          %v1223 = vpack.c.b16 %v1210, %v1209
          %v1224 = vpack.c.b16 %v1212, %v1211
          %v1225 = vpack.c.b16 %v1214, %v1213
          %v1226 = vpack.c.b16 %v1216, %v1215
          %v1227 = vpack.c.b16 %v1218, %v1217
          %v1228 = vpack.c.b16 %v1220, %v1219
          %v1253 = vunpack.c.l.b16 %v1166
          %v1254 = vunpack.c.l.b16 %v1167
          %v1255 = vunpack.c.l.b16 %v1168
          %v1256 = vunpack.c.l.b16 %v1169
          %v1257 = vunpack.c.l.b16 %v1170
          %v1258 = vunpack.c.l.b16 %v1171
          %v1259 = vunpack.c.l.b16 %v1172
          %v1260 = vunpack.c.l.b16 %v1173
          %v1261 = vunpack.c.l.b16 %v1174
          %v1262 = vunpack.c.l.b16 %v1175
          %v1263 = vunpack.c.l.b16 %v1176
          %v1264 = vunpack.c.l.b16 %v1177
          %v1265 = vunpack.c.l.b16 %v1178
          %v1266 = vunpack.c.l.b16 %v1179
          %v1267 = vunpack.c.l.b16 %v1180
          %v1268 = vunpack.c.l.b16 %v1181
          %v1269 = vpack.c.b16 %v1254, %v1253
          %v1270 = vpack.c.b16 %v1256, %v1255
          %v1271 = vpack.c.b16 %v1258, %v1257
          %v1272 = vpack.c.b16 %v1260, %v1259
          %v1273 = vpack.c.b16 %v1262, %v1261
          %v1274 = vpack.c.b16 %v1264, %v1263
          %v1275 = vpack.c.b16 %v1266, %v1265
          %v1276 = vpack.c.b16 %v1268, %v1267
          %1285 = vmatprep.subr.bf16.mxu0 0
          %1286 = vmatpush1.bf16.msra.mxu0 %v1269
          %1287 = vmatprep.subr.bf16.mxu0 0
          %1288 = vmatpush1.bf16.msra.mxu0 %v1270
          %1289 = vmatprep.subr.bf16.mxu0 0
          %1290 = vmatpush1.bf16.msra.mxu0 %v1271
          %1291 = vmatprep.subr.bf16.mxu0 0
          %1292 = vmatpush1.bf16.msra.mxu0 %v1272
          %1293 = vmatprep.subr.bf16.mxu0 0
          %1294 = vmatpush1.bf16.msra.mxu0 %v1273
          %1295 = vmatprep.subr.bf16.mxu0 0
          %1296 = vmatpush1.bf16.msra.mxu0 %v1274
          %1297 = vmatprep.subr.bf16.mxu0 0
          %1298 = vmatpush1.bf16.msra.mxu0 %v1275
          %1299 = vmatprep.subr.bf16.mxu0 0
          %1300 = vmatpush1.bf16.msra.mxu0 %v1276
          %1301 = vmatprep.subr.bf16.mxu0 0
          %1302 = vmatpush1.bf16.msra.mxu0 0
          %1303 = vmatprep.subr.bf16.mxu0 0
          %1304 = vmatpush1.bf16.msra.mxu0 0
          %1305 = vmatprep.subr.bf16.mxu0 0
          %1306 = vmatpush1.bf16.msra.mxu0 0
          %1307 = vmatprep.subr.bf16.mxu0 0
          %1308 = vmatpush1.bf16.msra.mxu0 0
          %1309 = vmatprep.subr.bf16.mxu0 0
          %1310 = vmatpush1.bf16.msra.mxu0 0
          %1311 = vmatprep.subr.bf16.mxu0 0
          %1312 = vmatpush1.bf16.msra.mxu0 0
          %1313 = vmatprep.subr.bf16.mxu0 0
          %1314 = vmatpush1.bf16.msra.mxu0 0
          %1315 = vmatprep.subr.bf16.mxu0 0
          %1316 = vmatpush1.bf16.msra.mxu0 0
          %1317 = vmatprep.mubr.bf16.mxu0 0
          %1318 = vmatmul.mubr.bf16.gmra.mrb[0].mxu0 %v1221
          %v1319 = vpop.f32.mrb[0].mxu0
          %v1320 = vadd.f32 %v1187, %v1319
          %v1321 = vpop.f32.mrb[0].mxu0
          %v1322 = vpop.f32.mrb[0].mxu0
          %v1323 = vadd.f32 %v1187, %v1322
          %v1324 = vpop.f32.mrb[0].mxu0
          %1325 = vmatprep.mubr.bf16.mxu0 0
          %1326 = vmatmul.mubr.bf16.gmra.mrb[0].mxu0 %v1222
          %v1327 = vpop.f32.mrb[0].mxu0
          %v1328 = vadd.f32 %v1187, %v1327
          %v1329 = vpop.f32.mrb[0].mxu0
          %v1330 = vpop.f32.mrb[0].mxu0
          %v1331 = vadd.f32 %v1187, %v1330
          %v1332 = vpop.f32.mrb[0].mxu0
          %1333 = vmatprep.mubr.bf16.mxu0 0
          %1334 = vmatmul.mubr.bf16.gmra.mrb[0].mxu0 %v1223
          %v1335 = vpop.f32.mrb[0].mxu0
          %v1336 = vadd.f32 %v1187, %v1335
          %v1337 = vpop.f32.mrb[0].mxu0
          %v1338 = vpop.f32.mrb[0].mxu0
          %v1339 = vadd.f32 %v1187, %v1338
          %v1340 = vpop.f32.mrb[0].mxu0
          %1341 = vmatprep.mubr.bf16.mxu0 0
          %1342 = vmatmul.mubr.bf16.gmra.mrb[0].mxu0 %v1224
          %v1343 = vpop.f32.mrb[0].mxu0
          %v1344 = vadd.f32 %v1187, %v1343
          %v1345 = vpop.f32.mrb[0].mxu0
          %v1346 = vpop.f32.mrb[0].mxu0
          %v1347 = vadd.f32 %v1187, %v1346
          %v1348 = vpop.f32.mrb[0].mxu0
          %1349 = vmatprep.mubr.bf16.mxu0 0
          %1350 = vmatmul.mubr.bf16.gmra.mrb[0].mxu0 %v1225
          %v1351 = vpop.f32.mrb[0].mxu0
          %v1352 = vadd.f32 %v1187, %v1351
          %v1353 = vpop.f32.mrb[0].mxu0
          %v1354 = vpop.f32.mrb[0].mxu0
          %v1355 = vadd.f32 %v1187, %v1354
          %v1356 = vpop.f32.mrb[0].mxu0
          %1357 = vmatprep.mubr.bf16.mxu0 0
          %1358 = vmatmul.mubr.bf16.gmra.mrb[0].mxu0 %v1226
          %v1359 = vpop.f32.mrb[0].mxu0
          %v1360 = vadd.f32 %v1187, %v1359
          %v1361 = vpop.f32.mrb[0].mxu0
          %v1362 = vpop.f32.mrb[0].mxu0
          %v1363 = vadd.f32 %v1187, %v1362
          %v1364 = vpop.f32.mrb[0].mxu0
          %1365 = vmatprep.mubr.bf16.mxu0 0
          %1366 = vmatmul.mubr.bf16.gmra.mrb[0].mxu0 %v1227
          %v1367 = vpop.f32.mrb[0].mxu0
          %v1368 = vadd.f32 %v1187, %v1367
          %v1369 = vpop.f32.mrb[0].mxu0
          %v1370 = vpop.f32.mrb[0].mxu0
          %v1371 = vadd.f32 %v1187, %v1370
          %v1372 = vpop.f32.mrb[0].mxu0
          %1373 = vmatprep.mubr.bf16.mxu0 0
          %1374 = vmatmul.mubr.bf16.gmra.mrb[0].mxu0 %v1228
          %v1375 = vpop.f32.mrb[0].mxu0
          %v1376 = vadd.f32 %v1187, %v1375
          %v1377 = vpop.f32.mrb[0].mxu0
          %v1378 = vpop.f32.mrb[0].mxu0
          %v1379 = vadd.f32 %v1187, %v1378
          %v1380 = vpop.f32.mrb[0].mxu0
          %1381 = vdwg.mxu0
          %v1382 = vxor.u32 %v1320, 2147483648
          %v1383 = vxor.u32 %v1323, 2147483648
          %v1384 = vxor.u32 %v1328, 2147483648
          %v1385 = vxor.u32 %v1331, 2147483648
          %v1386 = vxor.u32 %v1336, 2147483648
          %v1387 = vxor.u32 %v1339, 2147483648
          %v1388 = vxor.u32 %v1344, 2147483648
          %v1389 = vxor.u32 %v1347, 2147483648
          %v1390 = vxor.u32 %v1352, 2147483648
          %v1391 = vxor.u32 %v1355, 2147483648
          %v1392 = vxor.u32 %v1360, 2147483648
          %v1393 = vxor.u32 %v1363, 2147483648
          %v1394 = vxor.u32 %v1368, 2147483648
          %v1395 = vxor.u32 %v1371, 2147483648
          %v1396 = vxor.u32 %v1376, 2147483648
          %v1397 = vxor.u32 %v1379, 2147483648
          %v1398 = vmul.f32 %v1382, 1.442695
          %v1399 = vpow.pop %v1398
          %v1400 = vmul.f32 %v1383, 1.442695
          %v1401 = vpow.pop %v1400
          %v1402 = vmul.f32 %v1384, 1.442695
          %v1403 = vpow.pop %v1402
          %v1404 = vmul.f32 %v1385, 1.442695
          %v1405 = vpow.pop %v1404
          %v1406 = vmul.f32 %v1386, 1.442695
          %v1407 = vpow.pop %v1406
          %v1408 = vmul.f32 %v1387, 1.442695
          %v1409 = vpow.pop %v1408
          %v1410 = vmul.f32 %v1388, 1.442695
          %v1411 = vpow.pop %v1410
          %v1412 = vmul.f32 %v1389, 1.442695
          %v1413 = vpow.pop %v1412
          %v1414 = vmul.f32 %v1390, 1.442695
          %v1415 = vpow.pop %v1414
          %v1416 = vmul.f32 %v1391, 1.442695
          %v1417 = vpow.pop %v1416
          %v1418 = vmul.f32 %v1392, 1.442695
          %v1419 = vpow.pop %v1418
          %v1420 = vmul.f32 %v1393, 1.442695
          %v1421 = vpow.pop %v1420
          %v1422 = vmul.f32 %v1394, 1.442695
          %v1423 = vpow.pop %v1422
          %v1424 = vmul.f32 %v1395, 1.442695
          %v1425 = vpow.pop %v1424
          %v1426 = vmul.f32 %v1396, 1.442695
          %v1427 = vpow.pop %v1426
          %v1428 = vmul.f32 %v1397, 1.442695
          %v1429 = vpow.pop %v1428
          %v1430 = vadd.f32 %v1399, 1.0
          %v1431 = vadd.f32 %v1401, 1.0
          %v1432 = vadd.f32 %v1403, 1.0
          %v1433 = vadd.f32 %v1405, 1.0
          %v1434 = vadd.f32 %v1407, 1.0
          %v1435 = vadd.f32 %v1409, 1.0
          %v1436 = vadd.f32 %v1411, 1.0
          %v1437 = vadd.f32 %v1413, 1.0
          %v1438 = vadd.f32 %v1415, 1.0
          %v1439 = vadd.f32 %v1417, 1.0
          %v1440 = vadd.f32 %v1419, 1.0
          %v1441 = vadd.f32 %v1421, 1.0
          %v1442 = vadd.f32 %v1423, 1.0
          %v1443 = vadd.f32 %v1425, 1.0
          %v1444 = vadd.f32 %v1427, 1.0
          %v1445 = vadd.f32 %v1429, 1.0
          %v1446 = vrcp.pop %v1430
          %v1447 = vmul.f32 1.0, %v1446
          %v1448 = vrcp.pop %v1431
          %v1449 = vmul.f32 1.0, %v1448
          %v1450 = vrcp.pop %v1432
          %v1451 = vmul.f32 1.0, %v1450
          %v1452 = vrcp.pop %v1433
          %v1453 = vmul.f32 1.0, %v1452
          %v1454 = vrcp.pop %v1434
          %v1455 = vmul.f32 1.0, %v1454
          %v1456 = vrcp.pop %v1435
          %v1457 = vmul.f32 1.0, %v1456
          %v1458 = vrcp.pop %v1436
          %v1459 = vmul.f32 1.0, %v1458
          %v1460 = vrcp.pop %v1437
          %v1461 = vmul.f32 1.0, %v1460
          %v1462 = vrcp.pop %v1438
          %v1463 = vmul.f32 1.0, %v1462
          %v1464 = vrcp.pop %v1439
          %v1465 = vmul.f32 1.0, %v1464
          %v1466 = vrcp.pop %v1440
          %v1467 = vmul.f32 1.0, %v1466
          %v1468 = vrcp.pop %v1441
          %v1469 = vmul.f32 1.0, %v1468
          %v1470 = vrcp.pop %v1442
          %v1471 = vmul.f32 1.0, %v1470
          %v1472 = vrcp.pop %v1443
          %v1473 = vmul.f32 1.0, %v1472
          %v1474 = vrcp.pop %v1444
          %v1475 = vmul.f32 1.0, %v1474
          %v1476 = vrcp.pop %v1445
          %v1477 = vmul.f32 1.0, %v1476
          %v1478 = vmul.f32 %v1320, %v1447
          %v1479 = vmul.f32 %v1323, %v1449
          %v1480 = vmul.f32 %v1328, %v1451
          %v1481 = vmul.f32 %v1331, %v1453
          %v1482 = vmul.f32 %v1336, %v1455
          %v1483 = vmul.f32 %v1339, %v1457
          %v1484 = vmul.f32 %v1344, %v1459
          %v1485 = vmul.f32 %v1347, %v1461
          %v1486 = vmul.f32 %v1352, %v1463
          %v1487 = vmul.f32 %v1355, %v1465
          %v1488 = vmul.f32 %v1360, %v1467
          %v1489 = vmul.f32 %v1363, %v1469
          %v1490 = vmul.f32 %v1368, %v1471
          %v1491 = vmul.f32 %v1371, %v1473
          %v1492 = vmul.f32 %v1376, %v1475
          %v1493 = vmul.f32 %v1379, %v1477
          %v1494 = vpack.c.bf16 %v1479, %v1478
          %v1495 = vpack.c.bf16 %v1481, %v1480
          %v1496 = vpack.c.bf16 %v1483, %v1482
          %v1497 = vpack.c.bf16 %v1485, %v1484
          %v1498 = vpack.c.bf16 %v1487, %v1486
          %v1499 = vpack.c.bf16 %v1489, %v1488
          %v1500 = vpack.c.bf16 %v1491, %v1490
          %v1501 = vpack.c.bf16 %v1493, %v1492
          %v1502 = vld [vmem:[#allocation13] sm:$0xf]
          %v1503 = vld [vmem:[#allocation13 + $0x4] sm:$0xf]
          %v1504 = vld [vmem:[#allocation13 + $0x8] sm:$0xf]
          %v1505 = vld [vmem:[#allocation13 + $0xc] sm:$0xf]
          %v1506 = vld [vmem:[#allocation13 + $0x10] sm:$0xf]
          %v1507 = vld [vmem:[#allocation13 + $0x14] sm:$0xf]
          %v1508 = vld [vmem:[#allocation13 + $0x18] sm:$0xf]
          %v1509 = vld [vmem:[#allocation13 + $0x1c] sm:$0xf]
          %v1510 = vld [vmem:[#allocation13 + $0x20] sm:$0xf]
          %v1511 = vld [vmem:[#allocation13 + $0x24] sm:$0xf]
          %v1512 = vld [vmem:[#allocation13 + $0x28] sm:$0xf]
          %v1513 = vld [vmem:[#allocation13 + $0x2c] sm:$0xf]
          %v1514 = vld [vmem:[#allocation13 + $0x30] sm:$0xf]
          %v1515 = vld [vmem:[#allocation13 + $0x34] sm:$0xf]
          %v1516 = vld [vmem:[#allocation13 + $0x38] sm:$0xf]
          %v1517 = vld [vmem:[#allocation13 + $0x3c] sm:$0xf]
          %v1518 = vld [vmem:[#allocation14] sm:$0x1]
          %v1520 = vlaneseq
          %v1521 = vshrl.u32 %v1520, 7
          %v1522 = vsub.s32 0, %v1521
          %v1523 = vrot.slane %v1518, %v1522
          %v1541 = vunpack.c.l.b16 %v1502
          %v1542 = vunpack.c.l.b16 %v1503
          %v1543 = vunpack.c.l.b16 %v1504
          %v1544 = vunpack.c.l.b16 %v1505
          %v1545 = vunpack.c.l.b16 %v1506
          %v1546 = vunpack.c.l.b16 %v1507
          %v1547 = vunpack.c.l.b16 %v1508
          %v1548 = vunpack.c.l.b16 %v1509
          %v1549 = vunpack.c.l.b16 %v1510
          %v1550 = vunpack.c.l.b16 %v1511
          %v1551 = vunpack.c.l.b16 %v1512
          %v1552 = vunpack.c.l.b16 %v1513
          %v1553 = vunpack.c.l.b16 %v1514
          %v1554 = vunpack.c.l.b16 %v1515
          %v1555 = vunpack.c.l.b16 %v1516
          %v1556 = vunpack.c.l.b16 %v1517
          %v1557 = vpack.c.b16 %v1542, %v1541
          %v1558 = vpack.c.b16 %v1544, %v1543
          %v1559 = vpack.c.b16 %v1546, %v1545
          %v1560 = vpack.c.b16 %v1548, %v1547
          %v1561 = vpack.c.b16 %v1550, %v1549
          %v1562 = vpack.c.b16 %v1552, %v1551
          %v1563 = vpack.c.b16 %v1554, %v1553
          %v1564 = vpack.c.b16 %v1556, %v1555
          %1573 = vmatprep.subr.bf16.mxu0 0
          %1574 = vmatpush1.bf16.msra.mxu0 %v1557
          %1575 = vmatprep.subr.bf16.mxu0 0
          %1576 = vmatpush1.bf16.msra.mxu0 %v1558
          %1577 = vmatprep.subr.bf16.mxu0 0
          %1578 = vmatpush1.bf16.msra.mxu0 %v1559
          %1579 = vmatprep.subr.bf16.mxu0 0
          %1580 = vmatpush1.bf16.msra.mxu0 %v1560
          %1581 = vmatprep.subr.bf16.mxu0 0
          %1582 = vmatpush1.bf16.msra.mxu0 %v1561
          %1583 = vmatprep.subr.bf16.mxu0 0
          %1584 = vmatpush1.bf16.msra.mxu0 %v1562
          %1585 = vmatprep.subr.bf16.mxu0 0
          %1586 = vmatpush1.bf16.msra.mxu0 %v1563
          %1587 = vmatprep.subr.bf16.mxu0 0
          %1588 = vmatpush1.bf16.msra.mxu0 %v1564
          %1589 = vmatprep.subr.bf16.mxu0 0
          %1590 = vmatpush1.bf16.msra.mxu0 0
          %1591 = vmatprep.subr.bf16.mxu0 0
          %1592 = vmatpush1.bf16.msra.mxu0 0
          %1593 = vmatprep.subr.bf16.mxu0 0
          %1594 = vmatpush1.bf16.msra.mxu0 0
          %1595 = vmatprep.subr.bf16.mxu0 0
          %1596 = vmatpush1.bf16.msra.mxu0 0
          %1597 = vmatprep.subr.bf16.mxu0 0
          %1598 = vmatpush1.bf16.msra.mxu0 0
          %1599 = vmatprep.subr.bf16.mxu0 0
          %1600 = vmatpush1.bf16.msra.mxu0 0
          %1601 = vmatprep.subr.bf16.mxu0 0
          %1602 = vmatpush1.bf16.msra.mxu0 0
          %1603 = vmatprep.subr.bf16.mxu0 0
          %1604 = vmatpush1.bf16.msra.mxu0 0
          %1605 = vmatprep.mubr.bf16.mxu0 0
          %1606 = vmatmul.mubr.bf16.gmra.mrb[0].mxu0 %v1494
          %v1607 = vpop.f32.mrb[0].mxu0
          %v1608 = vadd.f32 %v1523, %v1607
          %v1609 = vpop.f32.mrb[0].mxu0
          %v1610 = vpop.f32.mrb[0].mxu0
          %v1611 = vadd.f32 %v1523, %v1610
          %v1612 = vpop.f32.mrb[0].mxu0
          %1613 = vmatprep.mubr.bf16.mxu0 0
          %1614 = vmatmul.mubr.bf16.gmra.mrb[0].mxu0 %v1495
          %v1615 = vpop.f32.mrb[0].mxu0
          %v1616 = vadd.f32 %v1523, %v1615
          %v1617 = vpop.f32.mrb[0].mxu0
          %v1618 = vpop.f32.mrb[0].mxu0
          %v1619 = vadd.f32 %v1523, %v1618
          %v1620 = vpop.f32.mrb[0].mxu0
          %1621 = vmatprep.mubr.bf16.mxu0 0
          %1622 = vmatmul.mubr.bf16.gmra.mrb[0].mxu0 %v1496
          %v1623 = vpop.f32.mrb[0].mxu0
          %v1624 = vadd.f32 %v1523, %v1623
          %v1625 = vpop.f32.mrb[0].mxu0
          %v1626 = vpop.f32.mrb[0].mxu0
          %v1627 = vadd.f32 %v1523, %v1626
          %v1628 = vpop.f32.mrb[0].mxu0
          %1629 = vmatprep.mubr.bf16.mxu0 0
          %1630 = vmatmul.mubr.bf16.gmra.mrb[0].mxu0 %v1497
          %v1631 = vpop.f32.mrb[0].mxu0
          %v1632 = vadd.f32 %v1523, %v1631
          %v1633 = vpop.f32.mrb[0].mxu0
          %v1634 = vpop.f32.mrb[0].mxu0
          %v1635 = vadd.f32 %v1523, %v1634
          %v1636 = vpop.f32.mrb[0].mxu0
          %1637 = vmatprep.mubr.bf16.mxu0 0
          %1638 = vmatmul.mubr.bf16.gmra.mrb[0].mxu0 %v1498
          %v1639 = vpop.f32.mrb[0].mxu0
          %v1640 = vadd.f32 %v1523, %v1639
          %v1641 = vpop.f32.mrb[0].mxu0
          %v1642 = vpop.f32.mrb[0].mxu0
          %v1643 = vadd.f32 %v1523, %v1642
          %v1644 = vpop.f32.mrb[0].mxu0
          %1645 = vmatprep.mubr.bf16.mxu0 0
          %1646 = vmatmul.mubr.bf16.gmra.mrb[0].mxu0 %v1499
          %v1647 = vpop.f32.mrb[0].mxu0
          %v1648 = vadd.f32 %v1523, %v1647
          %v1649 = vpop.f32.mrb[0].mxu0
          %v1650 = vpop.f32.mrb[0].mxu0
          %v1651 = vadd.f32 %v1523, %v1650
          %v1652 = vpop.f32.mrb[0].mxu0
          %1653 = vmatprep.mubr.bf16.mxu0 0
          %1654 = vmatmul.mubr.bf16.gmra.mrb[0].mxu0 %v1500
          %v1655 = vpop.f32.mrb[0].mxu0
          %v1656 = vadd.f32 %v1523, %v1655
          %v1657 = vpop.f32.mrb[0].mxu0
          %v1658 = vpop.f32.mrb[0].mxu0
          %v1659 = vadd.f32 %v1523, %v1658
          %v1660 = vpop.f32.mrb[0].mxu0
          %1661 = vmatprep.mubr.bf16.mxu0 0
          %1662 = vmatmul.mubr.bf16.gmra.mrb[0].mxu0 %v1501
          %v1663 = vpop.f32.mrb[0].mxu0
          %v1664 = vadd.f32 %v1523, %v1663
          %v1665 = vpop.f32.mrb[0].mxu0
          %v1666 = vpop.f32.mrb[0].mxu0
          %v1667 = vadd.f32 %v1523, %v1666
          %v1668 = vpop.f32.mrb[0].mxu0
          %1669 = vdwg.mxu0
          %v1670 = vxor.u32 %v1608, 2147483648
          %v1671 = vxor.u32 %v1611, 2147483648
          %v1672 = vxor.u32 %v1616, 2147483648
          %v1673 = vxor.u32 %v1619, 2147483648
          %v1674 = vxor.u32 %v1624, 2147483648
          %v1675 = vxor.u32 %v1627, 2147483648
          %v1676 = vxor.u32 %v1632, 2147483648
          %v1677 = vxor.u32 %v1635, 2147483648
          %v1678 = vxor.u32 %v1640, 2147483648
          %v1679 = vxor.u32 %v1643, 2147483648
          %v1680 = vxor.u32 %v1648, 2147483648
          %v1681 = vxor.u32 %v1651, 2147483648
          %v1682 = vxor.u32 %v1656, 2147483648
          %v1683 = vxor.u32 %v1659, 2147483648
          %v1684 = vxor.u32 %v1664, 2147483648
          %v1685 = vxor.u32 %v1667, 2147483648
          %v1686 = vmul.f32 %v1670, 1.442695
          %v1687 = vpow.pop %v1686
          %v1688 = vmul.f32 %v1671, 1.442695
          %v1689 = vpow.pop %v1688
          %v1690 = vmul.f32 %v1672, 1.442695
          %v1691 = vpow.pop %v1690
          %v1692 = vmul.f32 %v1673, 1.442695
          %v1693 = vpow.pop %v1692
          %v1694 = vmul.f32 %v1674, 1.442695
          %v1695 = vpow.pop %v1694
          %v1696 = vmul.f32 %v1675, 1.442695
          %v1697 = vpow.pop %v1696
          %v1698 = vmul.f32 %v1676, 1.442695
          %v1699 = vpow.pop %v1698
          %v1700 = vmul.f32 %v1677, 1.442695
          %v1701 = vpow.pop %v1700
          %v1702 = vmul.f32 %v1678, 1.442695
          %v1703 = vpow.pop %v1702
          %v1704 = vmul.f32 %v1679, 1.442695
          %v1705 = vpow.pop %v1704
          %v1706 = vmul.f32 %v1680, 1.442695
          %v1707 = vpow.pop %v1706
          %v1708 = vmul.f32 %v1681, 1.442695
          %v1709 = vpow.pop %v1708
          %v1710 = vmul.f32 %v1682, 1.442695
          %v1711 = vpow.pop %v1710
          %v1712 = vmul.f32 %v1683, 1.442695
          %v1713 = vpow.pop %v1712
          %v1714 = vmul.f32 %v1684, 1.442695
          %v1715 = vpow.pop %v1714
          %v1716 = vmul.f32 %v1685, 1.442695
          %v1717 = vpow.pop %v1716
          %v1718 = vadd.f32 %v1687, 1.0
          %v1719 = vadd.f32 %v1689, 1.0
          %v1720 = vadd.f32 %v1691, 1.0
          %v1721 = vadd.f32 %v1693, 1.0
          %v1722 = vadd.f32 %v1695, 1.0
          %v1723 = vadd.f32 %v1697, 1.0
          %v1724 = vadd.f32 %v1699, 1.0
          %v1725 = vadd.f32 %v1701, 1.0
          %v1726 = vadd.f32 %v1703, 1.0
          %v1727 = vadd.f32 %v1705, 1.0
          %v1728 = vadd.f32 %v1707, 1.0
          %v1729 = vadd.f32 %v1709, 1.0
          %v1730 = vadd.f32 %v1711, 1.0
          %v1731 = vadd.f32 %v1713, 1.0
          %v1732 = vadd.f32 %v1715, 1.0
          %v1733 = vadd.f32 %v1717, 1.0
          %v1734 = vrcp.pop %v1718
          %v1735 = vmul.f32 1.0, %v1734
          %v1736 = vrcp.pop %v1719
          %v1737 = vmul.f32 1.0, %v1736
          %v1738 = vrcp.pop %v1720
          %v1739 = vmul.f32 1.0, %v1738
          %v1740 = vrcp.pop %v1721
          %v1741 = vmul.f32 1.0, %v1740
          %v1742 = vrcp.pop %v1722
          %v1743 = vmul.f32 1.0, %v1742
          %v1744 = vrcp.pop %v1723
          %v1745 = vmul.f32 1.0, %v1744
          %v1746 = vrcp.pop %v1724
          %v1747 = vmul.f32 1.0, %v1746
          %v1748 = vrcp.pop %v1725
          %v1749 = vmul.f32 1.0, %v1748
          %v1750 = vrcp.pop %v1726
          %v1751 = vmul.f32 1.0, %v1750
          %v1752 = vrcp.pop %v1727
          %v1753 = vmul.f32 1.0, %v1752
          %v1754 = vrcp.pop %v1728
          %v1755 = vmul.f32 1.0, %v1754
          %v1756 = vrcp.pop %v1729
          %v1757 = vmul.f32 1.0, %v1756
          %v1758 = vrcp.pop %v1730
          %v1759 = vmul.f32 1.0, %v1758
          %v1760 = vrcp.pop %v1731
          %v1761 = vmul.f32 1.0, %v1760
          %v1762 = vrcp.pop %v1732
          %v1763 = vmul.f32 1.0, %v1762
          %v1764 = vrcp.pop %v1733
          %v1765 = vmul.f32 1.0, %v1764
          %v1766 = vmul.f32 %v1608, %v1735
          %v1767 = vmul.f32 %v1611, %v1737
          %v1768 = vmul.f32 %v1616, %v1739
          %v1769 = vmul.f32 %v1619, %v1741
          %v1770 = vmul.f32 %v1624, %v1743
          %v1771 = vmul.f32 %v1627, %v1745
          %v1772 = vmul.f32 %v1632, %v1747
          %v1773 = vmul.f32 %v1635, %v1749
          %v1774 = vmul.f32 %v1640, %v1751
          %v1775 = vmul.f32 %v1643, %v1753
          %v1776 = vmul.f32 %v1648, %v1755
          %v1777 = vmul.f32 %v1651, %v1757
          %v1778 = vmul.f32 %v1656, %v1759
          %v1779 = vmul.f32 %v1659, %v1761
          %v1780 = vmul.f32 %v1664, %v1763
          %v1781 = vmul.f32 %v1667, %v1765
          %v1782 = vpack.c.bf16 %v1767, %v1766
          %v1783 = vpack.c.bf16 %v1769, %v1768
          %v1784 = vpack.c.bf16 %v1771, %v1770
          %v1785 = vpack.c.bf16 %v1773, %v1772
          %v1786 = vpack.c.bf16 %v1775, %v1774
          %v1787 = vpack.c.bf16 %v1777, %v1776
          %v1788 = vpack.c.bf16 %v1779, %v1778
          %v1789 = vpack.c.bf16 %v1781, %v1780
          %1790 = vst [vmem:[#allocation4] sm:$0xff] %v1782
          %1791 = vst [vmem:[#allocation4 + $0x8] sm:$0xff] %v1783
          %1792 = vst [vmem:[#allocation4 + $0x10] sm:$0xff] %v1784
          %1793 = vst [vmem:[#allocation4 + $0x18] sm:$0xff] %v1785
          %1794 = vst [vmem:[#allocation4 + $0x20] sm:$0xff] %v1786
          %1795 = vst [vmem:[#allocation4 + $0x28] sm:$0xff] %v1787
          %1796 = vst [vmem:[#allocation4 + $0x30] sm:$0xff] %v1788
          %1797 = vst [vmem:[#allocation4 + $0x38] sm:$0xff] %v1789
        $region132: #{tpu_custom_call.1} parent=99 // pred_fallthru
          _
        %v1798 = vld [vmem:[#allocation2] sm:$0xff]
        %v1799 = vld [vmem:[#allocation2 + $0x8] sm:$0xff]
        %v1800 = vld [vmem:[#allocation2 + $0x10] sm:$0xff]
        %v1801 = vld [vmem:[#allocation2 + $0x18] sm:$0xff]
        %v1802 = vld [vmem:[#allocation2 + $0x20] sm:$0xff]
        %v1803 = vld [vmem:[#allocation2 + $0x28] sm:$0xff]
        %v1804 = vld [vmem:[#allocation2 + $0x30] sm:$0xff]
        %v1805 = vld [vmem:[#allocation2 + $0x38] sm:$0xff]
        %v1806 = vld [vmem:[#allocation2 + $0x40] sm:$0xff]
        %v1807 = vld [vmem:[#allocation2 + $0x48] sm:$0xff]
        %v1808 = vld [vmem:[#allocation2 + $0x50] sm:$0xff]
        %v1809 = vld [vmem:[#allocation2 + $0x58] sm:$0xff]
        %v1810 = vld [vmem:[#allocation2 + $0x60] sm:$0xff]
        %v1811 = vld [vmem:[#allocation2 + $0x68] sm:$0xff]
        %v1812 = vld [vmem:[#allocation2 + $0x70] sm:$0xff]
        %v1813 = vld [vmem:[#allocation2 + $0x78] sm:$0xff]
        %v1814 = vld [vmem:[#allocation4] sm:$0xff]
        %v1815 = vld [vmem:[#allocation4 + $0x8] sm:$0xff]
        %v1816 = vld [vmem:[#allocation4 + $0x10] sm:$0xff]
        %v1817 = vld [vmem:[#allocation4 + $0x18] sm:$0xff]
        %v1818 = vld [vmem:[#allocation4 + $0x20] sm:$0xff]
        %v1819 = vld [vmem:[#allocation4 + $0x28] sm:$0xff]
        %v1820 = vld [vmem:[#allocation4 + $0x30] sm:$0xff]
        %v1821 = vld [vmem:[#allocation4 + $0x38] sm:$0xff]
        %v1822 = vld [vmem:[%s851] sm:$0xf]
        %v1823 = vld [vmem:[%s851 + $0x4] sm:$0xf]
        %v1824 = vld [vmem:[%s851 + $0x8] sm:$0xf]
        %v1825 = vld [vmem:[%s851 + $0xc] sm:$0xf]
        %v1826 = vld [vmem:[%s851 + $0x10] sm:$0xf]
        %v1827 = vld [vmem:[%s851 + $0x14] sm:$0xf]
        %v1828 = vld [vmem:[%s851 + $0x18] sm:$0xf]
        %v1829 = vld [vmem:[%s851 + $0x1c] sm:$0xf]
        %v1830 = vld [vmem:[%s851 + $0x20] sm:$0xf]
        %v1831 = vld [vmem:[%s851 + $0x24] sm:$0xf]
        %v1832 = vld [vmem:[%s851 + $0x28] sm:$0xf]
        %v1833 = vld [vmem:[%s851 + $0x2c] sm:$0xf]
        %v1834 = vld [vmem:[%s851 + $0x30] sm:$0xf]
        %v1835 = vld [vmem:[%s851 + $0x34] sm:$0xf]
        %v1836 = vld [vmem:[%s851 + $0x38] sm:$0xf]
        %v1837 = vld [vmem:[%s851 + $0x3c] sm:$0xf]
        %v1838 = vld [vmem:[%s854] sm:$0x1]
        %v1840 = vlaneseq
        %v1841 = vshrl.u32 %v1840, 7
        %v1842 = vsub.s32 0, %v1841
        %v1843 = vrot.slane %v1838, %v1842
        %v1861 = vunpack.c.l.b16 %v1822
        %v1862 = vunpack.c.l.b16 %v1823
        %v1863 = vunpack.c.l.b16 %v1824
        %v1864 = vunpack.c.l.b16 %v1825
        %v1865 = vunpack.c.l.b16 %v1826
        %v1866 = vunpack.c.l.b16 %v1827
        %v1867 = vunpack.c.l.b16 %v1828
        %v1868 = vunpack.c.l.b16 %v1829
        %v1869 = vunpack.c.l.b16 %v1830
        %v1870 = vunpack.c.l.b16 %v1831
        %v1871 = vunpack.c.l.b16 %v1832
        %v1872 = vunpack.c.l.b16 %v1833
        %v1873 = vunpack.c.l.b16 %v1834
        %v1874 = vunpack.c.l.b16 %v1835
        %v1875 = vunpack.c.l.b16 %v1836
        %v1876 = vunpack.c.l.b16 %v1837
        %v1877 = vpack.c.b16 %v1862, %v1861
        %v1878 = vpack.c.b16 %v1864, %v1863
        %v1879 = vpack.c.b16 %v1866, %v1865
        %v1880 = vpack.c.b16 %v1868, %v1867
        %v1881 = vpack.c.b16 %v1870, %v1869
        %v1882 = vpack.c.b16 %v1872, %v1871
        %v1883 = vpack.c.b16 %v1874, %v1873
        %v1884 = vpack.c.b16 %v1876, %v1875
        %1893 = vmatprep.subr.bf16.mxu0 0
        %1894 = vmatpush1.bf16.msra.mxu0 %v1877
        %1895 = vmatprep.subr.bf16.mxu0 0
        %1896 = vmatpush1.bf16.msra.mxu0 %v1878
        %1897 = vmatprep.subr.bf16.mxu0 0
        %1898 = vmatpush1.bf16.msra.mxu0 %v1879
        %1899 = vmatprep.subr.bf16.mxu0 0
        %1900 = vmatpush1.bf16.msra.mxu0 %v1880
        %1901 = vmatprep.subr.bf16.mxu0 0
        %1902 = vmatpush1.bf16.msra.mxu0 %v1881
        %1903 = vmatprep.subr.bf16.mxu0 0
        %1904 = vmatpush1.bf16.msra.mxu0 %v1882
        %1905 = vmatprep.subr.bf16.mxu0 0
        %1906 = vmatpush1.bf16.msra.mxu0 %v1883
        %1907 = vmatprep.subr.bf16.mxu0 0
        %1908 = vmatpush1.bf16.msra.mxu0 %v1884
        %1909 = vmatprep.subr.bf16.mxu0 0
        %1910 = vmatpush1.bf16.msra.mxu0 0
        %1911 = vmatprep.subr.bf16.mxu0 0
        %1912 = vmatpush1.bf16.msra.mxu0 0
        %1913 = vmatprep.subr.bf16.mxu0 0
        %1914 = vmatpush1.bf16.msra.mxu0 0
        %1915 = vmatprep.subr.bf16.mxu0 0
        %1916 = vmatpush1.bf16.msra.mxu0 0
        %1917 = vmatprep.subr.bf16.mxu0 0
        %1918 = vmatpush1.bf16.msra.mxu0 0
        %1919 = vmatprep.subr.bf16.mxu0 0
        %1920 = vmatpush1.bf16.msra.mxu0 0
        %1921 = vmatprep.subr.bf16.mxu0 0
        %1922 = vmatpush1.bf16.msra.mxu0 0
        %1923 = vmatprep.subr.bf16.mxu0 0
        %1924 = vmatpush1.bf16.msra.mxu0 0
        %1925 = vmatprep.mubr.bf16.mxu0 0
        %1926 = vmatmul.mubr.bf16.gmra.mrb[0].mxu0 %v1814
        %v1927 = vpop.f32.mrb[0].mxu0
        %v1928 = vadd.f32 %v1843, %v1927
        %v1929 = vpop.f32.mrb[0].mxu0
        %v1930 = vpop.f32.mrb[0].mxu0
        %v1931 = vadd.f32 %v1843, %v1930
        %v1932 = vpop.f32.mrb[0].mxu0
        %1933 = vmatprep.mubr.bf16.mxu0 0
        %1934 = vmatmul.mubr.bf16.gmra.mrb[0].mxu0 %v1815
        %v1935 = vpop.f32.mrb[0].mxu0
        %v1936 = vadd.f32 %v1843, %v1935
        %v1937 = vpop.f32.mrb[0].mxu0
        %v1938 = vpop.f32.mrb[0].mxu0
        %v1939 = vadd.f32 %v1843, %v1938
        %v1940 = vpop.f32.mrb[0].mxu0
        %1941 = vmatprep.mubr.bf16.mxu0 0
        %1942 = vmatmul.mubr.bf16.gmra.mrb[0].mxu0 %v1816
        %v1943 = vpop.f32.mrb[0].mxu0
        %v1944 = vadd.f32 %v1843, %v1943
        %v1945 = vpop.f32.mrb[0].mxu0
        %v1946 = vpop.f32.mrb[0].mxu0
        %v1947 = vadd.f32 %v1843, %v1946
        %v1948 = vpop.f32.mrb[0].mxu0
        %1949 = vmatprep.mubr.bf16.mxu0 0
        %1950 = vmatmul.mubr.bf16.gmra.mrb[0].mxu0 %v1817
        %v1951 = vpop.f32.mrb[0].mxu0
        %v1952 = vadd.f32 %v1843, %v1951
        %v1953 = vpop.f32.mrb[0].mxu0
        %v1954 = vpop.f32.mrb[0].mxu0
        %v1955 = vadd.f32 %v1843, %v1954
        %v1956 = vpop.f32.mrb[0].mxu0
        %1957 = vmatprep.mubr.bf16.mxu0 0
        %1958 = vmatmul.mubr.bf16.gmra.mrb[0].mxu0 %v1818
        %v1959 = vpop.f32.mrb[0].mxu0
        %v1960 = vadd.f32 %v1843, %v1959
        %v1961 = vpop.f32.mrb[0].mxu0
        %v1962 = vpop.f32.mrb[0].mxu0
        %v1963 = vadd.f32 %v1843, %v1962
        %v1964 = vpop.f32.mrb[0].mxu0
        %1965 = vmatprep.mubr.bf16.mxu0 0
        %1966 = vmatmul.mubr.bf16.gmra.mrb[0].mxu0 %v1819
        %v1967 = vpop.f32.mrb[0].mxu0
        %v1968 = vadd.f32 %v1843, %v1967
        %v1969 = vpop.f32.mrb[0].mxu0
        %v1970 = vpop.f32.mrb[0].mxu0
        %v1971 = vadd.f32 %v1843, %v1970
        %v1972 = vpop.f32.mrb[0].mxu0
        %1973 = vmatprep.mubr.bf16.mxu0 0
        %1974 = vmatmul.mubr.bf16.gmra.mrb[0].mxu0 %v1820
        %v1975 = vpop.f32.mrb[0].mxu0
        %v1976 = vadd.f32 %v1843, %v1975
        %v1977 = vpop.f32.mrb[0].mxu0
        %v1978 = vpop.f32.mrb[0].mxu0
        %v1979 = vadd.f32 %v1843, %v1978
        %v1980 = vpop.f32.mrb[0].mxu0
        %1981 = vmatprep.mubr.bf16.mxu0 0
        %1982 = vmatmul.mubr.bf16.gmra.mrb[0].mxu0 %v1821
        %v1983 = vpop.f32.mrb[0].mxu0
        %v1984 = vadd.f32 %v1843, %v1983
        %v1985 = vpop.f32.mrb[0].mxu0
        %v1986 = vpop.f32.mrb[0].mxu0
        %v1987 = vadd.f32 %v1843, %v1986
        %v1988 = vpop.f32.mrb[0].mxu0
        %1989 = vdwg.mxu0
        %v1990 = vadd.f32 %v1798, %v1928
        %v1991 = vadd.f32 %v1799, %v1931
        %v1992 = vadd.f32 %v1800, %v1936
        %v1993 = vadd.f32 %v1801, %v1939
        %v1994 = vadd.f32 %v1802, %v1944
        %v1995 = vadd.f32 %v1803, %v1947
        %v1996 = vadd.f32 %v1804, %v1952
        %v1997 = vadd.f32 %v1805, %v1955
        %v1998 = vadd.f32 %v1806, %v1960
        %v1999 = vadd.f32 %v1807, %v1963
        %v2000 = vadd.f32 %v1808, %v1968
        %v2001 = vadd.f32 %v1809, %v1971
        %v2002 = vadd.f32 %v1810, %v1976
        %v2003 = vadd.f32 %v1811, %v1979
        %v2004 = vadd.f32 %v1812, %v1984
        %v2005 = vadd.f32 %v1813, %v1987
        %v2006 = vpack.c.bf16 %v1991, %v1990
        %v2007 = vpack.c.bf16 %v1993, %v1992
        %v2008 = vpack.c.bf16 %v1995, %v1994
        %v2009 = vpack.c.bf16 %v1997, %v1996
        %v2010 = vpack.c.bf16 %v1999, %v1998
        %v2011 = vpack.c.bf16 %v2001, %v2000
        %v2012 = vpack.c.bf16 %v2003, %v2002
        %v2013 = vpack.c.bf16 %v2005, %v2004
        %v2014 = vld [vmem:[%s1] sm:$0xf]
        %v2015 = vld [vmem:[%s1 + $0x4] sm:$0xf]
        %v2016 = vld [vmem:[%s1 + $0x8] sm:$0xf]
        %v2017 = vld [vmem:[%s1 + $0xc] sm:$0xf]
        %v2018 = vld [vmem:[%s1 + $0x10] sm:$0xf]
        %v2019 = vld [vmem:[%s1 + $0x14] sm:$0xf]
        %v2020 = vld [vmem:[%s1 + $0x18] sm:$0xf]
        %v2021 = vld [vmem:[%s1 + $0x1c] sm:$0xf]
        %v2022 = vld [vmem:[%s1 + $0x20] sm:$0xf]
        %v2023 = vld [vmem:[%s1 + $0x24] sm:$0xf]
        %v2024 = vld [vmem:[%s1 + $0x28] sm:$0xf]
        %v2025 = vld [vmem:[%s1 + $0x2c] sm:$0xf]
        %v2026 = vld [vmem:[%s1 + $0x30] sm:$0xf]
        %v2027 = vld [vmem:[%s1 + $0x34] sm:$0xf]
        %v2028 = vld [vmem:[%s1 + $0x38] sm:$0xf]
        %v2029 = vld [vmem:[%s1 + $0x3c] sm:$0xf]
        %v2030 = vld [vmem:[%s859] sm:$0xf]
        %v2031 = vld [vmem:[%s859 + $0x4] sm:$0xf]
        %v2032 = vld [vmem:[%s859 + $0x8] sm:$0xf]
        %v2033 = vld [vmem:[%s859 + $0xc] sm:$0xf]
        %v2034 = vld [vmem:[%s859 + $0x10] sm:$0xf]
        %v2035 = vld [vmem:[%s859 + $0x14] sm:$0xf]
        %v2036 = vld [vmem:[%s859 + $0x18] sm:$0xf]
        %v2037 = vld [vmem:[%s859 + $0x1c] sm:$0xf]
        %v2038 = vld [vmem:[%s864] sm:$0xf]
        %v2039 = vld [vmem:[%s864 + $0x4] sm:$0xf]
        %v2056 = vunpack.c.l.b16 %v2014
        %v2057 = vunpack.c.l.b16 %v2015
        %v2058 = vunpack.c.l.b16 %v2016
        %v2059 = vunpack.c.l.b16 %v2017
        %v2060 = vunpack.c.l.b16 %v2018
        %v2061 = vunpack.c.l.b16 %v2019
        %v2062 = vunpack.c.l.b16 %v2020
        %v2063 = vunpack.c.l.b16 %v2021
        %v2064 = vunpack.c.l.b16 %v2022
        %v2065 = vunpack.c.l.b16 %v2023
        %v2066 = vunpack.c.l.b16 %v2024
        %v2067 = vunpack.c.l.b16 %v2025
        %v2068 = vunpack.c.l.b16 %v2026
        %v2069 = vunpack.c.l.b16 %v2027
        %v2070 = vunpack.c.l.b16 %v2028
        %v2071 = vunpack.c.l.b16 %v2029
        %v2072 = vpack.c.b16 %v2057, %v2056
        %v2073 = vpack.c.b16 %v2059, %v2058
        %v2074 = vpack.c.b16 %v2061, %v2060
        %v2075 = vpack.c.b16 %v2063, %v2062
        %v2076 = vpack.c.b16 %v2065, %v2064
        %v2077 = vpack.c.b16 %v2067, %v2066
        %v2078 = vpack.c.b16 %v2069, %v2068
        %v2079 = vpack.c.b16 %v2071, %v2070
        %v2082 = vunpack.c.l.b16 %v2038
        %v2083 = vunpack.c.l.b16 %v2039
        %v2084 = vpack.c.b16 %v2083, %v2082
        %vm2086 = vcmask 130048
        %v2088 = vsel %vm2086, %v2072, 0
        %v2091 = vsel %vm2086, %v2073, 0
        %v2094 = vsel %vm2086, %v2074, 0
        %v2097 = vsel %vm2086, %v2075, 0
        %v2100 = vsel %vm2086, %v2076, 0
        %v2103 = vsel %vm2086, %v2077, 0
        %v2106 = vsel %vm2086, %v2078, 0
        %v2109 = vsel %vm2086, %v2079, 0
        %2111 = vmatprep.subr.bf16.mxu0 0
        %2112 = vmatpush1.bf16.msra.mxu0 %v2084
        %2113 = vmatprep.subr.bf16.mxu0 0
        %2114 = vmatpush1.bf16.msra.mxu0 0
        %2115 = vmatprep.subr.bf16.mxu0 0
        %2116 = vmatpush1.bf16.msra.mxu0 0
        %2117 = vmatprep.subr.bf16.mxu0 0
        %2118 = vmatpush1.bf16.msra.mxu0 0
        %2119 = vmatprep.subr.bf16.mxu0 0
        %2120 = vmatpush1.bf16.msra.mxu0 0
        %2121 = vmatprep.subr.bf16.mxu0 0
        %2122 = vmatpush1.bf16.msra.mxu0 0
        %2123 = vmatprep.subr.bf16.mxu0 0
        %2124 = vmatpush1.bf16.msra.mxu0 0
        %2125 = vmatprep.subr.bf16.mxu0 0
        %2126 = vmatpush1.bf16.msra.mxu0 0
        %2127 = vmatprep.subr.bf16.mxu0 0
        %2128 = vmatpush1.bf16.msra.mxu0 0
        %2129 = vmatprep.subr.bf16.mxu0 0
        %2130 = vmatpush1.bf16.msra.mxu0 0
        %2131 = vmatprep.subr.bf16.mxu0 0
        %2132 = vmatpush1.bf16.msra.mxu0 0
        %2133 = vmatprep.subr.bf16.mxu0 0
        %2134 = vmatpush1.bf16.msra.mxu0 0
        %2135 = vmatprep.subr.bf16.mxu0 0
        %2136 = vmatpush1.bf16.msra.mxu0 0
        %2137 = vmatprep.subr.bf16.mxu0 0
        %2138 = vmatpush1.bf16.msra.mxu0 0
        %2139 = vmatprep.subr.bf16.mxu0 0
        %2140 = vmatpush1.bf16.msra.mxu0 0
        %2141 = vmatprep.subr.bf16.mxu0 0
        %2142 = vmatpush1.bf16.msra.mxu0 0
        %2143 = vmatprep.mubr.bf16.mxu0 0
        %2144 = vmatmul.mubr.bf16.gmra.mrb[0].mxu0 %v2088
        %v2145 = vpop.f32.mrb[0].mxu0
        %v2146 = vadd.f32 0.0, %v2145
        %v2147 = vpop.f32.mrb[0].mxu0
        %v2148 = vpop.f32.mrb[0].mxu0
        %v2149 = vadd.f32 0.0, %v2148
        %v2150 = vpop.f32.mrb[0].mxu0
        %2151 = vmatprep.mubr.bf16.mxu0 0
        %2152 = vmatmul.mubr.bf16.gmra.mrb[0].mxu0 %v2091
        %v2153 = vpop.f32.mrb[0].mxu0
        %v2154 = vadd.f32 0.0, %v2153
        %v2155 = vpop.f32.mrb[0].mxu0
        %v2156 = vpop.f32.mrb[0].mxu0
        %v2157 = vadd.f32 0.0, %v2156
        %v2158 = vpop.f32.mrb[0].mxu0
        %2159 = vmatprep.mubr.bf16.mxu0 0
        %2160 = vmatmul.mubr.bf16.gmra.mrb[0].mxu0 %v2094
        %v2161 = vpop.f32.mrb[0].mxu0
        %v2162 = vadd.f32 0.0, %v2161
        %v2163 = vpop.f32.mrb[0].mxu0
        %v2164 = vpop.f32.mrb[0].mxu0
        %v2165 = vadd.f32 0.0, %v2164
        %v2166 = vpop.f32.mrb[0].mxu0
        %2167 = vmatprep.mubr.bf16.mxu0 0
        %2168 = vmatmul.mubr.bf16.gmra.mrb[0].mxu0 %v2097
        %v2169 = vpop.f32.mrb[0].mxu0
        %v2170 = vadd.f32 0.0, %v2169
        %v2171 = vpop.f32.mrb[0].mxu0
        %v2172 = vpop.f32.mrb[0].mxu0
        %v2173 = vadd.f32 0.0, %v2172
        %v2174 = vpop.f32.mrb[0].mxu0
        %2175 = vmatprep.mubr.bf16.mxu0 0
        %2176 = vmatmul.mubr.bf16.gmra.mrb[0].mxu0 %v2100
        %v2177 = vpop.f32.mrb[0].mxu0
        %v2178 = vadd.f32 0.0, %v2177
        %v2179 = vpop.f32.mrb[0].mxu0
        %v2180 = vpop.f32.mrb[0].mxu0
        %v2181 = vadd.f32 0.0, %v2180
        %v2182 = vpop.f32.mrb[0].mxu0
        %2183 = vmatprep.mubr.bf16.mxu0 0
        %2184 = vmatmul.mubr.bf16.gmra.mrb[0].mxu0 %v2103
        %v2185 = vpop.f32.mrb[0].mxu0
        %v2186 = vadd.f32 0.0, %v2185
        %v2187 = vpop.f32.mrb[0].mxu0
        %v2188 = vpop.f32.mrb[0].mxu0
        %v2189 = vadd.f32 0.0, %v2188
        %v2190 = vpop.f32.mrb[0].mxu0
        %2191 = vmatprep.mubr.bf16.mxu0 0
        %2192 = vmatmul.mubr.bf16.gmra.mrb[0].mxu0 %v2106
        %v2193 = vpop.f32.mrb[0].mxu0
        %v2194 = vadd.f32 0.0, %v2193
        %v2195 = vpop.f32.mrb[0].mxu0
        %v2196 = vpop.f32.mrb[0].mxu0
        %v2197 = vadd.f32 0.0, %v2196
        %v2198 = vpop.f32.mrb[0].mxu0
        %2199 = vmatprep.mubr.bf16.mxu0 0
        %2200 = vmatmul.mubr.bf16.gmra.mrb[0].mxu0 %v2109
        %v2201 = vpop.f32.mrb[0].mxu0
        %v2202 = vadd.f32 0.0, %v2201
        %v2203 = vpop.f32.mrb[0].mxu0
        %v2204 = vpop.f32.mrb[0].mxu0
        %v2205 = vadd.f32 0.0, %v2204
        %v2206 = vpop.f32.mrb[0].mxu0
        %2207 = vdwg.mxu0
        %v2216 = vunpack.c.l.b16 %v2030
        %v2217 = vunpack.c.l.b16 %v2031
        %v2218 = vunpack.c.l.b16 %v2032
        %v2219 = vunpack.c.l.b16 %v2033
        %v2220 = vunpack.c.l.b16 %v2034
        %v2221 = vunpack.c.l.b16 %v2035
        %v2222 = vunpack.c.l.b16 %v2036
        %v2223 = vunpack.c.l.b16 %v2037
        %v2224 = vpack.c.b16 %v2217, %v2216
        %v2225 = vpack.c.b16 %v2219, %v2218
        %v2226 = vpack.c.b16 %v2221, %v2220
        %v2227 = vpack.c.b16 %v2223, %v2222
        %vm2232 = vcmask 523264
        %v2234 = vsel %vm2232, %v2006, 0
        %v2237 = vsel %vm2232, %v2007, 0
        %v2240 = vsel %vm2232, %v2008, 0
        %v2243 = vsel %vm2232, %v2009, 0
        %v2246 = vsel %vm2232, %v2010, 0
        %v2249 = vsel %vm2232, %v2011, 0
        %v2252 = vsel %vm2232, %v2012, 0
        %v2255 = vsel %vm2232, %v2013, 0
        %2257 = vmatprep.subr.bf16.mxu0 0
        %2258 = vmatpush1.bf16.msra.mxu0 %v2224
        %2259 = vmatprep.subr.bf16.mxu0 0
        %2260 = vmatpush1.bf16.msra.mxu0 %v2225
        %2261 = vmatprep.subr.bf16.mxu0 0
        %2262 = vmatpush1.bf16.msra.mxu0 %v2226
        %2263 = vmatprep.subr.bf16.mxu0 0
        %2264 = vmatpush1.bf16.msra.mxu0 %v2227
        %2265 = vmatprep.subr.bf16.mxu0 0
        %2266 = vmatpush1.bf16.msra.mxu0 0
        %2267 = vmatprep.subr.bf16.mxu0 0
        %2268 = vmatpush1.bf16.msra.mxu0 0
        %2269 = vmatprep.subr.bf16.mxu0 0
        %2270 = vmatpush1.bf16.msra.mxu0 0
        %2271 = vmatprep.subr.bf16.mxu0 0
        %2272 = vmatpush1.bf16.msra.mxu0 0
        %2273 = vmatprep.subr.bf16.mxu0 0
        %2274 = vmatpush1.bf16.msra.mxu0 0
        %2275 = vmatprep.subr.bf16.mxu0 0
        %2276 = vmatpush1.bf16.msra.mxu0 0
        %2277 = vmatprep.subr.bf16.mxu0 0
        %2278 = vmatpush1.bf16.msra.mxu0 0
        %2279 = vmatprep.subr.bf16.mxu0 0
        %2280 = vmatpush1.bf16.msra.mxu0 0
        %2281 = vmatprep.subr.bf16.mxu0 0
        %2282 = vmatpush1.bf16.msra.mxu0 0
        %2283 = vmatprep.subr.bf16.mxu0 0
        %2284 = vmatpush1.bf16.msra.mxu0 0
        %2285 = vmatprep.subr.bf16.mxu0 0
        %2286 = vmatpush1.bf16.msra.mxu0 0
        %2287 = vmatprep.subr.bf16.mxu0 0
        %2288 = vmatpush1.bf16.msra.mxu0 0
        %2289 = vmatprep.mubr.bf16.mxu0 0
        %2290 = vmatmul.mubr.bf16.gmra.mrb[0].mxu0 %v2234
        %v2291 = vpop.f32.mrb[0].mxu0
        %v2292 = vadd.f32 %v2146, %v2291
        %v2293 = vpop.f32.mrb[0].mxu0
        %v2294 = vpop.f32.mrb[0].mxu0
        %v2295 = vadd.f32 %v2149, %v2294
        %v2296 = vpop.f32.mrb[0].mxu0
        %2297 = vmatprep.mubr.bf16.mxu0 0
        %2298 = vmatmul.mubr.bf16.gmra.mrb[0].mxu0 %v2237
        %v2299 = vpop.f32.mrb[0].mxu0
        %v2300 = vadd.f32 %v2154, %v2299
        %v2301 = vpop.f32.mrb[0].mxu0
        %v2302 = vpop.f32.mrb[0].mxu0
        %v2303 = vadd.f32 %v2157, %v2302
        %v2304 = vpop.f32.mrb[0].mxu0
        %2305 = vmatprep.mubr.bf16.mxu0 0
        %2306 = vmatmul.mubr.bf16.gmra.mrb[0].mxu0 %v2240
        %v2307 = vpop.f32.mrb[0].mxu0
        %v2308 = vadd.f32 %v2162, %v2307
        %v2309 = vpop.f32.mrb[0].mxu0
        %v2310 = vpop.f32.mrb[0].mxu0
        %v2311 = vadd.f32 %v2165, %v2310
        %v2312 = vpop.f32.mrb[0].mxu0
        %2313 = vmatprep.mubr.bf16.mxu0 0
        %2314 = vmatmul.mubr.bf16.gmra.mrb[0].mxu0 %v2243
        %v2315 = vpop.f32.mrb[0].mxu0
        %v2316 = vadd.f32 %v2170, %v2315
        %v2317 = vpop.f32.mrb[0].mxu0
        %v2318 = vpop.f32.mrb[0].mxu0
        %v2319 = vadd.f32 %v2173, %v2318
        %v2320 = vpop.f32.mrb[0].mxu0
        %2321 = vmatprep.mubr.bf16.mxu0 0
        %2322 = vmatmul.mubr.bf16.gmra.mrb[0].mxu0 %v2246
        %v2323 = vpop.f32.mrb[0].mxu0
        %v2324 = vadd.f32 %v2178, %v2323
        %v2325 = vpop.f32.mrb[0].mxu0
        %v2326 = vpop.f32.mrb[0].mxu0
        %v2327 = vadd.f32 %v2181, %v2326
        %v2328 = vpop.f32.mrb[0].mxu0
        %2329 = vmatprep.mubr.bf16.mxu0 0
        %2330 = vmatmul.mubr.bf16.gmra.mrb[0].mxu0 %v2249
        %v2331 = vpop.f32.mrb[0].mxu0
        %v2332 = vadd.f32 %v2186, %v2331
        %v2333 = vpop.f32.mrb[0].mxu0
        %v2334 = vpop.f32.mrb[0].mxu0
        %v2335 = vadd.f32 %v2189, %v2334
        %v2336 = vpop.f32.mrb[0].mxu0
        %2337 = vmatprep.mubr.bf16.mxu0 0
        %2338 = vmatmul.mubr.bf16.gmra.mrb[0].mxu0 %v2252
        %v2339 = vpop.f32.mrb[0].mxu0
        %v2340 = vadd.f32 %v2194, %v2339
        %v2341 = vpop.f32.mrb[0].mxu0
        %v2342 = vpop.f32.mrb[0].mxu0
        %v2343 = vadd.f32 %v2197, %v2342
        %v2344 = vpop.f32.mrb[0].mxu0
        %2345 = vmatprep.mubr.bf16.mxu0 0
        %2346 = vmatmul.mubr.bf16.gmra.mrb[0].mxu0 %v2255
        %v2347 = vpop.f32.mrb[0].mxu0
        %v2348 = vadd.f32 %v2202, %v2347
        %v2349 = vpop.f32.mrb[0].mxu0
        %v2350 = vpop.f32.mrb[0].mxu0
        %v2351 = vadd.f32 %v2205, %v2350
        %v2352 = vpop.f32.mrb[0].mxu0
        %2353 = vdwg.mxu0
        %v2354 = vld [vmem:[%s868] sm:$0x1]
        %v2356 = vlaneseq
        %v2357 = vshrl.u32 %v2356, 7
        %v2358 = vsub.s32 0, %v2357
        %v2359 = vrot.slane %v2354, %v2358
        %v2361 = vadd.f32 %v2292, %v2359
        %v2362 = vadd.f32 %v2295, %v2359
        %v2363 = vadd.f32 %v2300, %v2359
        %v2364 = vadd.f32 %v2303, %v2359
        %v2365 = vadd.f32 %v2308, %v2359
        %v2366 = vadd.f32 %v2311, %v2359
        %v2367 = vadd.f32 %v2316, %v2359
        %v2368 = vadd.f32 %v2319, %v2359
        %v2369 = vadd.f32 %v2324, %v2359
        %v2370 = vadd.f32 %v2327, %v2359
        %v2371 = vadd.f32 %v2332, %v2359
        %v2372 = vadd.f32 %v2335, %v2359
        %v2373 = vadd.f32 %v2340, %v2359
        %v2374 = vadd.f32 %v2343, %v2359
        %v2375 = vadd.f32 %v2348, %v2359
        %v2376 = vadd.f32 %v2351, %v2359
        %s2377 = scalar_lea.vmem %s859, 32
        %v2378 = vld [vmem:[%s2377] sm:$0xf]
        %v2379 = vld [vmem:[%s2377 + $0x4] sm:$0xf]
        %v2380 = vld [vmem:[%s2377 + $0x8] sm:$0xf]
        %v2381 = vld [vmem:[%s2377 + $0xc] sm:$0xf]
        %v2382 = vld [vmem:[%s2377 + $0x10] sm:$0xf]
        %v2383 = vld [vmem:[%s2377 + $0x14] sm:$0xf]
        %v2384 = vld [vmem:[%s2377 + $0x18] sm:$0xf]
        %v2385 = vld [vmem:[%s2377 + $0x1c] sm:$0xf]
        %s2386 = scalar_lea.vmem %s864, 8
        %v2387 = vld [vmem:[%s2386] sm:$0xf]
        %v2388 = vld [vmem:[%s2386 + $0x4] sm:$0xf]
        %v2391 = vunpack.c.l.b16 %v2387
        %v2392 = vunpack.c.l.b16 %v2388
        %v2393 = vpack.c.b16 %v2392, %v2391
        %2395 = vmatprep.subr.bf16.mxu0 0
        %2396 = vmatpush1.bf16.msra.mxu0 %v2393
        %2397 = vmatprep.subr.bf16.mxu0 0
        %2398 = vmatpush1.bf16.msra.mxu0 0
        %2399 = vmatprep.subr.bf16.mxu0 0
        %2400 = vmatpush1.bf16.msra.mxu0 0
        %2401 = vmatprep.subr.bf16.mxu0 0
        %2402 = vmatpush1.bf16.msra.mxu0 0
        %2403 = vmatprep.subr.bf16.mxu0 0
        %2404 = vmatpush1.bf16.msra.mxu0 0
        %2405 = vmatprep.subr.bf16.mxu0 0
        %2406 = vmatpush1.bf16.msra.mxu0 0
        %2407 = vmatprep.subr.bf16.mxu0 0
        %2408 = vmatpush1.bf16.msra.mxu0 0
        %2409 = vmatprep.subr.bf16.mxu0 0
        %2410 = vmatpush1.bf16.msra.mxu0 0
        %2411 = vmatprep.subr.bf16.mxu0 0
        %2412 = vmatpush1.bf16.msra.mxu0 0
        %2413 = vmatprep.subr.bf16.mxu0 0
        %2414 = vmatpush1.bf16.msra.mxu0 0
        %2415 = vmatprep.subr.bf16.mxu0 0
        %2416 = vmatpush1.bf16.msra.mxu0 0
        %2417 = vmatprep.subr.bf16.mxu0 0
        %2418 = vmatpush1.bf16.msra.mxu0 0
        %2419 = vmatprep.subr.bf16.mxu0 0
        %2420 = vmatpush1.bf16.msra.mxu0 0
        %2421 = vmatprep.subr.bf16.mxu0 0
        %2422 = vmatpush1.bf16.msra.mxu0 0
        %2423 = vmatprep.subr.bf16.mxu0 0
        %2424 = vmatpush1.bf16.msra.mxu0 0
        %2425 = vmatprep.subr.bf16.mxu0 0
        %2426 = vmatpush1.bf16.msra.mxu0 0
        %2427 = vmatprep.mubr.bf16.mxu0 0
        %2428 = vmatmul.mubr.bf16.gmra.mrb[0].mxu0 %v2088
        %v2429 = vpop.f32.mrb[0].mxu0
        %v2430 = vadd.f32 0.0, %v2429
        %v2431 = vpop.f32.mrb[0].mxu0
        %v2432 = vpop.f32.mrb[0].mxu0
        %v2433 = vadd.f32 0.0, %v2432
        %v2434 = vpop.f32.mrb[0].mxu0
        %2435 = vmatprep.mubr.bf16.mxu0 0
        %2436 = vmatmul.mubr.bf16.gmra.mrb[0].mxu0 %v2091
        %v2437 = vpop.f32.mrb[0].mxu0
        %v2438 = vadd.f32 0.0, %v2437
        %v2439 = vpop.f32.mrb[0].mxu0
        %v2440 = vpop.f32.mrb[0].mxu0
        %v2441 = vadd.f32 0.0, %v2440
        %v2442 = vpop.f32.mrb[0].mxu0
        %2443 = vmatprep.mubr.bf16.mxu0 0
        %2444 = vmatmul.mubr.bf16.gmra.mrb[0].mxu0 %v2094
        %v2445 = vpop.f32.mrb[0].mxu0
        %v2446 = vadd.f32 0.0, %v2445
        %v2447 = vpop.f32.mrb[0].mxu0
        %v2448 = vpop.f32.mrb[0].mxu0
        %v2449 = vadd.f32 0.0, %v2448
        %v2450 = vpop.f32.mrb[0].mxu0
        %2451 = vmatprep.mubr.bf16.mxu0 0
        %2452 = vmatmul.mubr.bf16.gmra.mrb[0].mxu0 %v2097
        %v2453 = vpop.f32.mrb[0].mxu0
        %v2454 = vadd.f32 0.0, %v2453
        %v2455 = vpop.f32.mrb[0].mxu0
        %v2456 = vpop.f32.mrb[0].mxu0
        %v2457 = vadd.f32 0.0, %v2456
        %v2458 = vpop.f32.mrb[0].mxu0
        %2459 = vmatprep.mubr.bf16.mxu0 0
        %2460 = vmatmul.mubr.bf16.gmra.mrb[0].mxu0 %v2100
        %v2461 = vpop.f32.mrb[0].mxu0
        %v2462 = vadd.f32 0.0, %v2461
        %v2463 = vpop.f32.mrb[0].mxu0
        %v2464 = vpop.f32.mrb[0].mxu0
        %v2465 = vadd.f32 0.0, %v2464
        %v2466 = vpop.f32.mrb[0].mxu0
        %2467 = vmatprep.mubr.bf16.mxu0 0
        %2468 = vmatmul.mubr.bf16.gmra.mrb[0].mxu0 %v2103
        %v2469 = vpop.f32.mrb[0].mxu0
        %v2470 = vadd.f32 0.0, %v2469
        %v2471 = vpop.f32.mrb[0].mxu0
        %v2472 = vpop.f32.mrb[0].mxu0
        %v2473 = vadd.f32 0.0, %v2472
        %v2474 = vpop.f32.mrb[0].mxu0
        %2475 = vmatprep.mubr.bf16.mxu0 0
        %2476 = vmatmul.mubr.bf16.gmra.mrb[0].mxu0 %v2106
        %v2477 = vpop.f32.mrb[0].mxu0
        %v2478 = vadd.f32 0.0, %v2477
        %v2479 = vpop.f32.mrb[0].mxu0
        %v2480 = vpop.f32.mrb[0].mxu0
        %v2481 = vadd.f32 0.0, %v2480
        %v2482 = vpop.f32.mrb[0].mxu0
        %2483 = vmatprep.mubr.bf16.mxu0 0
        %2484 = vmatmul.mubr.bf16.gmra.mrb[0].mxu0 %v2109
        %v2485 = vpop.f32.mrb[0].mxu0
        %v2486 = vadd.f32 0.0, %v2485
        %v2487 = vpop.f32.mrb[0].mxu0
        %v2488 = vpop.f32.mrb[0].mxu0
        %v2489 = vadd.f32 0.0, %v2488
        %v2490 = vpop.f32.mrb[0].mxu0
        %2491 = vdwg.mxu0
        %v2500 = vunpack.c.l.b16 %v2378
        %v2501 = vunpack.c.l.b16 %v2379
        %v2502 = vunpack.c.l.b16 %v2380
        %v2503 = vunpack.c.l.b16 %v2381
        %v2504 = vunpack.c.l.b16 %v2382
        %v2505 = vunpack.c.l.b16 %v2383
        %v2506 = vunpack.c.l.b16 %v2384
        %v2507 = vunpack.c.l.b16 %v2385
        %v2508 = vpack.c.b16 %v2501, %v2500
        %v2509 = vpack.c.b16 %v2503, %v2502
        %v2510 = vpack.c.b16 %v2505, %v2504
        %v2511 = vpack.c.b16 %v2507, %v2506
        %2516 = vmatprep.subr.bf16.mxu0 0
        %2517 = vmatpush1.bf16.msra.mxu0 %v2508
        %2518 = vmatprep.subr.bf16.mxu0 0
        %2519 = vmatpush1.bf16.msra.mxu0 %v2509
        %2520 = vmatprep.subr.bf16.mxu0 0
        %2521 = vmatpush1.bf16.msra.mxu0 %v2510
        %2522 = vmatprep.subr.bf16.mxu0 0
        %2523 = vmatpush1.bf16.msra.mxu0 %v2511
        %2524 = vmatprep.subr.bf16.mxu0 0
        %2525 = vmatpush1.bf16.msra.mxu0 0
        %2526 = vmatprep.subr.bf16.mxu0 0
        %2527 = vmatpush1.bf16.msra.mxu0 0
        %2528 = vmatprep.subr.bf16.mxu0 0
        %2529 = vmatpush1.bf16.msra.mxu0 0
        %2530 = vmatprep.subr.bf16.mxu0 0
        %2531 = vmatpush1.bf16.msra.mxu0 0
        %2532 = vmatprep.subr.bf16.mxu0 0
        %2533 = vmatpush1.bf16.msra.mxu0 0
        %2534 = vmatprep.subr.bf16.mxu0 0
        %2535 = vmatpush1.bf16.msra.mxu0 0
        %2536 = vmatprep.subr.bf16.mxu0 0
        %2537 = vmatpush1.bf16.msra.mxu0 0
        %2538 = vmatprep.subr.bf16.mxu0 0
        %2539 = vmatpush1.bf16.msra.mxu0 0
        %2540 = vmatprep.subr.bf16.mxu0 0
        %2541 = vmatpush1.bf16.msra.mxu0 0
        %2542 = vmatprep.subr.bf16.mxu0 0
        %2543 = vmatpush1.bf16.msra.mxu0 0
        %2544 = vmatprep.subr.bf16.mxu0 0
        %2545 = vmatpush1.bf16.msra.mxu0 0
        %2546 = vmatprep.subr.bf16.mxu0 0
        %2547 = vmatpush1.bf16.msra.mxu0 0
        %2548 = vmatprep.mubr.bf16.mxu0 0
        %2549 = vmatmul.mubr.bf16.gmra.mrb[0].mxu0 %v2234
        %v2550 = vpop.f32.mrb[0].mxu0
        %v2551 = vadd.f32 %v2430, %v2550
        %v2552 = vpop.f32.mrb[0].mxu0
        %v2553 = vpop.f32.mrb[0].mxu0
        %v2554 = vadd.f32 %v2433, %v2553
        %v2555 = vpop.f32.mrb[0].mxu0
        %2556 = vmatprep.mubr.bf16.mxu0 0
        %2557 = vmatmul.mubr.bf16.gmra.mrb[0].mxu0 %v2237
        %v2558 = vpop.f32.mrb[0].mxu0
        %v2559 = vadd.f32 %v2438, %v2558
        %v2560 = vpop.f32.mrb[0].mxu0
        %v2561 = vpop.f32.mrb[0].mxu0
        %v2562 = vadd.f32 %v2441, %v2561
        %v2563 = vpop.f32.mrb[0].mxu0
        %2564 = vmatprep.mubr.bf16.mxu0 0
        %2565 = vmatmul.mubr.bf16.gmra.mrb[0].mxu0 %v2240
        %v2566 = vpop.f32.mrb[0].mxu0
        %v2567 = vadd.f32 %v2446, %v2566
        %v2568 = vpop.f32.mrb[0].mxu0
        %v2569 = vpop.f32.mrb[0].mxu0
        %v2570 = vadd.f32 %v2449, %v2569
        %v2571 = vpop.f32.mrb[0].mxu0
        %2572 = vmatprep.mubr.bf16.mxu0 0
        %2573 = vmatmul.mubr.bf16.gmra.mrb[0].mxu0 %v2243
        %v2574 = vpop.f32.mrb[0].mxu0
        %v2575 = vadd.f32 %v2454, %v2574
        %v2576 = vpop.f32.mrb[0].mxu0
        %v2577 = vpop.f32.mrb[0].mxu0
        %v2578 = vadd.f32 %v2457, %v2577
        %v2579 = vpop.f32.mrb[0].mxu0
        %2580 = vmatprep.mubr.bf16.mxu0 0
        %2581 = vmatmul.mubr.bf16.gmra.mrb[0].mxu0 %v2246
        %v2582 = vpop.f32.mrb[0].mxu0
        %v2583 = vadd.f32 %v2462, %v2582
        %v2584 = vpop.f32.mrb[0].mxu0
        %v2585 = vpop.f32.mrb[0].mxu0
        %v2586 = vadd.f32 %v2465, %v2585
        %v2587 = vpop.f32.mrb[0].mxu0
        %2588 = vmatprep.mubr.bf16.mxu0 0
        %2589 = vmatmul.mubr.bf16.gmra.mrb[0].mxu0 %v2249
        %v2590 = vpop.f32.mrb[0].mxu0
        %v2591 = vadd.f32 %v2470, %v2590
        %v2592 = vpop.f32.mrb[0].mxu0
        %v2593 = vpop.f32.mrb[0].mxu0
        %v2594 = vadd.f32 %v2473, %v2593
        %v2595 = vpop.f32.mrb[0].mxu0
        %2596 = vmatprep.mubr.bf16.mxu0 0
        %2597 = vmatmul.mubr.bf16.gmra.mrb[0].mxu0 %v2252
        %v2598 = vpop.f32.mrb[0].mxu0
        %v2599 = vadd.f32 %v2478, %v2598
        %v2600 = vpop.f32.mrb[0].mxu0
        %v2601 = vpop.f32.mrb[0].mxu0
        %v2602 = vadd.f32 %v2481, %v2601
        %v2603 = vpop.f32.mrb[0].mxu0
        %2604 = vmatprep.mubr.bf16.mxu0 0
        %2605 = vmatmul.mubr.bf16.gmra.mrb[0].mxu0 %v2255
        %v2606 = vpop.f32.mrb[0].mxu0
        %v2607 = vadd.f32 %v2486, %v2606
        %v2608 = vpop.f32.mrb[0].mxu0
        %v2609 = vpop.f32.mrb[0].mxu0
        %v2610 = vadd.f32 %v2489, %v2609
        %v2611 = vpop.f32.mrb[0].mxu0
        %2612 = vdwg.mxu0
        %s2613 = scalar_lea.vmem %s868, 1
        %v2614 = vld [vmem:[%s2613] sm:$0x1]
        %v2616 = vlaneseq
        %v2617 = vshrl.u32 %v2616, 7
        %v2618 = vsub.s32 0, %v2617
        %v2619 = vrot.slane %v2614, %v2618
        %v2621 = vadd.f32 %v2551, %v2619
        %v2622 = vadd.f32 %v2554, %v2619
        %v2623 = vadd.f32 %v2559, %v2619
        %v2624 = vadd.f32 %v2562, %v2619
        %v2625 = vadd.f32 %v2567, %v2619
        %v2626 = vadd.f32 %v2570, %v2619
        %v2627 = vadd.f32 %v2575, %v2619
        %v2628 = vadd.f32 %v2578, %v2619
        %v2629 = vadd.f32 %v2583, %v2619
        %v2630 = vadd.f32 %v2586, %v2619
        %v2631 = vadd.f32 %v2591, %v2619
        %v2632 = vadd.f32 %v2594, %v2619
        %v2633 = vadd.f32 %v2599, %v2619
        %v2634 = vadd.f32 %v2602, %v2619
        %v2635 = vadd.f32 %v2607, %v2619
        %v2636 = vadd.f32 %v2610, %v2619
        %v2637 = vxor.u32 %v2361, 2147483648
        %v2638 = vxor.u32 %v2362, 2147483648
        %v2639 = vxor.u32 %v2363, 2147483648
        %v2640 = vxor.u32 %v2364, 2147483648
        %v2641 = vxor.u32 %v2365, 2147483648
        %v2642 = vxor.u32 %v2366, 2147483648
        %v2643 = vxor.u32 %v2367, 2147483648
        %v2644 = vxor.u32 %v2368, 2147483648
        %v2645 = vxor.u32 %v2369, 2147483648
        %v2646 = vxor.u32 %v2370, 2147483648
        %v2647 = vxor.u32 %v2371, 2147483648
        %v2648 = vxor.u32 %v2372, 2147483648
        %v2649 = vxor.u32 %v2373, 2147483648
        %v2650 = vxor.u32 %v2374, 2147483648
        %v2651 = vxor.u32 %v2375, 2147483648
        %v2652 = vxor.u32 %v2376, 2147483648
        %v2653 = vmul.f32 %v2637, 1.442695
        %v2654 = vpow.pop %v2653
        %v2655 = vmul.f32 %v2638, 1.442695
        %v2656 = vpow.pop %v2655
        %v2657 = vmul.f32 %v2639, 1.442695
        %v2658 = vpow.pop %v2657
        %v2659 = vmul.f32 %v2640, 1.442695
        %v2660 = vpow.pop %v2659
        %v2661 = vmul.f32 %v2641, 1.442695
        %v2662 = vpow.pop %v2661
        %v2663 = vmul.f32 %v2642, 1.442695
        %v2664 = vpow.pop %v2663
        %v2665 = vmul.f32 %v2643, 1.442695
        %v2666 = vpow.pop %v2665
        %v2667 = vmul.f32 %v2644, 1.442695
        %v2668 = vpow.pop %v2667
        %v2669 = vmul.f32 %v2645, 1.442695
        %v2670 = vpow.pop %v2669
        %v2671 = vmul.f32 %v2646, 1.442695
        %v2672 = vpow.pop %v2671
        %v2673 = vmul.f32 %v2647, 1.442695
        %v2674 = vpow.pop %v2673
        %v2675 = vmul.f32 %v2648, 1.442695
        %v2676 = vpow.pop %v2675
        %v2677 = vmul.f32 %v2649, 1.442695
        %v2678 = vpow.pop %v2677
        %v2679 = vmul.f32 %v2650, 1.442695
        %v2680 = vpow.pop %v2679
        %v2681 = vmul.f32 %v2651, 1.442695
        %v2682 = vpow.pop %v2681
        %v2683 = vmul.f32 %v2652, 1.442695
        %v2684 = vpow.pop %v2683
        %v2685 = vadd.f32 %v2654, 1.0
        %v2686 = vadd.f32 %v2656, 1.0
        %v2687 = vadd.f32 %v2658, 1.0
        %v2688 = vadd.f32 %v2660, 1.0
        %v2689 = vadd.f32 %v2662, 1.0
        %v2690 = vadd.f32 %v2664, 1.0
        %v2691 = vadd.f32 %v2666, 1.0
        %v2692 = vadd.f32 %v2668, 1.0
        %v2693 = vadd.f32 %v2670, 1.0
        %v2694 = vadd.f32 %v2672, 1.0
        %v2695 = vadd.f32 %v2674, 1.0
        %v2696 = vadd.f32 %v2676, 1.0
        %v2697 = vadd.f32 %v2678, 1.0
        %v2698 = vadd.f32 %v2680, 1.0
        %v2699 = vadd.f32 %v2682, 1.0
        %v2700 = vadd.f32 %v2684, 1.0
        %v2701 = vrcp.pop %v2685
        %v2702 = vmul.f32 1.0, %v2701
        %v2703 = vrcp.pop %v2686
        %v2704 = vmul.f32 1.0, %v2703
        %v2705 = vrcp.pop %v2687
        %v2706 = vmul.f32 1.0, %v2705
        %v2707 = vrcp.pop %v2688
        %v2708 = vmul.f32 1.0, %v2707
        %v2709 = vrcp.pop %v2689
        %v2710 = vmul.f32 1.0, %v2709
        %v2711 = vrcp.pop %v2690
        %v2712 = vmul.f32 1.0, %v2711
        %v2713 = vrcp.pop %v2691
        %v2714 = vmul.f32 1.0, %v2713
        %v2715 = vrcp.pop %v2692
        %v2716 = vmul.f32 1.0, %v2715
        %v2717 = vrcp.pop %v2693
        %v2718 = vmul.f32 1.0, %v2717
        %v2719 = vrcp.pop %v2694
        %v2720 = vmul.f32 1.0, %v2719
        %v2721 = vrcp.pop %v2695
        %v2722 = vmul.f32 1.0, %v2721
        %v2723 = vrcp.pop %v2696
        %v2724 = vmul.f32 1.0, %v2723
        %v2725 = vrcp.pop %v2697
        %v2726 = vmul.f32 1.0, %v2725
        %v2727 = vrcp.pop %v2698
        %v2728 = vmul.f32 1.0, %v2727
        %v2729 = vrcp.pop %v2699
        %v2730 = vmul.f32 1.0, %v2729
        %v2731 = vrcp.pop %v2700
        %v2732 = vmul.f32 1.0, %v2731
        %v2733 = vtanh.pop %v2621
        %v2734 = vtanh.pop %v2622
        %v2735 = vtanh.pop %v2623
        %v2736 = vtanh.pop %v2624
        %v2737 = vtanh.pop %v2625
        %v2738 = vtanh.pop %v2626
        %v2739 = vtanh.pop %v2627
        %v2740 = vtanh.pop %v2628
        %v2741 = vtanh.pop %v2629
        %v2742 = vtanh.pop %v2630
        %v2743 = vtanh.pop %v2631
        %v2744 = vtanh.pop %v2632
        %v2745 = vtanh.pop %v2633
        %v2746 = vtanh.pop %v2634
        %v2747 = vtanh.pop %v2635
        %v2748 = vtanh.pop %v2636
        %v2749 = vmul.f32 %v2702, %v2733
        %v2750 = vmul.f32 %v2704, %v2734
        %v2751 = vmul.f32 %v2706, %v2735
        %v2752 = vmul.f32 %v2708, %v2736
        %v2753 = vmul.f32 %v2710, %v2737
        %v2754 = vmul.f32 %v2712, %v2738
        %v2755 = vmul.f32 %v2714, %v2739
        %v2756 = vmul.f32 %v2716, %v2740
        %v2757 = vmul.f32 %v2718, %v2741
        %v2758 = vmul.f32 %v2720, %v2742
        %v2759 = vmul.f32 %v2722, %v2743
        %v2760 = vmul.f32 %v2724, %v2744
        %v2761 = vmul.f32 %v2726, %v2745
        %v2762 = vmul.f32 %v2728, %v2746
        %v2763 = vmul.f32 %v2730, %v2747
        %v2764 = vmul.f32 %v2732, %v2748
        %v2765 = vpack.c.bf16 %v2750, %v2749
        %v2766 = vpack.c.bf16 %v2752, %v2751
        %v2767 = vpack.c.bf16 %v2754, %v2753
        %v2768 = vpack.c.bf16 %v2756, %v2755
        %v2769 = vpack.c.bf16 %v2758, %v2757
        %v2770 = vpack.c.bf16 %v2760, %v2759
        %v2771 = vpack.c.bf16 %v2762, %v2761
        %v2772 = vpack.c.bf16 %v2764, %v2763
        %v2773 = vld [vmem:[%s873] sm:$0xf]
        %v2774 = vld [vmem:[%s873 + $0x4] sm:$0xf]
        %v2775 = vld [vmem:[%s873 + $0x8] sm:$0xf]
        %v2776 = vld [vmem:[%s873 + $0xc] sm:$0xf]
        %v2777 = vld [vmem:[%s873 + $0x10] sm:$0xf]
        %v2778 = vld [vmem:[%s873 + $0x14] sm:$0xf]
        %v2779 = vld [vmem:[%s873 + $0x18] sm:$0xf]
        %v2780 = vld [vmem:[%s873 + $0x1c] sm:$0xf]
        %v2781 = vld [vmem:[%s764] sm:$0x1]
        %v2783 = vlaneseq
        %v2784 = vshrl.u32 %v2783, 7
        %v2785 = vsub.s32 0, %v2784
        %v2786 = vrot.slane %v2781, %v2785
        %v2796 = vunpack.c.l.b16 %v2773
        %v2797 = vunpack.c.l.b16 %v2774
        %v2798 = vunpack.c.l.b16 %v2775
        %v2799 = vunpack.c.l.b16 %v2776
        %v2800 = vunpack.c.l.b16 %v2777
        %v2801 = vunpack.c.l.b16 %v2778
        %v2802 = vunpack.c.l.b16 %v2779
        %v2803 = vunpack.c.l.b16 %v2780
        %v2804 = vpack.c.b16 %v2797, %v2796
        %v2805 = vpack.c.b16 %v2799, %v2798
        %v2806 = vpack.c.b16 %v2801, %v2800
        %v2807 = vpack.c.b16 %v2803, %v2802
        %v2813 = vsel %vm2232, %v2765, 0
        %v2816 = vsel %vm2232, %v2766, 0
        %v2819 = vsel %vm2232, %v2767, 0
        %v2822 = vsel %vm2232, %v2768, 0
        %v2825 = vsel %vm2232, %v2769, 0
        %v2828 = vsel %vm2232, %v2770, 0
        %v2831 = vsel %vm2232, %v2771, 0
        %v2834 = vsel %vm2232, %v2772, 0
        %2836 = vmatprep.subr.bf16.mxu0 0
        %2837 = vmatpush1.bf16.msra.mxu0 %v2804
        %2838 = vmatprep.subr.bf16.mxu0 0
        %2839 = vmatpush1.bf16.msra.mxu0 %v2805
        %2840 = vmatprep.subr.bf16.mxu0 0
        %2841 = vmatpush1.bf16.msra.mxu0 %v2806
        %2842 = vmatprep.subr.bf16.mxu0 0
        %2843 = vmatpush1.bf16.msra.mxu0 %v2807
        %2844 = vmatprep.subr.bf16.mxu0 0
        %2845 = vmatpush1.bf16.msra.mxu0 0
        %2846 = vmatprep.subr.bf16.mxu0 0
        %2847 = vmatpush1.bf16.msra.mxu0 0
        %2848 = vmatprep.subr.bf16.mxu0 0
        %2849 = vmatpush1.bf16.msra.mxu0 0
        %2850 = vmatprep.subr.bf16.mxu0 0
        %2851 = vmatpush1.bf16.msra.mxu0 0
        %2852 = vmatprep.subr.bf16.mxu0 0
        %2853 = vmatpush1.bf16.msra.mxu0 0
        %2854 = vmatprep.subr.bf16.mxu0 0
        %2855 = vmatpush1.bf16.msra.mxu0 0
        %2856 = vmatprep.subr.bf16.mxu0 0
        %2857 = vmatpush1.bf16.msra.mxu0 0
        %2858 = vmatprep.subr.bf16.mxu0 0
        %2859 = vmatpush1.bf16.msra.mxu0 0
        %2860 = vmatprep.subr.bf16.mxu0 0
        %2861 = vmatpush1.bf16.msra.mxu0 0
        %2862 = vmatprep.subr.bf16.mxu0 0
        %2863 = vmatpush1.bf16.msra.mxu0 0
        %2864 = vmatprep.subr.bf16.mxu0 0
        %2865 = vmatpush1.bf16.msra.mxu0 0
        %2866 = vmatprep.subr.bf16.mxu0 0
        %2867 = vmatpush1.bf16.msra.mxu0 0
        %2868 = vmatprep.mubr.bf16.mxu0 0
        %2869 = vmatmul.mubr.bf16.gmra.mrb[0].mxu0 %v2813
        %v2870 = vpop.f32.mrb[0].mxu0
        %v2871 = vadd.f32 %v2786, %v2870
        %v2872 = vpop.f32.mrb[0].mxu0
        %v2873 = vpop.f32.mrb[0].mxu0
        %v2874 = vadd.f32 %v2786, %v2873
        %v2875 = vpop.f32.mrb[0].mxu0
        %2876 = vmatprep.mubr.bf16.mxu0 0
        %2877 = vmatmul.mubr.bf16.gmra.mrb[0].mxu0 %v2816
        %v2878 = vpop.f32.mrb[0].mxu0
        %v2879 = vadd.f32 %v2786, %v2878
        %v2880 = vpop.f32.mrb[0].mxu0
        %v2881 = vpop.f32.mrb[0].mxu0
        %v2882 = vadd.f32 %v2786, %v2881
        %v2883 = vpop.f32.mrb[0].mxu0
        %2884 = vmatprep.mubr.bf16.mxu0 0
        %2885 = vmatmul.mubr.bf16.gmra.mrb[0].mxu0 %v2819
        %v2886 = vpop.f32.mrb[0].mxu0
        %v2887 = vadd.f32 %v2786, %v2886
        %v2888 = vpop.f32.mrb[0].mxu0
        %v2889 = vpop.f32.mrb[0].mxu0
        %v2890 = vadd.f32 %v2786, %v2889
        %v2891 = vpop.f32.mrb[0].mxu0
        %2892 = vmatprep.mubr.bf16.mxu0 0
        %2893 = vmatmul.mubr.bf16.gmra.mrb[0].mxu0 %v2822
        %v2894 = vpop.f32.mrb[0].mxu0
        %v2895 = vadd.f32 %v2786, %v2894
        %v2896 = vpop.f32.mrb[0].mxu0
        %v2897 = vpop.f32.mrb[0].mxu0
        %v2898 = vadd.f32 %v2786, %v2897
        %v2899 = vpop.f32.mrb[0].mxu0
        %2900 = vmatprep.mubr.bf16.mxu0 0
        %2901 = vmatmul.mubr.bf16.gmra.mrb[0].mxu0 %v2825
        %v2902 = vpop.f32.mrb[0].mxu0
        %v2903 = vadd.f32 %v2786, %v2902
        %v2904 = vpop.f32.mrb[0].mxu0
        %v2905 = vpop.f32.mrb[0].mxu0
        %v2906 = vadd.f32 %v2786, %v2905
        %v2907 = vpop.f32.mrb[0].mxu0
        %2908 = vmatprep.mubr.bf16.mxu0 0
        %2909 = vmatmul.mubr.bf16.gmra.mrb[0].mxu0 %v2828
        %v2910 = vpop.f32.mrb[0].mxu0
        %v2911 = vadd.f32 %v2786, %v2910
        %v2912 = vpop.f32.mrb[0].mxu0
        %v2913 = vpop.f32.mrb[0].mxu0
        %v2914 = vadd.f32 %v2786, %v2913
        %v2915 = vpop.f32.mrb[0].mxu0
        %2916 = vmatprep.mubr.bf16.mxu0 0
        %2917 = vmatmul.mubr.bf16.gmra.mrb[0].mxu0 %v2831
        %v2918 = vpop.f32.mrb[0].mxu0
        %v2919 = vadd.f32 %v2786, %v2918
        %v2920 = vpop.f32.mrb[0].mxu0
        %v2921 = vpop.f32.mrb[0].mxu0
        %v2922 = vadd.f32 %v2786, %v2921
        %v2923 = vpop.f32.mrb[0].mxu0
        %2924 = vmatprep.mubr.bf16.mxu0 0
        %2925 = vmatmul.mubr.bf16.gmra.mrb[0].mxu0 %v2834
        %v2926 = vpop.f32.mrb[0].mxu0
        %v2927 = vadd.f32 %v2786, %v2926
        %v2928 = vpop.f32.mrb[0].mxu0
        %v2929 = vpop.f32.mrb[0].mxu0
        %v2930 = vadd.f32 %v2786, %v2929
        %v2931 = vpop.f32.mrb[0].mxu0
        %2932 = vdwg.mxu0
        %s2933 = scalar_lea.vmem %s873, 32
        %v2934 = vld [vmem:[%s2933] sm:$0xf]
        %v2935 = vld [vmem:[%s2933 + $0x4] sm:$0xf]
        %v2936 = vld [vmem:[%s2933 + $0x8] sm:$0xf]
        %v2937 = vld [vmem:[%s2933 + $0xc] sm:$0xf]
        %v2938 = vld [vmem:[%s2933 + $0x10] sm:$0xf]
        %v2939 = vld [vmem:[%s2933 + $0x14] sm:$0xf]
        %v2940 = vld [vmem:[%s2933 + $0x18] sm:$0xf]
        %v2941 = vld [vmem:[%s2933 + $0x1c] sm:$0xf]
        %s2942 = scalar_lea.vmem %s764, 1 [#allocation16]
        %v2943 = vld [vmem:[%s2942] sm:$0x1]
        %v2945 = vlaneseq
        %v2946 = vshrl.u32 %v2945, 7
        %v2947 = vsub.s32 0, %v2946
        %v2948 = vrot.slane %v2943, %v2947
        %v2958 = vunpack.c.l.b16 %v2934
        %v2959 = vunpack.c.l.b16 %v2935
        %v2960 = vunpack.c.l.b16 %v2936
        %v2961 = vunpack.c.l.b16 %v2937
        %v2962 = vunpack.c.l.b16 %v2938
        %v2963 = vunpack.c.l.b16 %v2939
        %v2964 = vunpack.c.l.b16 %v2940
        %v2965 = vunpack.c.l.b16 %v2941
        %v2966 = vpack.c.b16 %v2959, %v2958
        %v2967 = vpack.c.b16 %v2961, %v2960
        %v2968 = vpack.c.b16 %v2963, %v2962
        %v2969 = vpack.c.b16 %v2965, %v2964
        %2974 = vmatprep.subr.bf16.mxu0 0
        %2975 = vmatpush1.bf16.msra.mxu0 %v2966
        %2976 = vmatprep.subr.bf16.mxu0 0
        %2977 = vmatpush1.bf16.msra.mxu0 %v2967
        %2978 = vmatprep.subr.bf16.mxu0 0
        %2979 = vmatpush1.bf16.msra.mxu0 %v2968
        %2980 = vmatprep.subr.bf16.mxu0 0
        %2981 = vmatpush1.bf16.msra.mxu0 %v2969
        %2982 = vmatprep.subr.bf16.mxu0 0
        %2983 = vmatpush1.bf16.msra.mxu0 0
        %2984 = vmatprep.subr.bf16.mxu0 0
        %2985 = vmatpush1.bf16.msra.mxu0 0
        %2986 = vmatprep.subr.bf16.mxu0 0
        %2987 = vmatpush1.bf16.msra.mxu0 0
        %2988 = vmatprep.subr.bf16.mxu0 0
        %2989 = vmatpush1.bf16.msra.mxu0 0
        %2990 = vmatprep.subr.bf16.mxu0 0
        %2991 = vmatpush1.bf16.msra.mxu0 0
        %2992 = vmatprep.subr.bf16.mxu0 0
        %2993 = vmatpush1.bf16.msra.mxu0 0
        %2994 = vmatprep.subr.bf16.mxu0 0
        %2995 = vmatpush1.bf16.msra.mxu0 0
        %2996 = vmatprep.subr.bf16.mxu0 0
        %2997 = vmatpush1.bf16.msra.mxu0 0
        %2998 = vmatprep.subr.bf16.mxu0 0
        %2999 = vmatpush1.bf16.msra.mxu0 0
        %3000 = vmatprep.subr.bf16.mxu0 0
        %3001 = vmatpush1.bf16.msra.mxu0 0
        %3002 = vmatprep.subr.bf16.mxu0 0
        %3003 = vmatpush1.bf16.msra.mxu0 0
        %3004 = vmatprep.subr.bf16.mxu0 0
        %3005 = vmatpush1.bf16.msra.mxu0 0
        %3006 = vmatprep.mubr.bf16.mxu0 0
        %3007 = vmatmul.mubr.bf16.gmra.mrb[0].mxu0 %v2813
        %v3008 = vpop.f32.mrb[0].mxu0
        %v3009 = vadd.f32 %v2948, %v3008
        %v3010 = vpop.f32.mrb[0].mxu0
        %v3011 = vpop.f32.mrb[0].mxu0
        %v3012 = vadd.f32 %v2948, %v3011
        %v3013 = vpop.f32.mrb[0].mxu0
        %3014 = vmatprep.mubr.bf16.mxu0 0
        %3015 = vmatmul.mubr.bf16.gmra.mrb[0].mxu0 %v2816
        %v3016 = vpop.f32.mrb[0].mxu0
        %v3017 = vadd.f32 %v2948, %v3016
        %v3018 = vpop.f32.mrb[0].mxu0
        %v3019 = vpop.f32.mrb[0].mxu0
        %v3020 = vadd.f32 %v2948, %v3019
        %v3021 = vpop.f32.mrb[0].mxu0
        %3022 = vmatprep.mubr.bf16.mxu0 0
        %3023 = vmatmul.mubr.bf16.gmra.mrb[0].mxu0 %v2819
        %v3024 = vpop.f32.mrb[0].mxu0
        %v3025 = vadd.f32 %v2948, %v3024
        %v3026 = vpop.f32.mrb[0].mxu0
        %v3027 = vpop.f32.mrb[0].mxu0
        %v3028 = vadd.f32 %v2948, %v3027
        %v3029 = vpop.f32.mrb[0].mxu0
        %3030 = vmatprep.mubr.bf16.mxu0 0
        %3031 = vmatmul.mubr.bf16.gmra.mrb[0].mxu0 %v2822
        %v3032 = vpop.f32.mrb[0].mxu0
        %v3033 = vadd.f32 %v2948, %v3032
        %v3034 = vpop.f32.mrb[0].mxu0
        %v3035 = vpop.f32.mrb[0].mxu0
        %v3036 = vadd.f32 %v2948, %v3035
        %v3037 = vpop.f32.mrb[0].mxu0
        %3038 = vmatprep.mubr.bf16.mxu0 0
        %3039 = vmatmul.mubr.bf16.gmra.mrb[0].mxu0 %v2825
        %v3040 = vpop.f32.mrb[0].mxu0
        %v3041 = vadd.f32 %v2948, %v3040
        %v3042 = vpop.f32.mrb[0].mxu0
        %v3043 = vpop.f32.mrb[0].mxu0
        %v3044 = vadd.f32 %v2948, %v3043
        %v3045 = vpop.f32.mrb[0].mxu0
        %3046 = vmatprep.mubr.bf16.mxu0 0
        %3047 = vmatmul.mubr.bf16.gmra.mrb[0].mxu0 %v2828
        %v3048 = vpop.f32.mrb[0].mxu0
        %v3049 = vadd.f32 %v2948, %v3048
        %v3050 = vpop.f32.mrb[0].mxu0
        %v3051 = vpop.f32.mrb[0].mxu0
        %v3052 = vadd.f32 %v2948, %v3051
        %v3053 = vpop.f32.mrb[0].mxu0
        %3054 = vmatprep.mubr.bf16.mxu0 0
        %3055 = vmatmul.mubr.bf16.gmra.mrb[0].mxu0 %v2831
        %v3056 = vpop.f32.mrb[0].mxu0
        %v3057 = vadd.f32 %v2948, %v3056
        %v3058 = vpop.f32.mrb[0].mxu0
        %v3059 = vpop.f32.mrb[0].mxu0
        %v3060 = vadd.f32 %v2948, %v3059
        %v3061 = vpop.f32.mrb[0].mxu0
        %3062 = vmatprep.mubr.bf16.mxu0 0
        %3063 = vmatmul.mubr.bf16.gmra.mrb[0].mxu0 %v2834
        %v3064 = vpop.f32.mrb[0].mxu0
        %v3065 = vadd.f32 %v2948, %v3064
        %v3066 = vpop.f32.mrb[0].mxu0
        %v3067 = vpop.f32.mrb[0].mxu0
        %v3068 = vadd.f32 %v2948, %v3067
        %v3069 = vpop.f32.mrb[0].mxu0
        %3070 = vdwg.mxu0
        %v3071 = vadd.f32 %v1798, %v2871
        %v3072 = vadd.f32 %v1799, %v2874
        %v3073 = vadd.f32 %v1800, %v2879
        %v3074 = vadd.f32 %v1801, %v2882
        %v3075 = vadd.f32 %v1802, %v2887
        %v3076 = vadd.f32 %v1803, %v2890
        %v3077 = vadd.f32 %v1804, %v2895
        %v3078 = vadd.f32 %v1805, %v2898
        %v3079 = vadd.f32 %v1806, %v2903
        %v3080 = vadd.f32 %v1807, %v2906
        %v3081 = vadd.f32 %v1808, %v2911
        %v3082 = vadd.f32 %v1809, %v2914
        %v3083 = vadd.f32 %v1810, %v2919
        %v3084 = vadd.f32 %v1811, %v2922
        %v3085 = vadd.f32 %v1812, %v2927
        %v3086 = vadd.f32 %v1813, %v2930
        %v3087 = vmul.f32 %v3071, 0.70710677
        %v3088 = vmul.f32 %v3072, 0.70710677
        %v3089 = vmul.f32 %v3073, 0.70710677
        %v3090 = vmul.f32 %v3074, 0.70710677
        %v3091 = vmul.f32 %v3075, 0.70710677
        %v3092 = vmul.f32 %v3076, 0.70710677
        %v3093 = vmul.f32 %v3077, 0.70710677
        %v3094 = vmul.f32 %v3078, 0.70710677
        %v3095 = vmul.f32 %v3079, 0.70710677
        %v3096 = vmul.f32 %v3080, 0.70710677
        %v3097 = vmul.f32 %v3081, 0.70710677
        %v3098 = vmul.f32 %v3082, 0.70710677
        %v3099 = vmul.f32 %v3083, 0.70710677
        %v3100 = vmul.f32 %v3084, 0.70710677
        %v3101 = vmul.f32 %v3085, 0.70710677
        %v3102 = vmul.f32 %v3086, 0.70710677
        %3103 = vst.msk [vmem:[#allocation2] sm:$0xff] %vm2232, %v3087
        %3104 = vst.msk [vmem:[#allocation2 + $0x8] sm:$0xff] %vm2232, %v3088
        %3105 = vst.msk [vmem:[#allocation2 + $0x10] sm:$0xff] %vm2232, %v3089
        %3106 = vst.msk [vmem:[#allocation2 + $0x18] sm:$0xff] %vm2232, %v3090
        %3107 = vst.msk [vmem:[#allocation2 + $0x20] sm:$0xff] %vm2232, %v3091
        %3108 = vst.msk [vmem:[#allocation2 + $0x28] sm:$0xff] %vm2232, %v3092
        %3109 = vst.msk [vmem:[#allocation2 + $0x30] sm:$0xff] %vm2232, %v3093
        %3110 = vst.msk [vmem:[#allocation2 + $0x38] sm:$0xff] %vm2232, %v3094
        %3111 = vst.msk [vmem:[#allocation2 + $0x40] sm:$0xff] %vm2232, %v3095
        %3112 = vst.msk [vmem:[#allocation2 + $0x48] sm:$0xff] %vm2232, %v3096
        %3113 = vst.msk [vmem:[#allocation2 + $0x50] sm:$0xff] %vm2232, %v3097
        %3114 = vst.msk [vmem:[#allocation2 + $0x58] sm:$0xff] %vm2232, %v3098
        %3115 = vst.msk [vmem:[#allocation2 + $0x60] sm:$0xff] %vm2232, %v3099
        %3116 = vst.msk [vmem:[#allocation2 + $0x68] sm:$0xff] %vm2232, %v3100
        %3117 = vst.msk [vmem:[#allocation2 + $0x70] sm:$0xff] %vm2232, %v3101
        %3118 = vst.msk [vmem:[#allocation2 + $0x78] sm:$0xff] %vm2232, %v3102
        %v3119 = vld [vmem:[#allocation3] sm:$0xff]
        %v3120 = vld [vmem:[#allocation3 + $0x8] sm:$0xff]
        %v3121 = vld [vmem:[#allocation3 + $0x10] sm:$0xff]
        %v3122 = vld [vmem:[#allocation3 + $0x18] sm:$0xff]
        %v3123 = vld [vmem:[#allocation3 + $0x20] sm:$0xff]
        %v3124 = vld [vmem:[#allocation3 + $0x28] sm:$0xff]
        %v3125 = vld [vmem:[#allocation3 + $0x30] sm:$0xff]
        %v3126 = vld [vmem:[#allocation3 + $0x38] sm:$0xff]
        %v3127 = vld [vmem:[#allocation3 + $0x40] sm:$0xff]
        %v3128 = vld [vmem:[#allocation3 + $0x48] sm:$0xff]
        %v3129 = vld [vmem:[#allocation3 + $0x50] sm:$0xff]
        %v3130 = vld [vmem:[#allocation3 + $0x58] sm:$0xff]
        %v3131 = vld [vmem:[#allocation3 + $0x60] sm:$0xff]
        %v3132 = vld [vmem:[#allocation3 + $0x68] sm:$0xff]
        %v3133 = vld [vmem:[#allocation3 + $0x70] sm:$0xff]
        %v3134 = vld [vmem:[#allocation3 + $0x78] sm:$0xff]
        %v3135 = vadd.f32 %v3119, %v3009
        %v3136 = vadd.f32 %v3120, %v3012
        %v3137 = vadd.f32 %v3121, %v3017
        %v3138 = vadd.f32 %v3122, %v3020
        %v3139 = vadd.f32 %v3123, %v3025
        %v3140 = vadd.f32 %v3124, %v3028
        %v3141 = vadd.f32 %v3125, %v3033
        %v3142 = vadd.f32 %v3126, %v3036
        %v3143 = vadd.f32 %v3127, %v3041
        %v3144 = vadd.f32 %v3128, %v3044
        %v3145 = vadd.f32 %v3129, %v3049
        %v3146 = vadd.f32 %v3130, %v3052
        %v3147 = vadd.f32 %v3131, %v3057
        %v3148 = vadd.f32 %v3132, %v3060
        %v3149 = vadd.f32 %v3133, %v3065
        %v3150 = vadd.f32 %v3134, %v3068
        %3151 = vst.msk [vmem:[#allocation3] sm:$0xff] %vm2232, %v3135
        %3152 = vst.msk [vmem:[#allocation3 + $0x8] sm:$0xff] %vm2232, %v3136
        %3153 = vst.msk [vmem:[#allocation3 + $0x10] sm:$0xff] %vm2232, %v3137
        %3154 = vst.msk [vmem:[#allocation3 + $0x18] sm:$0xff] %vm2232, %v3138
        %3155 = vst.msk [vmem:[#allocation3 + $0x20] sm:$0xff] %vm2232, %v3139
        %3156 = vst.msk [vmem:[#allocation3 + $0x28] sm:$0xff] %vm2232, %v3140
        %3157 = vst.msk [vmem:[#allocation3 + $0x30] sm:$0xff] %vm2232, %v3141
        %3158 = vst.msk [vmem:[#allocation3 + $0x38] sm:$0xff] %vm2232, %v3142
        %3159 = vst.msk [vmem:[#allocation3 + $0x40] sm:$0xff] %vm2232, %v3143
        %3160 = vst.msk [vmem:[#allocation3 + $0x48] sm:$0xff] %vm2232, %v3144
        %3161 = vst.msk [vmem:[#allocation3 + $0x50] sm:$0xff] %vm2232, %v3145
        %3162 = vst.msk [vmem:[#allocation3 + $0x58] sm:$0xff] %vm2232, %v3146
        %3163 = vst.msk [vmem:[#allocation3 + $0x60] sm:$0xff] %vm2232, %v3147
        %3164 = vst.msk [vmem:[#allocation3 + $0x68] sm:$0xff] %vm2232, %v3148
        %3165 = vst.msk [vmem:[#allocation3 + $0x70] sm:$0xff] %vm2232, %v3149
        %3166 = vst.msk [vmem:[#allocation3 + $0x78] sm:$0xff] %vm2232, %v3150
        %p3167 = scmp.eq.s32.totalorder %s40, 1
        // Predicated region
        $region133: #{tpu_custom_call.1} parent=99 // pred_check
          %p3168 = pneg %p3167
        $region134: #{tpu_custom_call.1} parent=99 // pred_check_branch
          %3170 = sbr.rel (%p3168) target = $region136
        $region135: #{tpu_custom_call.1} parent=99 // pred_region
          %v3171 = vld [vmem:[#allocation3] sm:$0xff]
          %v3172 = vld [vmem:[#allocation3 + $0x8] sm:$0xff]
          %v3173 = vld [vmem:[#allocation3 + $0x10] sm:$0xff]
          %v3174 = vld [vmem:[#allocation3 + $0x18] sm:$0xff]
          %v3175 = vld [vmem:[#allocation3 + $0x20] sm:$0xff]
          %v3176 = vld [vmem:[#allocation3 + $0x28] sm:$0xff]
          %v3177 = vld [vmem:[#allocation3 + $0x30] sm:$0xff]
          %v3178 = vld [vmem:[#allocation3 + $0x38] sm:$0xff]
          %v3179 = vld [vmem:[#allocation3 + $0x40] sm:$0xff]
          %v3180 = vld [vmem:[#allocation3 + $0x48] sm:$0xff]
          %v3181 = vld [vmem:[#allocation3 + $0x50] sm:$0xff]
          %v3182 = vld [vmem:[#allocation3 + $0x58] sm:$0xff]
          %v3183 = vld [vmem:[#allocation3 + $0x60] sm:$0xff]
          %v3184 = vld [vmem:[#allocation3 + $0x68] sm:$0xff]
          %v3185 = vld [vmem:[#allocation3 + $0x70] sm:$0xff]
          %v3186 = vld [vmem:[#allocation3 + $0x78] sm:$0xff]
          %v3187 = vpack.c.bf16 %v3172, %v3171
          %v3188 = vpack.c.bf16 %v3174, %v3173
          %v3189 = vpack.c.bf16 %v3176, %v3175
          %v3190 = vpack.c.bf16 %v3178, %v3177
          %v3191 = vpack.c.bf16 %v3180, %v3179
          %v3192 = vpack.c.bf16 %v3182, %v3181
          %v3193 = vpack.c.bf16 %v3184, %v3183
          %v3194 = vpack.c.bf16 %v3186, %v3185
          %v3195 = vld [vmem:[%s16] sm:$0xf]
          %v3196 = vld [vmem:[%s16 + $0x4] sm:$0xf]
          %v3197 = vld [vmem:[%s16 + $0x8] sm:$0xf]
          %v3198 = vld [vmem:[%s16 + $0xc] sm:$0xf]
          %v3199 = vld [vmem:[%s16 + $0x10] sm:$0xf]
          %v3200 = vld [vmem:[%s16 + $0x14] sm:$0xf]
          %v3201 = vld [vmem:[%s16 + $0x18] sm:$0xf]
          %v3202 = vld [vmem:[%s16 + $0x1c] sm:$0xf]
          %v3203 = vld [vmem:[%s17] sm:$0x1]
          %v3205 = vlaneseq
          %v3206 = vshrl.u32 %v3205, 7
          %v3207 = vsub.s32 0, %v3206
          %v3208 = vrot.slane %v3203, %v3207
          %v3218 = vunpack.c.l.b16 %v3195
          %v3219 = vunpack.c.l.b16 %v3196
          %v3220 = vunpack.c.l.b16 %v3197
          %v3221 = vunpack.c.l.b16 %v3198
          %v3222 = vunpack.c.l.b16 %v3199
          %v3223 = vunpack.c.l.b16 %v3200
          %v3224 = vunpack.c.l.b16 %v3201
          %v3225 = vunpack.c.l.b16 %v3202
          %v3226 = vpack.c.b16 %v3219, %v3218
          %v3227 = vpack.c.b16 %v3221, %v3220
          %v3228 = vpack.c.b16 %v3223, %v3222
          %v3229 = vpack.c.b16 %v3225, %v3224
          %v3235 = vsel %vm2232, %v3187, 0
          %v3238 = vsel %vm2232, %v3188, 0
          %v3241 = vsel %vm2232, %v3189, 0
          %v3244 = vsel %vm2232, %v3190, 0
          %v3247 = vsel %vm2232, %v3191, 0
          %v3250 = vsel %vm2232, %v3192, 0
          %v3253 = vsel %vm2232, %v3193, 0
          %v3256 = vsel %vm2232, %v3194, 0
          %3258 = vmatprep.subr.bf16.mxu0 0
          %3259 = vmatpush1.bf16.msra.mxu0 %v3226
          %3260 = vmatprep.subr.bf16.mxu0 0
          %3261 = vmatpush1.bf16.msra.mxu0 %v3227
          %3262 = vmatprep.subr.bf16.mxu0 0
          %3263 = vmatpush1.bf16.msra.mxu0 %v3228
          %3264 = vmatprep.subr.bf16.mxu0 0
          %3265 = vmatpush1.bf16.msra.mxu0 %v3229
          %3266 = vmatprep.subr.bf16.mxu0 0
          %3267 = vmatpush1.bf16.msra.mxu0 0
          %3268 = vmatprep.subr.bf16.mxu0 0
          %3269 = vmatpush1.bf16.msra.mxu0 0
          %3270 = vmatprep.subr.bf16.mxu0 0
          %3271 = vmatpush1.bf16.msra.mxu0 0
          %3272 = vmatprep.subr.bf16.mxu0 0
          %3273 = vmatpush1.bf16.msra.mxu0 0
          %3274 = vmatprep.subr.bf16.mxu0 0
          %3275 = vmatpush1.bf16.msra.mxu0 0
          %3276 = vmatprep.subr.bf16.mxu0 0
          %3277 = vmatpush1.bf16.msra.mxu0 0
          %3278 = vmatprep.subr.bf16.mxu0 0
          %3279 = vmatpush1.bf16.msra.mxu0 0
          %3280 = vmatprep.subr.bf16.mxu0 0
          %3281 = vmatpush1.bf16.msra.mxu0 0
          %3282 = vmatprep.subr.bf16.mxu0 0
          %3283 = vmatpush1.bf16.msra.mxu0 0
          %3284 = vmatprep.subr.bf16.mxu0 0
          %3285 = vmatpush1.bf16.msra.mxu0 0
          %3286 = vmatprep.subr.bf16.mxu0 0
          %3287 = vmatpush1.bf16.msra.mxu0 0
          %3288 = vmatprep.subr.bf16.mxu0 0
          %3289 = vmatpush1.bf16.msra.mxu0 0
          %3290 = vmatprep.mubr.bf16.mxu0 0
          %3291 = vmatmul.mubr.bf16.gmra.mrb[0].mxu0 %v3235
          %v3292 = vpop.f32.mrb[0].mxu0
          %v3293 = vadd.f32 %v3208, %v3292
          %v3294 = vpop.f32.mrb[0].mxu0
          %v3295 = vpop.f32.mrb[0].mxu0
          %v3296 = vadd.f32 %v3208, %v3295
          %v3297 = vpop.f32.mrb[0].mxu0
          %3298 = vmatprep.mubr.bf16.mxu0 0
          %3299 = vmatmul.mubr.bf16.gmra.mrb[0].mxu0 %v3238
          %v3300 = vpop.f32.mrb[0].mxu0
          %v3301 = vadd.f32 %v3208, %v3300
          %v3302 = vpop.f32.mrb[0].mxu0
          %v3303 = vpop.f32.mrb[0].mxu0
          %v3304 = vadd.f32 %v3208, %v3303
          %v3305 = vpop.f32.mrb[0].mxu0
          %3306 = vmatprep.mubr.bf16.mxu0 0
          %3307 = vmatmul.mubr.bf16.gmra.mrb[0].mxu0 %v3241
          %v3308 = vpop.f32.mrb[0].mxu0
          %v3309 = vadd.f32 %v3208, %v3308
          %v3310 = vpop.f32.mrb[0].mxu0
          %v3311 = vpop.f32.mrb[0].mxu0
          %v3312 = vadd.f32 %v3208, %v3311
          %v3313 = vpop.f32.mrb[0].mxu0
          %3314 = vmatprep.mubr.bf16.mxu0 0
          %3315 = vmatmul.mubr.bf16.gmra.mrb[0].mxu0 %v3244
          %v3316 = vpop.f32.mrb[0].mxu0
          %v3317 = vadd.f32 %v3208, %v3316
          %v3318 = vpop.f32.mrb[0].mxu0
          %v3319 = vpop.f32.mrb[0].mxu0
          %v3320 = vadd.f32 %v3208, %v3319
          %v3321 = vpop.f32.mrb[0].mxu0
          %3322 = vmatprep.mubr.bf16.mxu0 0
          %3323 = vmatmul.mubr.bf16.gmra.mrb[0].mxu0 %v3247
          %v3324 = vpop.f32.mrb[0].mxu0
          %v3325 = vadd.f32 %v3208, %v3324
          %v3326 = vpop.f32.mrb[0].mxu0
          %v3327 = vpop.f32.mrb[0].mxu0
          %v3328 = vadd.f32 %v3208, %v3327
          %v3329 = vpop.f32.mrb[0].mxu0
          %3330 = vmatprep.mubr.bf16.mxu0 0
          %3331 = vmatmul.mubr.bf16.gmra.mrb[0].mxu0 %v3250
          %v3332 = vpop.f32.mrb[0].mxu0
          %v3333 = vadd.f32 %v3208, %v3332
          %v3334 = vpop.f32.mrb[0].mxu0
          %v3335 = vpop.f32.mrb[0].mxu0
          %v3336 = vadd.f32 %v3208, %v3335
          %v3337 = vpop.f32.mrb[0].mxu0
          %3338 = vmatprep.mubr.bf16.mxu0 0
          %3339 = vmatmul.mubr.bf16.gmra.mrb[0].mxu0 %v3253
          %v3340 = vpop.f32.mrb[0].mxu0
          %v3341 = vadd.f32 %v3208, %v3340
          %v3342 = vpop.f32.mrb[0].mxu0
          %v3343 = vpop.f32.mrb[0].mxu0
          %v3344 = vadd.f32 %v3208, %v3343
          %v3345 = vpop.f32.mrb[0].mxu0
          %3346 = vmatprep.mubr.bf16.mxu0 0
          %3347 = vmatmul.mubr.bf16.gmra.mrb[0].mxu0 %v3256
          %v3348 = vpop.f32.mrb[0].mxu0
          %v3349 = vadd.f32 %v3208, %v3348
          %v3350 = vpop.f32.mrb[0].mxu0
          %v3351 = vpop.f32.mrb[0].mxu0
          %v3352 = vadd.f32 %v3208, %v3351
          %v3353 = vpop.f32.mrb[0].mxu0
          %3354 = vdwg.mxu0
          %v3355 = vmax.f32 %v3293, 0.0
          %v3356 = vmax.f32 %v3296, 0.0
          %v3357 = vmax.f32 %v3301, 0.0
          %v3358 = vmax.f32 %v3304, 0.0
          %v3359 = vmax.f32 %v3309, 0.0
          %v3360 = vmax.f32 %v3312, 0.0
          %v3361 = vmax.f32 %v3317, 0.0
          %v3362 = vmax.f32 %v3320, 0.0
          %v3363 = vmax.f32 %v3325, 0.0
          %v3364 = vmax.f32 %v3328, 0.0
          %v3365 = vmax.f32 %v3333, 0.0
          %v3366 = vmax.f32 %v3336, 0.0
          %v3367 = vmax.f32 %v3341, 0.0
          %v3368 = vmax.f32 %v3344, 0.0
          %v3369 = vmax.f32 %v3349, 0.0
          %v3370 = vmax.f32 %v3352, 0.0
          %v3371 = vld [vmem:[%s18] sm:$0x1]
          %v3373 = vlaneseq
          %v3374 = vshrl.u32 %v3373, 7
          %v3375 = vsub.s32 0, %v3374
          %v3376 = vrot.slane %v3371, %v3375
          %v3378 = vmul.f32 %v3355, %v3376
          %v3379 = vmul.f32 %v3356, %v3376
          %v3380 = vmul.f32 %v3357, %v3376
          %v3381 = vmul.f32 %v3358, %v3376
          %v3382 = vmul.f32 %v3359, %v3376
          %v3383 = vmul.f32 %v3360, %v3376
          %v3384 = vmul.f32 %v3361, %v3376
          %v3385 = vmul.f32 %v3362, %v3376
          %v3386 = vmul.f32 %v3363, %v3376
          %v3387 = vmul.f32 %v3364, %v3376
          %v3388 = vmul.f32 %v3365, %v3376
          %v3389 = vmul.f32 %v3366, %v3376
          %v3390 = vmul.f32 %v3367, %v3376
          %v3391 = vmul.f32 %v3368, %v3376
          %v3392 = vmul.f32 %v3369, %v3376
          %v3393 = vmul.f32 %v3370, %v3376
          %v3394 = vsel %vm2232, %v3378, 0.0
          %3395 = vadd.xlane.f32.xlu0 %v3394
          %v3396 = vpop.xlane.xlu0 %3395
          %v3397 = vsel %vm2232, %v3379, 0.0
          %3398 = vadd.xlane.f32.xlu0 %v3397
          %v3399 = vpop.xlane.xlu0 %3398
          %v3400 = vsel %vm2232, %v3380, 0.0
          %3401 = vadd.xlane.f32.xlu0 %v3400
          %v3402 = vpop.xlane.xlu0 %3401
          %v3403 = vsel %vm2232, %v3381, 0.0
          %3404 = vadd.xlane.f32.xlu0 %v3403
          %v3405 = vpop.xlane.xlu0 %3404
          %v3406 = vsel %vm2232, %v3382, 0.0
          %3407 = vadd.xlane.f32.xlu0 %v3406
          %v3408 = vpop.xlane.xlu0 %3407
          %v3409 = vsel %vm2232, %v3383, 0.0
          %3410 = vadd.xlane.f32.xlu0 %v3409
          %v3411 = vpop.xlane.xlu0 %3410
          %v3412 = vsel %vm2232, %v3384, 0.0
          %3413 = vadd.xlane.f32.xlu0 %v3412
          %v3414 = vpop.xlane.xlu0 %3413
          %v3415 = vsel %vm2232, %v3385, 0.0
          %3416 = vadd.xlane.f32.xlu0 %v3415
          %v3417 = vpop.xlane.xlu0 %3416
          %v3418 = vsel %vm2232, %v3386, 0.0
          %3419 = vadd.xlane.f32.xlu0 %v3418
          %v3420 = vpop.xlane.xlu0 %3419
          %v3421 = vsel %vm2232, %v3387, 0.0
          %3422 = vadd.xlane.f32.xlu0 %v3421
          %v3423 = vpop.xlane.xlu0 %3422
          %v3424 = vsel %vm2232, %v3388, 0.0
          %3425 = vadd.xlane.f32.xlu0 %v3424
          %v3426 = vpop.xlane.xlu0 %3425
          %v3427 = vsel %vm2232, %v3389, 0.0
          %3428 = vadd.xlane.f32.xlu0 %v3427
          %v3429 = vpop.xlane.xlu0 %3428
          %v3430 = vsel %vm2232, %v3390, 0.0
          %3431 = vadd.xlane.f32.xlu0 %v3430
          %v3432 = vpop.xlane.xlu0 %3431
          %v3433 = vsel %vm2232, %v3391, 0.0
          %3434 = vadd.xlane.f32.xlu0 %v3433
          %v3435 = vpop.xlane.xlu0 %3434
          %v3436 = vsel %vm2232, %v3392, 0.0
          %3437 = vadd.xlane.f32.xlu0 %v3436
          %v3438 = vpop.xlane.xlu0 %3437
          %v3439 = vsel %vm2232, %v3393, 0.0
          %3440 = vadd.xlane.f32.xlu0 %v3439
          %v3441 = vpop.xlane.xlu0 %3440
          %v3442 = vld [vmem:[#allocation5] sm:$0x1]
          %v3444 = vlaneseq
          %v3445 = vshrl.u32 %v3444, 7
          %v3446 = vsub.s32 0, %v3445
          %v3447 = vrot.slane %v3442, %v3446
          %v3449 = vadd.f32 %v3396, %v3447
          %v3450 = vadd.f32 %v3399, %v3447
          %v3451 = vadd.f32 %v3402, %v3447
          %v3452 = vadd.f32 %v3405, %v3447
          %v3453 = vadd.f32 %v3408, %v3447
          %v3454 = vadd.f32 %v3411, %v3447
          %v3455 = vadd.f32 %v3414, %v3447
          %v3456 = vadd.f32 %v3417, %v3447
          %v3457 = vadd.f32 %v3420, %v3447
          %v3458 = vadd.f32 %v3423, %v3447
          %v3459 = vadd.f32 %v3426, %v3447
          %v3460 = vadd.f32 %v3429, %v3447
          %v3461 = vadd.f32 %v3432, %v3447
          %v3462 = vadd.f32 %v3435, %v3447
          %v3463 = vadd.f32 %v3438, %v3447
          %v3464 = vadd.f32 %v3441, %v3447
          %vm3465 = vcmask 7168
          %3466 = vst.msk [vmem:[%s20] sm:$0xff] %vm3465, %v3449
          %3467 = vst.msk [vmem:[%s20 + $0x8] sm:$0xff] %vm3465, %v3450
          %3468 = vst.msk [vmem:[%s20 + $0x10] sm:$0xff] %vm3465, %v3451
          %3469 = vst.msk [vmem:[%s20 + $0x18] sm:$0xff] %vm3465, %v3452
          %3470 = vst.msk [vmem:[%s20 + $0x20] sm:$0xff] %vm3465, %v3453
          %3471 = vst.msk [vmem:[%s20 + $0x28] sm:$0xff] %vm3465, %v3454
          %3472 = vst.msk [vmem:[%s20 + $0x30] sm:$0xff] %vm3465, %v3455
          %3473 = vst.msk [vmem:[%s20 + $0x38] sm:$0xff] %vm3465, %v3456
          %3474 = vst.msk [vmem:[%s20 + $0x40] sm:$0xff] %vm3465, %v3457
          %3475 = vst.msk [vmem:[%s20 + $0x48] sm:$0xff] %vm3465, %v3458
          %3476 = vst.msk [vmem:[%s20 + $0x50] sm:$0xff] %vm3465, %v3459
          %3477 = vst.msk [vmem:[%s20 + $0x58] sm:$0xff] %vm3465, %v3460
          %3478 = vst.msk [vmem:[%s20 + $0x60] sm:$0xff] %vm3465, %v3461
          %3479 = vst.msk [vmem:[%s20 + $0x68] sm:$0xff] %vm3465, %v3462
          %3480 = vst.msk [vmem:[%s20 + $0x70] sm:$0xff] %vm3465, %v3463
          %3481 = vst.msk [vmem:[%s20 + $0x78] sm:$0xff] %vm3465, %v3464
          %v3482 = vld [vmem:[#allocation2] sm:$0xff]
          %v3483 = vld [vmem:[#allocation2 + $0x8] sm:$0xff]
          %v3484 = vld [vmem:[#allocation2 + $0x10] sm:$0xff]
          %v3485 = vld [vmem:[#allocation2 + $0x18] sm:$0xff]
          %v3486 = vld [vmem:[#allocation2 + $0x20] sm:$0xff]
          %v3487 = vld [vmem:[#allocation2 + $0x28] sm:$0xff]
          %v3488 = vld [vmem:[#allocation2 + $0x30] sm:$0xff]
          %v3489 = vld [vmem:[#allocation2 + $0x38] sm:$0xff]
          %v3490 = vld [vmem:[#allocation2 + $0x40] sm:$0xff]
          %v3491 = vld [vmem:[#allocation2 + $0x48] sm:$0xff]
          %v3492 = vld [vmem:[#allocation2 + $0x50] sm:$0xff]
          %v3493 = vld [vmem:[#allocation2 + $0x58] sm:$0xff]
          %v3494 = vld [vmem:[#allocation2 + $0x60] sm:$0xff]
          %v3495 = vld [vmem:[#allocation2 + $0x68] sm:$0xff]
          %v3496 = vld [vmem:[#allocation2 + $0x70] sm:$0xff]
          %v3497 = vld [vmem:[#allocation2 + $0x78] sm:$0xff]
          %3498 = vst.msk [vmem:[%s21] sm:$0xff] %vm2232, %v3482
          %3499 = vst.msk [vmem:[%s21 + $0x8] sm:$0xff] %vm2232, %v3483
          %3500 = vst.msk [vmem:[%s21 + $0x10] sm:$0xff] %vm2232, %v3484
          %3501 = vst.msk [vmem:[%s21 + $0x18] sm:$0xff] %vm2232, %v3485
          %3502 = vst.msk [vmem:[%s21 + $0x20] sm:$0xff] %vm2232, %v3486
          %3503 = vst.msk [vmem:[%s21 + $0x28] sm:$0xff] %vm2232, %v3487
          %3504 = vst.msk [vmem:[%s21 + $0x30] sm:$0xff] %vm2232, %v3488
          %3505 = vst.msk [vmem:[%s21 + $0x38] sm:$0xff] %vm2232, %v3489
          %3506 = vst.msk [vmem:[%s21 + $0x40] sm:$0xff] %vm2232, %v3490
          %3507 = vst.msk [vmem:[%s21 + $0x48] sm:$0xff] %vm2232, %v3491
          %3508 = vst.msk [vmem:[%s21 + $0x50] sm:$0xff] %vm2232, %v3492
          %3509 = vst.msk [vmem:[%s21 + $0x58] sm:$0xff] %vm2232, %v3493
          %3510 = vst.msk [vmem:[%s21 + $0x60] sm:$0xff] %vm2232, %v3494
          %3511 = vst.msk [vmem:[%s21 + $0x68] sm:$0xff] %vm2232, %v3495
          %3512 = vst.msk [vmem:[%s21 + $0x70] sm:$0xff] %vm2232, %v3496
          %3513 = vst.msk [vmem:[%s21 + $0x78] sm:$0xff] %vm2232, %v3497
          %3514 = vst.msk [vmem:[%s22] sm:$0xff] %vm2232, %v3171
          %3515 = vst.msk [vmem:[%s22 + $0x8] sm:$0xff] %vm2232, %v3172
          %3516 = vst.msk [vmem:[%s22 + $0x10] sm:$0xff] %vm2232, %v3173
          %3517 = vst.msk [vmem:[%s22 + $0x18] sm:$0xff] %vm2232, %v3174
          %3518 = vst.msk [vmem:[%s22 + $0x20] sm:$0xff] %vm2232, %v3175
          %3519 = vst.msk [vmem:[%s22 + $0x28] sm:$0xff] %vm2232, %v3176
          %3520 = vst.msk [vmem:[%s22 + $0x30] sm:$0xff] %vm2232, %v3177
          %3521 = vst.msk [vmem:[%s22 + $0x38] sm:$0xff] %vm2232, %v3178
          %3522 = vst.msk [vmem:[%s22 + $0x40] sm:$0xff] %vm2232, %v3179
          %3523 = vst.msk [vmem:[%s22 + $0x48] sm:$0xff] %vm2232, %v3180
          %3524 = vst.msk [vmem:[%s22 + $0x50] sm:$0xff] %vm2232, %v3181
          %3525 = vst.msk [vmem:[%s22 + $0x58] sm:$0xff] %vm2232, %v3182
          %3526 = vst.msk [vmem:[%s22 + $0x60] sm:$0xff] %vm2232, %v3183
          %3527 = vst.msk [vmem:[%s22 + $0x68] sm:$0xff] %vm2232, %v3184
          %3528 = vst.msk [vmem:[%s22 + $0x70] sm:$0xff] %vm2232, %v3185
          %3529 = vst.msk [vmem:[%s22 + $0x78] sm:$0xff] %vm2232, %v3186
        $region136: #{tpu_custom_call.1} parent=99 // pred_fallthru
          _
        // Predicated region
        $region137: #{tpu_custom_call.1} parent=99 // pred_check
          %p3530 = pneg %p508
        $region138: #{tpu_custom_call.1} parent=99 // pred_check_branch
          %3532 = sbr.rel (%p3530) target = $region140
        $region139: #{tpu_custom_call.1} parent=99 // pred_region
          _
        $region140: #{tpu_custom_call.1} parent=99 // pred_fallthru
          _
        // Predicated region
        $region141: #{tpu_custom_call.1} parent=99 // pred_check
          %p3533 = pneg %p529
        $region142: #{tpu_custom_call.1} parent=99 // pred_check_branch
          %3535 = sbr.rel (%p3533) target = $region144
        $region143: #{tpu_custom_call.1} parent=99 // pred_region
          _
        $region144: #{tpu_custom_call.1} parent=99 // pred_fallthru
          _
        // Predicated region
        $region145: #{tpu_custom_call.1} parent=99 // pred_check
          %p3536 = pneg %p550
        $region146: #{tpu_custom_call.1} parent=99 // pred_check_branch
          %3538 = sbr.rel (%p3536) target = $region148
        $region147: #{tpu_custom_call.1} parent=99 // pred_region
          _
        $region148: #{tpu_custom_call.1} parent=99 // pred_fallthru
          _
        // Predicated region
        $region149: #{tpu_custom_call.1} parent=99 // pred_check
          %p3539 = pneg %p508
        $region150: #{tpu_custom_call.1} parent=99 // pred_check_branch
          %3541 = sbr.rel (%p3539) target = $region152
        $region151: #{tpu_custom_call.1} parent=99 // pred_region
          _
        $region152: #{tpu_custom_call.1} parent=99 // pred_fallthru
          _
        // Predicated region
        $region153: #{tpu_custom_call.1} parent=99 // pred_check
          %p3542 = pneg %p529
        $region154: #{tpu_custom_call.1} parent=99 // pred_check_branch
          %3544 = sbr.rel (%p3542) target = $region156
        $region155: #{tpu_custom_call.1} parent=99 // pred_region
          _
        $region156: #{tpu_custom_call.1} parent=99 // pred_fallthru
          _
        // Predicated region
        $region157: #{tpu_custom_call.1} parent=99 // pred_check
          %p3545 = pneg %p550
        $region158: #{tpu_custom_call.1} parent=99 // pred_check_branch
          %3547 = sbr.rel (%p3545) target = $region160
        $region159: #{tpu_custom_call.1} parent=99 // pred_region
          _
        $region160: #{tpu_custom_call.1} parent=99 // pred_fallthru
          _
      $region100: #{tpu_custom_call.1} parent=5 // pred_fallthru
        _
      %p3548 = scmp.le.s32.totalorder 2, %s35
      // Predicated region
      $region161: #{tpu_custom_call.1} parent=5 // pred_check
        %p3549 = pneg %p3548
      $region162: #{tpu_custom_call.1} parent=5 // pred_check_branch
        %3551 = sbr.rel (%p3549) target = $region164
      $region163: #{tpu_custom_call.1} parent=5 // pred_region
        %s3552 = ssub.s32 %s35, 2
      $region164: #{tpu_custom_call.1} parent=5 // pred_fallthru
        _
    $region6: #{tpu_custom_call.1} parent=1 // loop_footer
      %s39 = sadd.s32 1, %s35
    $region7: #{tpu_custom_call.1} parent=1 // loop_footer_branch
      %34 = sbr.rel target = $region3
    $region8: #{tpu_custom_call.1} parent=1 // loop_exit
      _
    %3553 = vsyncpa [#allocation7], 1
    %s3554 = scalar_lea.sflag [#allocation7], 1
    %3555 = vsyncpa %s3554, 1
    %3556 = vsyncpa [#allocation9], 1
    %3557 = vsyncpa [#allocation12], 1
    %3558 = vsyncpa [#allocation15], 1

</llo_original>
